<compile_context>
chip_gen: v5e
topology: v5e:2x2
jax: 0.10.0
libtpu: 0.0.40
codegen_flags: <defaults>
</compile_context>

<pallas_src>
import random
import functools

import jax
import jax.numpy as jnp
from jax.experimental import pallas as pl
from jax.experimental.pallas import tpu as pltpu


def _round_up(x, m):
    return ((x + m - 1) // m) * m


# Scoped VMEM budget: leaves headroom under v7x's 64 MiB physical VMEM;
# v5e/v6e (128 MiB) could go higher but this is plenty for these tiles.
_VMEM_LIMIT = 48 * 1024 * 1024


# ----------------------------------------------------------------------------
# Kernel 1: fused image encoder + img_fvs_to_hs + teacher-forced GRU recurrence
# ----------------------------------------------------------------------------
def encoder_gru_kernel(x_ref, wenc_ref, benc_ref, wh_ref, bh_ref,
                       xemb_ref, wih_ref, bih_ref, whh_ref, bhh_ref,
                       h_all_ref, h_sc, gi_sc, *, max_length):
    # ---- image encoder head + img_fvs_to_hs (Dropout = identity in eval) ----
    feat = jnp.dot(x_ref[...], wenc_ref[...], preferred_element_type=jnp.float32)
    feat = jnp.maximum(feat + benc_ref[...], 0.0)                       # ReLU
    h0 = jnp.dot(feat.astype(jnp.bfloat16), wh_ref[...],
                 preferred_element_type=jnp.float32)
    h_sc[...] = jnp.maximum(h0 + bh_ref[...], 0.0)                      # ReLU; Reshape(1,B,H) is glue

    b_pad, h_pad = h_sc.shape

    # ---- hoisted input-to-hidden gates for ALL steps (one big MXU matmul) ----
    gi_sc[...] = jnp.dot(xemb_ref[...], wih_ref[...],
                         preferred_element_type=jnp.float32) + bih_ref[...]

    # hoist the hidden-to-hidden weight load and bias broadcast out of the loop
    whh = whh_ref[...]
    bhh = jnp.broadcast_to(bhh_ref[...], (b_pad, 3 * h_pad))

    # ---- teacher-forced GRU recurrence (static unroll, fine for L <= ~16) ----
    for di in range(max_length):
        h = h_sc[...]
        gi = gi_sc[pl.ds(di * b_pad, b_pad), :]
        gh = jnp.dot(h.astype(jnp.bfloat16), whh,
                     preferred_element_type=jnp.float32) + bhh
        # PyTorch nn.GRU gate order (r, z, n); slices sit on 128-lane boundaries
        r = jax.nn.sigmoid(gi[:, :h_pad] + gh[:, :h_pad])
        z = jax.nn.sigmoid(gi[:, h_pad:2 * h_pad] + gh[:, h_pad:2 * h_pad])
        n = jnp.tanh(gi[:, 2 * h_pad:] + r * gh[:, 2 * h_pad:])
        h_new = (1.0 - z) * n + z * h

        h_sc[...] = h_new
        h_all_ref[pl.ds(di * b_pad, b_pad), :] = h_new


def run_encoder_gru(x_img, w_enc, b_enc, w_h, b_h, x_emb,
                    w_ih, b_ih, w_hh, b_hh, *, max_length, b_pad, h_pad):
    vmem = pl.BlockSpec(memory_space=pltpu.MemorySpace.VMEM)
    return pl.pallas_call(
        functools.partial(encoder_gru_kernel, max_length=max_length),
        out_shape=jax.ShapeDtypeStruct((max_length * b_pad, h_pad), jnp.float32),
        in_specs=[vmem] * 10,
        out_specs=vmem,
        scratch_shapes=[pltpu.VMEM((b_pad, h_pad), jnp.float32),               # hidden carry
                        pltpu.VMEM((max_length * b_pad, 3 * h_pad), jnp.float32)],  # hoisted gi
        compiler_params=pltpu.CompilerParams(vmem_limit_bytes=_VMEM_LIMIT),
    )(x_img, w_enc, b_enc, w_h, b_h, x_emb, w_ih, b_ih, w_hh, b_hh)


# ----------------------------------------------------------------------------
# Kernel 2a/2b: vocab-tiled output projection + log_softmax (two-pass LSE)
# ----------------------------------------------------------------------------
def lse_kernel(h_ref, wout_ref, bout_ref, lse_ref, m_sc, l_sc, *, vocab, tv):
    kv = pl.program_id(1)

    @pl.when(kv == 0)
    def _():
        m_sc[...] = jnp.full(m_sc.shape, -1e30, jnp.float32)
        l_sc[...] = jnp.zeros(l_sc.shape, jnp.float32)

    logits = jnp.dot(h_ref[...].astype(jnp.bfloat16), wout_ref[...],
                     preferred_element_type=jnp.float32) + bout_ref[...]
    # mask padded vocab lanes so they never contribute to max / sum-exp
    lane = jax.lax.broadcasted_iota(jnp.int32, logits.shape, 1) + kv * tv
    logits = jnp.where(lane < vocab, logits, -1e30)

    m_prev = m_sc[...]
    m_new = jnp.maximum(m_prev, jnp.max(logits, axis=-1, keepdims=True))
    l_sc[...] = (l_sc[...] * jnp.exp(m_prev - m_new)
                 + jnp.sum(jnp.exp(logits - m_new), axis=-1, keepdims=True))
    m_sc[...] = m_new

    @pl.when(kv == pl.num_programs(1) - 1)
    def _():
        lse_ref[...] = m_sc[...] + jnp.log(l_sc[...])


def proj_norm_kernel(h_ref, wout_ref, bout_ref, lse_ref, out_ref, *, vocab, tv):
    kv = pl.program_id(1)
    logits = jnp.dot(h_ref[...].astype(jnp.bfloat16), wout_ref[...],
                     preferred_element_type=jnp.float32) + bout_ref[...]
    lane = jax.lax.broadcasted_iota(jnp.int32, logits.shape, 1) + kv * tv
    logits = jnp.where(lane < vocab, logits, -1e30)   # padded lanes sliced off in wrapper
    out_ref[...] = logits - lse_ref[...]


def _pick_row_tile(rows, cap=512):
    # cap at rows//2 so the "parallel" row axis has >= 2 tiles (v7x dual-TC)
    cap = min(cap, max(rows // 2, 8))
    tm = min(rows, cap)
    while rows % tm:
        tm -= 8
    return max(tm, 8)


def _pick_vocab_tile(v_pad, cap=2048):
    tv = min(v_pad, cap)
    while v_pad % tv:
        tv -= 128
    return max(tv, 128)


def run_projection(h_flat, w_out, b_out, vocab):
    rows, h_pad = h_flat.shape
    v_pad = w_out.shape[1]
    tm = _pick_row_tile(rows)
    tv = _pick_vocab_tile(v_pad)
    grid = (rows // tm, v_pad // tv)

    # pass 1: streaming logsumexp over vocab tiles
    lse = pl.pallas_call(
        functools.partial(lse_kernel, vocab=vocab, tv=tv),
        out_shape=jax.ShapeDtypeStruct((rows, 1), jnp.float32),
        grid=grid,
        in_specs=[pl.BlockSpec((tm, h_pad), lambda i, k: (i, 0)),
                  pl.BlockSpec((h_pad, tv), lambda i, k: (0, k)),
                  pl.BlockSpec((1, tv), lambda i, k: (0, k))],
        out_specs=pl.BlockSpec((tm, 1), lambda i, k: (i, 0)),
        scratch_shapes=[pltpu.VMEM((tm, 1), jnp.float32),
                        pltpu.VMEM((tm, 1), jnp.float32)],
        compiler_params=pltpu.CompilerParams(
            dimension_semantics=("parallel", "arbitrary"),
            vmem_limit_bytes=_VMEM_LIMIT),
    )(h_flat, w_out, b_out)

    # pass 2: recompute logits tile and write lane-dense log-probs
    return pl.pallas_call(
        functools.partial(proj_norm_kernel, vocab=vocab, tv=tv),
        out_shape=jax.ShapeDtypeStruct((rows, v_pad), jnp.float32),
        grid=grid,
        in_specs=[pl.BlockSpec((tm, h_pad), lambda i, k: (i, 0)),
                  pl.BlockSpec((h_pad, tv), lambda i, k: (0, k)),
                  pl.BlockSpec((1, tv), lambda i, k: (0, k)),
                  pl.BlockSpec((tm, 1), lambda i, k: (i, 0))],
        out_specs=pl.BlockSpec((tm, tv), lambda i, k: (i, k)),
        compiler_params=pltpu.CompilerParams(
            dimension_semantics=("parallel", "parallel"),
            vmem_limit_bytes=_VMEM_LIMIT),
    )(h_flat, w_out, b_out, lse)


# ----------------------------------------------------------------------------
# Module wrapper
# ----------------------------------------------------------------------------
class ImageCaptioningPallas:
    def __init__(self, key, *, batch_size, in_feats, hidden_size, vocab_size,
                 max_length, teacher_forcing_ratio=1.0):
        self.batch_size = batch_size
        self.in_feats = in_feats
        self.hidden_size = hidden_size
        self.vocab_size = vocab_size
        self.max_length = max_length
        self.teacher_forcing_ratio = teacher_forcing_ratio

        # vreg-aligned (padded) sizes
        self.b_pad = _round_up(batch_size, 8)
        self.f_pad = _round_up(in_feats, 128)
        self.e_pad = _round_up(1000, 128)              # encoder head width 1000 -> 1024
        self.h_pad = _round_up(hidden_size, 128)
        self.v_pad = _round_up(vocab_size, 128)

        ks = jax.random.split(key, 8)
        s = 0.02

        def pad_normal(k, real_shape, pad_shape, dtype=jnp.bfloat16):
            # padded rows/cols stay exactly zero (correctness of padded lanes)
            w = jnp.zeros(pad_shape, jnp.float32)
            r = (s * jax.random.normal(k, real_shape)).astype(jnp.float32)
            return w.at[tuple(slice(0, d) for d in real_shape)].set(r).astype(dtype)

        # synthetic image encoder: flatten -> Linear(in_feats, 1000) -> ReLU
        self.w_enc = pad_normal(ks[0], (in_feats, 1000), (self.f_pad, self.e_pad))
        self.b_enc = jnp.zeros((1, self.e_pad), jnp.float32)
        # img_fvs_to_hs: Linear(1000, hidden) -> ReLU -> Dropout(eval) -> Reshape
        self.w_h = pad_normal(ks[1], (1000, hidden_size), (self.e_pad, self.h_pad))
        self.b_h = jnp.zeros((1, self.h_pad), jnp.float32)
        # synthetic language decoder: embedding -> ReLU -> GRU cell -> Linear -> log_softmax
        emb = pad_normal(ks[2], (vocab_size, hidden_size),
                         (self.v_pad, self.h_pad), dtype=jnp.float32)
        # pre-apply ReLU to the table once: ReLU(emb)[tok] == ReLU(emb[tok])
        self.emb_relu = jnp.maximum(emb, 0.0).astype(jnp.bfloat16)

        def fused_gate_weight(k):
            # fused [r | z | n] layout, each gate block padded to h_pad lanes
            w = jnp.zeros((self.h_pad, 3 * self.h_pad), jnp.float32)
            for g, kk in enumerate(jax.random.split(k, 3)):
                blk = (s * jax.random.normal(kk, (hidden_size, hidden_size))).astype(jnp.float32)
                w = w.at[:hidden_size, g * self.h_pad:g * self.h_pad + hidden_size].set(blk)
            return w.astype(jnp.bfloat16)

        self.w_ih = fused_gate_weight(ks[3])
        self.b_ih = jnp.zeros((1, 3 * self.h_pad), jnp.float32)
        self.w_hh = fused_gate_weight(ks[4])
        self.b_hh = jnp.zeros((1, 3 * self.h_pad), jnp.float32)
        self.w_out = pad_normal(ks[5], (hidden_size, vocab_size), (self.h_pad, self.v_pad))
        self.b_out = jnp.zeros((1, self.v_pad), jnp.float32)

    def __call__(self, imgs, true_sentences):
        bs = imgs.shape[0]
        # flatten NCHW row-major (matches torch .view); pad batch/feature dims
        x_flat = imgs.reshape(bs, -1).astype(jnp.float32)
        x_pad = jnp.zeros((self.b_pad, self.f_pad), jnp.float32)
        x_pad = x_pad.at[:bs, :self.in_feats].set(x_flat).astype(jnp.bfloat16)

        # teacher forcing coin flip (always True for ratio = 1.0)
        use_teacher_forcing = random.random() < self.teacher_forcing_ratio
        assert use_teacher_forcing  # TODO(synk): greedy feedback branch not implemented

        # decoder token ids: SOS token 0 at step 0, then true_sentences.T[0..L-2]
        ts_t = true_sentences.T.astype(jnp.int32)                     # (max_length, bs)
        dec_inputs = jnp.concatenate(
            [jnp.zeros((1, bs), jnp.int32), ts_t[: self.max_length - 1]], axis=0)
        tok_pad = jnp.zeros((self.max_length, self.b_pad), jnp.int32)
        tok_pad = tok_pad.at[:, :bs].set(dec_inputs)

        # embedding gather + ReLU hoisted out of the serial recurrence:
        # one slab gather of all L*B_pad tokens (padded batch cols read row 0,
        # harmless: those rows are sliced off below).
        x_emb = jnp.take(self.emb_relu, tok_pad.reshape(-1), axis=0)  # (L*B_pad, H_pad) bf16

        # Kernel 1: fused encoder + GRU recurrence -> lane-dense (L*B_pad, H_pad)
        h_all = run_encoder_gru(x_pad, self.w_enc, self.b_enc, self.w_h, self.b_h,
                                x_emb, self.w_ih, self.b_ih, self.w_hh, self.b_hh,
                                max_length=self.max_length, b_pad=self.b_pad,
                                h_pad=self.h_pad)

        # Kernel 2: vocab-tiled output projection + log_softmax (two-pass LSE)
        logp = run_projection(h_all, self.w_out, self.b_out, self.vocab_size)
        logp = logp.reshape(self.max_length, self.b_pad, self.v_pad)

        # stacked (max_length, bs, vocab) log-probs; step di is outputs[di]
        return logp[:, :bs, :self.vocab_size]


if __name__ == "__main__":
    key = jax.random.PRNGKey(0)
    k_img, k_sent, k_param = jax.random.split(key, 3)

    batch, C, Himg, Wimg = 2, 4, 16, 16
    hidden_size, vocab_size, max_length = 32, 32, 8

    imgs = jax.random.normal(k_img, (batch, C, Himg, Wimg), dtype=jnp.float32)
    true_sentences = jax.random.randint(
        k_sent, (batch, max_length), 0, vocab_size, dtype=jnp.int32)

    model = ImageCaptioningPallas(
        k_param, batch_size=batch, in_feats=C * Himg * Wimg,
        hidden_size=hidden_size, vocab_size=vocab_size,
        max_length=max_length, teacher_forcing_ratio=1.0)

    outputs = model(imgs, true_sentences)
    outputs = jax.block_until_ready(outputs)

    assert outputs.shape == (max_length, batch, vocab_size)
    # each row must be a log-softmax over the real vocab: exp-sum == 1
    assert jnp.allclose(jnp.exp(outputs[0]).sum(-1), 1.0, atol=1e-4)
    assert jnp.allclose(jnp.exp(outputs[-1]).sum(-1), 1.0, atol=1e-4)
    print("KERNEL_OK")
</pallas_src>

<mosaic_0001>
module attributes {stable_mosaic.version = 11 : i64} {
  func.func @encoder_gru_kernel(%arg0: memref<8x1024xbf16, #tpu.memory_space<vmem>>, %arg1: memref<1024x1024xbf16, #tpu.memory_space<vmem>>, %arg2: memref<1x1024xf32, #tpu.memory_space<vmem>>, %arg3: memref<1024x128xbf16, #tpu.memory_space<vmem>>, %arg4: memref<1x128xf32, #tpu.memory_space<vmem>>, %arg5: memref<64x128xbf16, #tpu.memory_space<vmem>>, %arg6: memref<128x384xbf16, #tpu.memory_space<vmem>>, %arg7: memref<1x384xf32, #tpu.memory_space<vmem>>, %arg8: memref<128x384xbf16, #tpu.memory_space<vmem>>, %arg9: memref<1x384xf32, #tpu.memory_space<vmem>>, %arg10: memref<64x128xf32, #tpu.memory_space<vmem>>, %arg11: memref<8x128xf32, #tpu.memory_space<vmem>>, %arg12: memref<64x384xf32, #tpu.memory_space<vmem>>) attributes {dimension_semantics = [], scalar_prefetch = 0 : i64, scratch_operands = 2 : i64, tpu.core_type = #tpu.core_type<tc>} {
    %c0 = arith.constant 0 : index
    %c0_0 = arith.constant 0 : index
    %0 = vector.load %arg0[%c0, %c0_0] : memref<8x1024xbf16, #tpu.memory_space<vmem>>, vector<8x1024xbf16>
    %c0_1 = arith.constant 0 : index
    %c0_2 = arith.constant 0 : index
    %1 = vector.load %arg1[%c0_1, %c0_2] : memref<1024x1024xbf16, #tpu.memory_space<vmem>>, vector<1024x1024xbf16>
    %cst = arith.constant dense<0.000000e+00> : vector<8x1024xf32>
    %2 = tpu.matmul %0, %1, %cst {dimension_numbers = #tpu.dot_dimension_numbers<[1], [0], [0], [1], [0, 0, 1, 1], [], []>} : vector<8x1024xbf16>, vector<1024x1024xbf16>, vector<8x1024xf32> -> vector<8x1024xf32>
    %c0_3 = arith.constant 0 : index
    %c0_4 = arith.constant 0 : index
    %3 = vector.load %arg2[%c0_3, %c0_4] : memref<1x1024xf32, #tpu.memory_space<vmem>>, vector<1x1024xf32>
    %4 = vector.broadcast %3 : vector<1x1024xf32> to vector<8x1024xf32>
    %5 = arith.addf %2, %4 : vector<8x1024xf32>
    %cst_5 = arith.constant 0.000000e+00 : f32
    %6 = vector.broadcast %cst_5 : f32 to vector<8x1024xf32>
    %7 = arith.maximumf %5, %6 : vector<8x1024xf32>
    %8 = arith.truncf %7 : vector<8x1024xf32> to vector<8x1024xbf16>
    %c0_6 = arith.constant 0 : index
    %c0_7 = arith.constant 0 : index
    %9 = vector.load %arg3[%c0_6, %c0_7] : memref<1024x128xbf16, #tpu.memory_space<vmem>>, vector<1024x128xbf16>
    %cst_8 = arith.constant dense<0.000000e+00> : vector<8x128xf32>
    %10 = tpu.matmul %8, %9, %cst_8 {dimension_numbers = #tpu.dot_dimension_numbers<[1], [0], [0], [1], [0, 0, 1, 1], [], []>} : vector<8x1024xbf16>, vector<1024x128xbf16>, vector<8x128xf32> -> vector<8x128xf32>
    %c0_9 = arith.constant 0 : index
    %c0_10 = arith.constant 0 : index
    %11 = vector.load %arg4[%c0_9, %c0_10] : memref<1x128xf32, #tpu.memory_space<vmem>>, vector<1x128xf32>
    %12 = vector.broadcast %11 : vector<1x128xf32> to vector<8x128xf32>
    %13 = arith.addf %10, %12 : vector<8x128xf32>
    %cst_11 = arith.constant 0.000000e+00 : f32
    %14 = vector.broadcast %cst_11 : f32 to vector<8x128xf32>
    %15 = arith.maximumf %13, %14 : vector<8x128xf32>
    %c0_12 = arith.constant 0 : index
    %c0_13 = arith.constant 0 : index
    %16 = vector.load %arg11[%c0_12, %c0_13] : memref<8x128xf32, #tpu.memory_space<vmem>>, vector<8x128xf32>
    tpu.vector_store %arg11[%c0_12, %c0_13], %15 {strides = array<i32>} : memref<8x128xf32, #tpu.memory_space<vmem>>, vector<8x128xf32>,
    %c0_14 = arith.constant 0 : index
    %c0_15 = arith.constant 0 : index
    %17 = vector.load %arg5[%c0_14, %c0_15] : memref<64x128xbf16, #tpu.memory_space<vmem>>, vector<64x128xbf16>
    %c0_16 = arith.constant 0 : index
    %c0_17 = arith.constant 0 : index
    %18 = vector.load %arg6[%c0_16, %c0_17] : memref<128x384xbf16, #tpu.memory_space<vmem>>, vector<128x384xbf16>
    %cst_18 = arith.constant dense<0.000000e+00> : vector<64x384xf32>
    %19 = tpu.matmul %17, %18, %cst_18 {dimension_numbers = #tpu.dot_dimension_numbers<[1], [0], [0], [1], [0, 0, 1, 1], [], []>} : vector<64x128xbf16>, vector<128x384xbf16>, vector<64x384xf32> -> vector<64x384xf32>
    %c0_19 = arith.constant 0 : index
    %c0_20 = arith.constant 0 : index
    %20 = vector.load %arg7[%c0_19, %c0_20] : memref<1x384xf32, #tpu.memory_space<vmem>>, vector<1x384xf32>
    %21 = vector.broadcast %20 : vector<1x384xf32> to vector<64x384xf32>
    %22 = arith.addf %19, %21 : vector<64x384xf32>
    %c0_21 = arith.constant 0 : index
    %c0_22 = arith.constant 0 : index
    %23 = vector.load %arg12[%c0_21, %c0_22] : memref<64x384xf32, #tpu.memory_space<vmem>>, vector<64x384xf32>
    tpu.vector_store %arg12[%c0_21, %c0_22], %22 {strides = array<i32>} : memref<64x384xf32, #tpu.memory_space<vmem>>, vector<64x384xf32>,
    %c0_23 = arith.constant 0 : index
    %c0_24 = arith.constant 0 : index
    %24 = vector.load %arg8[%c0_23, %c0_24] : memref<128x384xbf16, #tpu.memory_space<vmem>>, vector<128x384xbf16>
    %c0_25 = arith.constant 0 : index
    %c0_26 = arith.constant 0 : index
    %25 = vector.load %arg9[%c0_25, %c0_26] : memref<1x384xf32, #tpu.memory_space<vmem>>, vector<1x384xf32>
    %26 = vector.shape_cast %25 : vector<1x384xf32> to vector<1x384xf32>
    %27 = vector.broadcast %26 : vector<1x384xf32> to vector<8x384xf32>
    %c0_27 = arith.constant 0 : index
    %c0_28 = arith.constant 0 : index
    %28 = vector.load %arg11[%c0_27, %c0_28] : memref<8x128xf32, #tpu.memory_space<vmem>>, vector<8x128xf32>
    %c0_29 = arith.constant 0 : index
    %c0_30 = arith.constant 0 : index
    %29 = vector.load %arg12[%c0_29, %c0_30] : memref<64x384xf32, #tpu.memory_space<vmem>>, vector<8x384xf32>
    %30 = arith.truncf %28 : vector<8x128xf32> to vector<8x128xbf16>
    %cst_31 = arith.constant dense<0.000000e+00> : vector<8x384xf32>
    %31 = tpu.matmul %30, %24, %cst_31 {dimension_numbers = #tpu.dot_dimension_numbers<[1], [0], [0], [1], [0, 0, 1, 1], [], []>} : vector<8x128xbf16>, vector<128x384xbf16>, vector<8x384xf32> -> vector<8x384xf32>
    %32 = arith.addf %31, %27 : vector<8x384xf32>
    %33 = vector.extract_strided_slice %29 {offsets = [0, 0], sizes = [8, 128], strides = [1, 1]} : vector<8x384xf32> to vector<8x128xf32>
    %34 = vector.extract_strided_slice %32 {offsets = [0, 0], sizes = [8, 128], strides = [1, 1]} : vector<8x384xf32> to vector<8x128xf32>
    %35 = arith.addf %33, %34 : vector<8x128xf32>
    %36 = arith.negf %35 : vector<8x128xf32>
    %37 = math.exp %36 : vector<8x128xf32>
    %cst_32 = arith.constant 1.000000e+00 : f32
    %38 = vector.broadcast %cst_32 : f32 to vector<8x128xf32>
    %39 = arith.addf %38, %37 : vector<8x128xf32>
    %40 = arith.divf %38, %39 : vector<8x128xf32>
    %41 = vector.extract_strided_slice %29 {offsets = [0, 128], sizes = [8, 128], strides = [1, 1]} : vector<8x384xf32> to vector<8x128xf32>
    %42 = vector.extract_strided_slice %32 {offsets = [0, 128], sizes = [8, 128], strides = [1, 1]} : vector<8x384xf32> to vector<8x128xf32>
    %43 = arith.addf %41, %42 : vector<8x128xf32>
    %44 = arith.negf %43 : vector<8x128xf32>
    %45 = math.exp %44 : vector<8x128xf32>
    %cst_33 = arith.constant 1.000000e+00 : f32
    %46 = vector.broadcast %cst_33 : f32 to vector<8x128xf32>
    %47 = arith.addf %46, %45 : vector<8x128xf32>
    %48 = arith.divf %46, %47 : vector<8x128xf32>
    %49 = vector.extract_strided_slice %29 {offsets = [0, 256], sizes = [8, 128], strides = [1, 1]} : vector<8x384xf32> to vector<8x128xf32>
    %50 = vector.extract_strided_slice %32 {offsets = [0, 256], sizes = [8, 128], strides = [1, 1]} : vector<8x384xf32> to vector<8x128xf32>
    %51 = arith.mulf %40, %50 : vector<8x128xf32>
    %52 = arith.addf %49, %51 : vector<8x128xf32>
    %53 = math.tanh %52 : vector<8x128xf32>
    %cst_34 = arith.constant 1.000000e+00 : f32
    %54 = vector.broadcast %cst_34 : f32 to vector<8x128xf32>
    %55 = arith.subf %54, %48 : vector<8x128xf32>
    %56 = arith.mulf %55, %53 : vector<8x128xf32>
    %57 = arith.mulf %48, %28 : vector<8x128xf32>
    %58 = arith.addf %56, %57 : vector<8x128xf32>
    %c0_35 = arith.constant 0 : index
    %c0_36 = arith.constant 0 : index
    %59 = vector.load %arg11[%c0_35, %c0_36] : memref<8x128xf32, #tpu.memory_space<vmem>>, vector<8x128xf32>
    tpu.vector_store %arg11[%c0_35, %c0_36], %58 {strides = array<i32>} : memref<8x128xf32, #tpu.memory_space<vmem>>, vector<8x128xf32>,
    %c0_37 = arith.constant 0 : index
    %c0_38 = arith.constant 0 : index
    %60 = vector.load %arg10[%c0_37, %c0_38] : memref<64x128xf32, #tpu.memory_space<vmem>>, vector<8x128xf32>
    tpu.vector_store %arg10[%c0_37, %c0_38], %58 {strides = array<i32>} : memref<64x128xf32, #tpu.memory_space<vmem>>, vector<8x128xf32>,
    %c0_39 = arith.constant 0 : index
    %c0_40 = arith.constant 0 : index
    %61 = vector.load %arg11[%c0_39, %c0_40] : memref<8x128xf32, #tpu.memory_space<vmem>>, vector<8x128xf32>
    %c8 = arith.constant 8 : index
    %c0_41 = arith.constant 0 : index
    %62 = vector.load %arg12[%c8, %c0_41] : memref<64x384xf32, #tpu.memory_space<vmem>>, vector<8x384xf32>
    %63 = arith.truncf %61 : vector<8x128xf32> to vector<8x128xbf16>
    %cst_42 = arith.constant dense<0.000000e+00> : vector<8x384xf32>
    %64 = tpu.matmul %63, %24, %cst_42 {dimension_numbers = #tpu.dot_dimension_numbers<[1], [0], [0], [1], [0, 0, 1, 1], [], []>} : vector<8x128xbf16>, vector<128x384xbf16>, vector<8x384xf32> -> vector<8x384xf32>
    %65 = arith.addf %64, %27 : vector<8x384xf32>
    %66 = vector.extract_strided_slice %62 {offsets = [0, 0], sizes = [8, 128], strides = [1, 1]} : vector<8x384xf32> to vector<8x128xf32>
    %67 = vector.extract_strided_slice %65 {offsets = [0, 0], sizes = [8, 128], strides = [1, 1]} : vector<8x384xf32> to vector<8x128xf32>
    %68 = arith.addf %66, %67 : vector<8x128xf32>
    %69 = arith.negf %68 : vector<8x128xf32>
    %70 = math.exp %69 : vector<8x128xf32>
    %cst_43 = arith.constant 1.000000e+00 : f32
    %71 = vector.broadcast %cst_43 : f32 to vector<8x128xf32>
    %72 = arith.addf %71, %70 : vector<8x128xf32>
    %73 = arith.divf %71, %72 : vector<8x128xf32>
    %74 = vector.extract_strided_slice %62 {offsets = [0, 128], sizes = [8, 128], strides = [1, 1]} : vector<8x384xf32> to vector<8x128xf32>
    %75 = vector.extract_strided_slice %65 {offsets = [0, 128], sizes = [8, 128], strides = [1, 1]} : vector<8x384xf32> to vector<8x128xf32>
    %76 = arith.addf %74, %75 : vector<8x128xf32>
    %77 = arith.negf %76 : vector<8x128xf32>
    %78 = math.exp %77 : vector<8x128xf32>
    %cst_44 = arith.constant 1.000000e+00 : f32
    %79 = vector.broadcast %cst_44 : f32 to vector<8x128xf32>
    %80 = arith.addf %79, %78 : vector<8x128xf32>
    %81 = arith.divf %79, %80 : vector<8x128xf32>
    %82 = vector.extract_strided_slice %62 {offsets = [0, 256], sizes = [8, 128], strides = [1, 1]} : vector<8x384xf32> to vector<8x128xf32>
    %83 = vector.extract_strided_slice %65 {offsets = [0, 256], sizes = [8, 128], strides = [1, 1]} : vector<8x384xf32> to vector<8x128xf32>
    %84 = arith.mulf %73, %83 : vector<8x128xf32>
    %85 = arith.addf %82, %84 : vector<8x128xf32>
    %86 = math.tanh %85 : vector<8x128xf32>
    %cst_45 = arith.constant 1.000000e+00 : f32
    %87 = vector.broadcast %cst_45 : f32 to vector<8x128xf32>
    %88 = arith.subf %87, %81 : vector<8x128xf32>
    %89 = arith.mulf %88, %86 : vector<8x128xf32>
    %90 = arith.mulf %81, %61 : vector<8x128xf32>
    %91 = arith.addf %89, %90 : vector<8x128xf32>
    %c0_46 = arith.constant 0 : index
    %c0_47 = arith.constant 0 : index
    %92 = vector.load %arg11[%c0_46, %c0_47] : memref<8x128xf32, #tpu.memory_space<vmem>>, vector<8x128xf32>
    tpu.vector_store %arg11[%c0_46, %c0_47], %91 {strides = array<i32>} : memref<8x128xf32, #tpu.memory_space<vmem>>, vector<8x128xf32>,
    %c8_48 = arith.constant 8 : index
    %c0_49 = arith.constant 0 : index
    %93 = vector.load %arg10[%c8_48, %c0_49] : memref<64x128xf32, #tpu.memory_space<vmem>>, vector<8x128xf32>
    tpu.vector_store %arg10[%c8_48, %c0_49], %91 {strides = array<i32>} : memref<64x128xf32, #tpu.memory_space<vmem>>, vector<8x128xf32>,
    %c0_50 = arith.constant 0 : index
    %c0_51 = arith.constant 0 : index
    %94 = vector.load %arg11[%c0_50, %c0_51] : memref<8x128xf32, #tpu.memory_space<vmem>>, vector<8x128xf32>
    %c16 = arith.constant 16 : index
    %c0_52 = arith.constant 0 : index
    %95 = vector.load %arg12[%c16, %c0_52] : memref<64x384xf32, #tpu.memory_space<vmem>>, vector<8x384xf32>
    %96 = arith.truncf %94 : vector<8x128xf32> to vector<8x128xbf16>
    %cst_53 = arith.constant dense<0.000000e+00> : vector<8x384xf32>
    %97 = tpu.matmul %96, %24, %cst_53 {dimension_numbers = #tpu.dot_dimension_numbers<[1], [0], [0], [1], [0, 0, 1, 1], [], []>} : vector<8x128xbf16>, vector<128x384xbf16>, vector<8x384xf32> -> vector<8x384xf32>
    %98 = arith.addf %97, %27 : vector<8x384xf32>
    %99 = vector.extract_strided_slice %95 {offsets = [0, 0], sizes = [8, 128], strides = [1, 1]} : vector<8x384xf32> to vector<8x128xf32>
    %100 = vector.extract_strided_slice %98 {offsets = [0, 0], sizes = [8, 128], strides = [1, 1]} : vector<8x384xf32> to vector<8x128xf32>
    %101 = arith.addf %99, %100 : vector<8x128xf32>
    %102 = arith.negf %101 : vector<8x128xf32>
    %103 = math.exp %102 : vector<8x128xf32>
    %cst_54 = arith.constant 1.000000e+00 : f32
    %104 = vector.broadcast %cst_54 : f32 to vector<8x128xf32>
    %105 = arith.addf %104, %103 : vector<8x128xf32>
    %106 = arith.divf %104, %105 : vector<8x128xf32>
    %107 = vector.extract_strided_slice %95 {offsets = [0, 128], sizes = [8, 128], strides = [1, 1]} : vector<8x384xf32> to vector<8x128xf32>
    %108 = vector.extract_strided_slice %98 {offsets = [0, 128], sizes = [8, 128], strides = [1, 1]} : vector<8x384xf32> to vector<8x128xf32>
    %109 = arith.addf %107, %108 : vector<8x128xf32>
    %110 = arith.negf %109 : vector<8x128xf32>
    %111 = math.exp %110 : vector<8x128xf32>
    %cst_55 = arith.constant 1.000000e+00 : f32
    %112 = vector.broadcast %cst_55 : f32 to vector<8x128xf32>
    %113 = arith.addf %112, %111 : vector<8x128xf32>
    %114 = arith.divf %112, %113 : vector<8x128xf32>
    %115 = vector.extract_strided_slice %95 {offsets = [0, 256], sizes = [8, 128], strides = [1, 1]} : vector<8x384xf32> to vector<8x128xf32>
    %116 = vector.extract_strided_slice %98 {offsets = [0, 256], sizes = [8, 128], strides = [1, 1]} : vector<8x384xf32> to vector<8x128xf32>
    %117 = arith.mulf %106, %116 : vector<8x128xf32>
    %118 = arith.addf %115, %117 : vector<8x128xf32>
    %119 = math.tanh %118 : vector<8x128xf32>
    %cst_56 = arith.constant 1.000000e+00 : f32
    %120 = vector.broadcast %cst_56 : f32 to vector<8x128xf32>
    %121 = arith.subf %120, %114 : vector<8x128xf32>
    %122 = arith.mulf %121, %119 : vector<8x128xf32>
    %123 = arith.mulf %114, %94 : vector<8x128xf32>
    %124 = arith.addf %122, %123 : vector<8x128xf32>
    %c0_57 = arith.constant 0 : index
    %c0_58 = arith.constant 0 : index
    %125 = vector.load %arg11[%c0_57, %c0_58] : memref<8x128xf32, #tpu.memory_space<vmem>>, vector<8x128xf32>
    tpu.vector_store %arg11[%c0_57, %c0_58], %124 {strides = array<i32>} : memref<8x128xf32, #tpu.memory_space<vmem>>, vector<8x128xf32>,
    %c16_59 = arith.constant 16 : index
    %c0_60 = arith.constant 0 : index
    %126 = vector.load %arg10[%c16_59, %c0_60] : memref<64x128xf32, #tpu.memory_space<vmem>>, vector<8x128xf32>
    tpu.vector_store %arg10[%c16_59, %c0_60], %124 {strides = array<i32>} : memref<64x128xf32, #tpu.memory_space<vmem>>, vector<8x128xf32>,
    %c0_61 = arith.constant 0 : index
    %c0_62 = arith.constant 0 : index
    %127 = vector.load %arg11[%c0_61, %c0_62] : memref<8x128xf32, #tpu.memory_space<vmem>>, vector<8x128xf32>
    %c24 = arith.constant 24 : index
    %c0_63 = arith.constant 0 : index
    %128 = vector.load %arg12[%c24, %c0_63] : memref<64x384xf32, #tpu.memory_space<vmem>>, vector<8x384xf32>
    %129 = arith.truncf %127 : vector<8x128xf32> to vector<8x128xbf16>
    %cst_64 = arith.constant dense<0.000000e+00> : vector<8x384xf32>
    %130 = tpu.matmul %129, %24, %cst_64 {dimension_numbers = #tpu.dot_dimension_numbers<[1], [0], [0], [1], [0, 0, 1, 1], [], []>} : vector<8x128xbf16>, vector<128x384xbf16>, vector<8x384xf32> -> vector<8x384xf32>
    %131 = arith.addf %130, %27 : vector<8x384xf32>
    %132 = vector.extract_strided_slice %128 {offsets = [0, 0], sizes = [8, 128], strides = [1, 1]} : vector<8x384xf32> to vector<8x128xf32>
    %133 = vector.extract_strided_slice %131 {offsets = [0, 0], sizes = [8, 128], strides = [1, 1]} : vector<8x384xf32> to vector<8x128xf32>
    %134 = arith.addf %132, %133 : vector<8x128xf32>
    %135 = arith.negf %134 : vector<8x128xf32>
    %136 = math.exp %135 : vector<8x128xf32>
    %cst_65 = arith.constant 1.000000e+00 : f32
    %137 = vector.broadcast %cst_65 : f32 to vector<8x128xf32>
    %138 = arith.addf %137, %136 : vector<8x128xf32>
    %139 = arith.divf %137, %138 : vector<8x128xf32>
    %140 = vector.extract_strided_slice %128 {offsets = [0, 128], sizes = [8, 128], strides = [1, 1]} : vector<8x384xf32> to vector<8x128xf32>
    %141 = vector.extract_strided_slice %131 {offsets = [0, 128], sizes = [8, 128], strides = [1, 1]} : vector<8x384xf32> to vector<8x128xf32>
    %142 = arith.addf %140, %141 : vector<8x128xf32>
    %143 = arith.negf %142 : vector<8x128xf32>
    %144 = math.exp %143 : vector<8x128xf32>
    %cst_66 = arith.constant 1.000000e+00 : f32
    %145 = vector.broadcast %cst_66 : f32 to vector<8x128xf32>
    %146 = arith.addf %145, %144 : vector<8x128xf32>
    %147 = arith.divf %145, %146 : vector<8x128xf32>
    %148 = vector.extract_strided_slice %128 {offsets = [0, 256], sizes = [8, 128], strides = [1, 1]} : vector<8x384xf32> to vector<8x128xf32>
    %149 = vector.extract_strided_slice %131 {offsets = [0, 256], sizes = [8, 128], strides = [1, 1]} : vector<8x384xf32> to vector<8x128xf32>
    %150 = arith.mulf %139, %149 : vector<8x128xf32>
    %151 = arith.addf %148, %150 : vector<8x128xf32>
    %152 = math.tanh %151 : vector<8x128xf32>
    %cst_67 = arith.constant 1.000000e+00 : f32
    %153 = vector.broadcast %cst_67 : f32 to vector<8x128xf32>
    %154 = arith.subf %153, %147 : vector<8x128xf32>
    %155 = arith.mulf %154, %152 : vector<8x128xf32>
    %156 = arith.mulf %147, %127 : vector<8x128xf32>
    %157 = arith.addf %155, %156 : vector<8x128xf32>
    %c0_68 = arith.constant 0 : index
    %c0_69 = arith.constant 0 : index
    %158 = vector.load %arg11[%c0_68, %c0_69] : memref<8x128xf32, #tpu.memory_space<vmem>>, vector<8x128xf32>
    tpu.vector_store %arg11[%c0_68, %c0_69], %157 {strides = array<i32>} : memref<8x128xf32, #tpu.memory_space<vmem>>, vector<8x128xf32>,
    %c24_70 = arith.constant 24 : index
    %c0_71 = arith.constant 0 : index
    %159 = vector.load %arg10[%c24_70, %c0_71] : memref<64x128xf32, #tpu.memory_space<vmem>>, vector<8x128xf32>
    tpu.vector_store %arg10[%c24_70, %c0_71], %157 {strides = array<i32>} : memref<64x128xf32, #tpu.memory_space<vmem>>, vector<8x128xf32>,
    %c0_72 = arith.constant 0 : index
    %c0_73 = arith.constant 0 : index
    %160 = vector.load %arg11[%c0_72, %c0_73] : memref<8x128xf32, #tpu.memory_space<vmem>>, vector<8x128xf32>
    %c32 = arith.constant 32 : index
    %c0_74 = arith.constant 0 : index
    %161 = vector.load %arg12[%c32, %c0_74] : memref<64x384xf32, #tpu.memory_space<vmem>>, vector<8x384xf32>
    %162 = arith.truncf %160 : vector<8x128xf32> to vector<8x128xbf16>
    %cst_75 = arith.constant dense<0.000000e+00> : vector<8x384xf32>
    %163 = tpu.matmul %162, %24, %cst_75 {dimension_numbers = #tpu.dot_dimension_numbers<[1], [0], [0], [1], [0, 0, 1, 1], [], []>} : vector<8x128xbf16>, vector<128x384xbf16>, vector<8x384xf32> -> vector<8x384xf32>
    %164 = arith.addf %163, %27 : vector<8x384xf32>
    %165 = vector.extract_strided_slice %161 {offsets = [0, 0], sizes = [8, 128], strides = [1, 1]} : vector<8x384xf32> to vector<8x128xf32>
    %166 = vector.extract_strided_slice %164 {offsets = [0, 0], sizes = [8, 128], strides = [1, 1]} : vector<8x384xf32> to vector<8x128xf32>
    %167 = arith.addf %165, %166 : vector<8x128xf32>
    %168 = arith.negf %167 : vector<8x128xf32>
    %169 = math.exp %168 : vector<8x128xf32>
    %cst_76 = arith.constant 1.000000e+00 : f32
    %170 = vector.broadcast %cst_76 : f32 to vector<8x128xf32>
    %171 = arith.addf %170, %169 : vector<8x128xf32>
    %172 = arith.divf %170, %171 : vector<8x128xf32>
    %173 = vector.extract_strided_slice %161 {offsets = [0, 128], sizes = [8, 128], strides = [1, 1]} : vector<8x384xf32> to vector<8x128xf32>
    %174 = vector.extract_strided_slice %164 {offsets = [0, 128], sizes = [8, 128], strides = [1, 1]} : vector<8x384xf32> to vector<8x128xf32>
    %175 = arith.addf %173, %174 : vector<8x128xf32>
    %176 = arith.negf %175 : vector<8x128xf32>
    %177 = math.exp %176 : vector<8x128xf32>
    %cst_77 = arith.constant 1.000000e+00 : f32
    %178 = vector.broadcast %cst_77 : f32 to vector<8x128xf32>
    %179 = arith.addf %178, %177 : vector<8x128xf32>
    %180 = arith.divf %178, %179 : vector<8x128xf32>
    %181 = vector.extract_strided_slice %161 {offsets = [0, 256], sizes = [8, 128], strides = [1, 1]} : vector<8x384xf32> to vector<8x128xf32>
    %182 = vector.extract_strided_slice %164 {offsets = [0, 256], sizes = [8, 128], strides = [1, 1]} : vector<8x384xf32> to vector<8x128xf32>
    %183 = arith.mulf %172, %182 : vector<8x128xf32>
    %184 = arith.addf %181, %183 : vector<8x128xf32>
    %185 = math.tanh %184 : vector<8x128xf32>
    %cst_78 = arith.constant 1.000000e+00 : f32
    %186 = vector.broadcast %cst_78 : f32 to vector<8x128xf32>
    %187 = arith.subf %186, %180 : vector<8x128xf32>
    %188 = arith.mulf %187, %185 : vector<8x128xf32>
    %189 = arith.mulf %180, %160 : vector<8x128xf32>
    %190 = arith.addf %188, %189 : vector<8x128xf32>
    %c0_79 = arith.constant 0 : index
    %c0_80 = arith.constant 0 : index
    %191 = vector.load %arg11[%c0_79, %c0_80] : memref<8x128xf32, #tpu.memory_space<vmem>>, vector<8x128xf32>
    tpu.vector_store %arg11[%c0_79, %c0_80], %190 {strides = array<i32>} : memref<8x128xf32, #tpu.memory_space<vmem>>, vector<8x128xf32>,
    %c32_81 = arith.constant 32 : index
    %c0_82 = arith.constant 0 : index
    %192 = vector.load %arg10[%c32_81, %c0_82] : memref<64x128xf32, #tpu.memory_space<vmem>>, vector<8x128xf32>
    tpu.vector_store %arg10[%c32_81, %c0_82], %190 {strides = array<i32>} : memref<64x128xf32, #tpu.memory_space<vmem>>, vector<8x128xf32>,
    %c0_83 = arith.constant 0 : index
    %c0_84 = arith.constant 0 : index
    %193 = vector.load %arg11[%c0_83, %c0_84] : memref<8x128xf32, #tpu.memory_space<vmem>>, vector<8x128xf32>
    %c40 = arith.constant 40 : index
    %c0_85 = arith.constant 0 : index
    %194 = vector.load %arg12[%c40, %c0_85] : memref<64x384xf32, #tpu.memory_space<vmem>>, vector<8x384xf32>
    %195 = arith.truncf %193 : vector<8x128xf32> to vector<8x128xbf16>
    %cst_86 = arith.constant dense<0.000000e+00> : vector<8x384xf32>
    %196 = tpu.matmul %195, %24, %cst_86 {dimension_numbers = #tpu.dot_dimension_numbers<[1], [0], [0], [1], [0, 0, 1, 1], [], []>} : vector<8x128xbf16>, vector<128x384xbf16>, vector<8x384xf32> -> vector<8x384xf32>
    %197 = arith.addf %196, %27 : vector<8x384xf32>
    %198 = vector.extract_strided_slice %194 {offsets = [0, 0], sizes = [8, 128], strides = [1, 1]} : vector<8x384xf32> to vector<8x128xf32>
    %199 = vector.extract_strided_slice %197 {offsets = [0, 0], sizes = [8, 128], strides = [1, 1]} : vector<8x384xf32> to vector<8x128xf32>
    %200 = arith.addf %198, %199 : vector<8x128xf32>
    %201 = arith.negf %200 : vector<8x128xf32>
    %202 = math.exp %201 : vector<8x128xf32>
    %cst_87 = arith.constant 1.000000e+00 : f32
    %203 = vector.broadcast %cst_87 : f32 to vector<8x128xf32>
    %204 = arith.addf %203, %202 : vector<8x128xf32>
    %205 = arith.divf %203, %204 : vector<8x128xf32>
    %206 = vector.extract_strided_slice %194 {offsets = [0, 128], sizes = [8, 128], strides = [1, 1]} : vector<8x384xf32> to vector<8x128xf32>
    %207 = vector.extract_strided_slice %197 {offsets = [0, 128], sizes = [8, 128], strides = [1, 1]} : vector<8x384xf32> to vector<8x128xf32>
    %208 = arith.addf %206, %207 : vector<8x128xf32>
    %209 = arith.negf %208 : vector<8x128xf32>
    %210 = math.exp %209 : vector<8x128xf32>
    %cst_88 = arith.constant 1.000000e+00 : f32
    %211 = vector.broadcast %cst_88 : f32 to vector<8x128xf32>
    %212 = arith.addf %211, %210 : vector<8x128xf32>
    %213 = arith.divf %211, %212 : vector<8x128xf32>
    %214 = vector.extract_strided_slice %194 {offsets = [0, 256], sizes = [8, 128], strides = [1, 1]} : vector<8x384xf32> to vector<8x128xf32>
    %215 = vector.extract_strided_slice %197 {offsets = [0, 256], sizes = [8, 128], strides = [1, 1]} : vector<8x384xf32> to vector<8x128xf32>
    %216 = arith.mulf %205, %215 : vector<8x128xf32>
    %217 = arith.addf %214, %216 : vector<8x128xf32>
    %218 = math.tanh %217 : vector<8x128xf32>
    %cst_89 = arith.constant 1.000000e+00 : f32
    %219 = vector.broadcast %cst_89 : f32 to vector<8x128xf32>
    %220 = arith.subf %219, %213 : vector<8x128xf32>
    %221 = arith.mulf %220, %218 : vector<8x128xf32>
    %222 = arith.mulf %213, %193 : vector<8x128xf32>
    %223 = arith.addf %221, %222 : vector<8x128xf32>
    %c0_90 = arith.constant 0 : index
    %c0_91 = arith.constant 0 : index
    %224 = vector.load %arg11[%c0_90, %c0_91] : memref<8x128xf32, #tpu.memory_space<vmem>>, vector<8x128xf32>
    tpu.vector_store %arg11[%c0_90, %c0_91], %223 {strides = array<i32>} : memref<8x128xf32, #tpu.memory_space<vmem>>, vector<8x128xf32>,
    %c40_92 = arith.constant 40 : index
    %c0_93 = arith.constant 0 : index
    %225 = vector.load %arg10[%c40_92, %c0_93] : memref<64x128xf32, #tpu.memory_space<vmem>>, vector<8x128xf32>
    tpu.vector_store %arg10[%c40_92, %c0_93], %223 {strides = array<i32>} : memref<64x128xf32, #tpu.memory_space<vmem>>, vector<8x128xf32>,
    %c0_94 = arith.constant 0 : index
    %c0_95 = arith.constant 0 : index
    %226 = vector.load %arg11[%c0_94, %c0_95] : memref<8x128xf32, #tpu.memory_space<vmem>>, vector<8x128xf32>
    %c48 = arith.constant 48 : index
    %c0_96 = arith.constant 0 : index
    %227 = vector.load %arg12[%c48, %c0_96] : memref<64x384xf32, #tpu.memory_space<vmem>>, vector<8x384xf32>
    %228 = arith.truncf %226 : vector<8x128xf32> to vector<8x128xbf16>
    %cst_97 = arith.constant dense<0.000000e+00> : vector<8x384xf32>
    %229 = tpu.matmul %228, %24, %cst_97 {dimension_numbers = #tpu.dot_dimension_numbers<[1], [0], [0], [1], [0, 0, 1, 1], [], []>} : vector<8x128xbf16>, vector<128x384xbf16>, vector<8x384xf32> -> vector<8x384xf32>
    %230 = arith.addf %229, %27 : vector<8x384xf32>
    %231 = vector.extract_strided_slice %227 {offsets = [0, 0], sizes = [8, 128], strides = [1, 1]} : vector<8x384xf32> to vector<8x128xf32>
    %232 = vector.extract_strided_slice %230 {offsets = [0, 0], sizes = [8, 128], strides = [1, 1]} : vector<8x384xf32> to vector<8x128xf32>
    %233 = arith.addf %231, %232 : vector<8x128xf32>
    %234 = arith.negf %233 : vector<8x128xf32>
    %235 = math.exp %234 : vector<8x128xf32>
    %cst_98 = arith.constant 1.000000e+00 : f32
    %236 = vector.broadcast %cst_98 : f32 to vector<8x128xf32>
    %237 = arith.addf %236, %235 : vector<8x128xf32>
    %238 = arith.divf %236, %237 : vector<8x128xf32>
    %239 = vector.extract_strided_slice %227 {offsets = [0, 128], sizes = [8, 128], strides = [1, 1]} : vector<8x384xf32> to vector<8x128xf32>
    %240 = vector.extract_strided_slice %230 {offsets = [0, 128], sizes = [8, 128], strides = [1, 1]} : vector<8x384xf32> to vector<8x128xf32>
    %241 = arith.addf %239, %240 : vector<8x128xf32>
    %242 = arith.negf %241 : vector<8x128xf32>
    %243 = math.exp %242 : vector<8x128xf32>
    %cst_99 = arith.constant 1.000000e+00 : f32
    %244 = vector.broadcast %cst_99 : f32 to vector<8x128xf32>
    %245 = arith.addf %244, %243 : vector<8x128xf32>
    %246 = arith.divf %244, %245 : vector<8x128xf32>
    %247 = vector.extract_strided_slice %227 {offsets = [0, 256], sizes = [8, 128], strides = [1, 1]} : vector<8x384xf32> to vector<8x128xf32>
    %248 = vector.extract_strided_slice %230 {offsets = [0, 256], sizes = [8, 128], strides = [1, 1]} : vector<8x384xf32> to vector<8x128xf32>
    %249 = arith.mulf %238, %248 : vector<8x128xf32>
    %250 = arith.addf %247, %249 : vector<8x128xf32>
    %251 = math.tanh %250 : vector<8x128xf32>
    %cst_100 = arith.constant 1.000000e+00 : f32
    %252 = vector.broadcast %cst_100 : f32 to vector<8x128xf32>
    %253 = arith.subf %252, %246 : vector<8x128xf32>
    %254 = arith.mulf %253, %251 : vector<8x128xf32>
    %255 = arith.mulf %246, %226 : vector<8x128xf32>
    %256 = arith.addf %254, %255 : vector<8x128xf32>
    %c0_101 = arith.constant 0 : index
    %c0_102 = arith.constant 0 : index
    %257 = vector.load %arg11[%c0_101, %c0_102] : memref<8x128xf32, #tpu.memory_space<vmem>>, vector<8x128xf32>
    tpu.vector_store %arg11[%c0_101, %c0_102], %256 {strides = array<i32>} : memref<8x128xf32, #tpu.memory_space<vmem>>, vector<8x128xf32>,
    %c48_103 = arith.constant 48 : index
    %c0_104 = arith.constant 0 : index
    %258 = vector.load %arg10[%c48_103, %c0_104] : memref<64x128xf32, #tpu.memory_space<vmem>>, vector<8x128xf32>
    tpu.vector_store %arg10[%c48_103, %c0_104], %256 {strides = array<i32>} : memref<64x128xf32, #tpu.memory_space<vmem>>, vector<8x128xf32>,
    %c0_105 = arith.constant 0 : index
    %c0_106 = arith.constant 0 : index
    %259 = vector.load %arg11[%c0_105, %c0_106] : memref<8x128xf32, #tpu.memory_space<vmem>>, vector<8x128xf32>
    %c56 = arith.constant 56 : index
    %c0_107 = arith.constant 0 : index
    %260 = vector.load %arg12[%c56, %c0_107] : memref<64x384xf32, #tpu.memory_space<vmem>>, vector<8x384xf32>
    %261 = arith.truncf %259 : vector<8x128xf32> to vector<8x128xbf16>
    %cst_108 = arith.constant dense<0.000000e+00> : vector<8x384xf32>
    %262 = tpu.matmul %261, %24, %cst_108 {dimension_numbers = #tpu.dot_dimension_numbers<[1], [0], [0], [1], [0, 0, 1, 1], [], []>} : vector<8x128xbf16>, vector<128x384xbf16>, vector<8x384xf32> -> vector<8x384xf32>
    %263 = arith.addf %262, %27 : vector<8x384xf32>
    %264 = vector.extract_strided_slice %260 {offsets = [0, 0], sizes = [8, 128], strides = [1, 1]} : vector<8x384xf32> to vector<8x128xf32>
    %265 = vector.extract_strided_slice %263 {offsets = [0, 0], sizes = [8, 128], strides = [1, 1]} : vector<8x384xf32> to vector<8x128xf32>
    %266 = arith.addf %264, %265 : vector<8x128xf32>
    %267 = arith.negf %266 : vector<8x128xf32>
    %268 = math.exp %267 : vector<8x128xf32>
    %cst_109 = arith.constant 1.000000e+00 : f32
    %269 = vector.broadcast %cst_109 : f32 to vector<8x128xf32>
    %270 = arith.addf %269, %268 : vector<8x128xf32>
    %271 = arith.divf %269, %270 : vector<8x128xf32>
    %272 = vector.extract_strided_slice %260 {offsets = [0, 128], sizes = [8, 128], strides = [1, 1]} : vector<8x384xf32> to vector<8x128xf32>
    %273 = vector.extract_strided_slice %263 {offsets = [0, 128], sizes = [8, 128], strides = [1, 1]} : vector<8x384xf32> to vector<8x128xf32>
    %274 = arith.addf %272, %273 : vector<8x128xf32>
    %275 = arith.negf %274 : vector<8x128xf32>
    %276 = math.exp %275 : vector<8x128xf32>
    %cst_110 = arith.constant 1.000000e+00 : f32
    %277 = vector.broadcast %cst_110 : f32 to vector<8x128xf32>
    %278 = arith.addf %277, %276 : vector<8x128xf32>
    %279 = arith.divf %277, %278 : vector<8x128xf32>
    %280 = vector.extract_strided_slice %260 {offsets = [0, 256], sizes = [8, 128], strides = [1, 1]} : vector<8x384xf32> to vector<8x128xf32>
    %281 = vector.extract_strided_slice %263 {offsets = [0, 256], sizes = [8, 128], strides = [1, 1]} : vector<8x384xf32> to vector<8x128xf32>
    %282 = arith.mulf %271, %281 : vector<8x128xf32>
    %283 = arith.addf %280, %282 : vector<8x128xf32>
    %284 = math.tanh %283 : vector<8x128xf32>
    %cst_111 = arith.constant 1.000000e+00 : f32
    %285 = vector.broadcast %cst_111 : f32 to vector<8x128xf32>
    %286 = arith.subf %285, %279 : vector<8x128xf32>
    %287 = arith.mulf %286, %284 : vector<8x128xf32>
    %288 = arith.mulf %279, %259 : vector<8x128xf32>
    %289 = arith.addf %287, %288 : vector<8x128xf32>
    %c0_112 = arith.constant 0 : index
    %c0_113 = arith.constant 0 : index
    %290 = vector.load %arg11[%c0_112, %c0_113] : memref<8x128xf32, #tpu.memory_space<vmem>>, vector<8x128xf32>
    tpu.vector_store %arg11[%c0_112, %c0_113], %289 {strides = array<i32>} : memref<8x128xf32, #tpu.memory_space<vmem>>, vector<8x128xf32>,
    %c56_114 = arith.constant 56 : index
    %c0_115 = arith.constant 0 : index
    %291 = vector.load %arg10[%c56_114, %c0_115] : memref<64x128xf32, #tpu.memory_space<vmem>>, vector<8x128xf32>
    tpu.vector_store %arg10[%c56_114, %c0_115], %289 {strides = array<i32>} : memref<64x128xf32, #tpu.memory_space<vmem>>, vector<8x128xf32>,
    return
  }
}

</mosaic_0001>

<llo_original>
// kernel: tpu_custom_call.1
$region0: #{tpu_custom_call.1}
  #allocation0 [shape = 'u32[]', space=smem, size = 0x4, offset = 0x4, fixed_abs, tag = 'smem constant byte address 0x4 - core index']
  #allocation1 [shape = 'u32[72,128]{1,0:T(1,128)}', space=vmem, size = 0x9000, scoped, tag = 'internal scratch']
  #allocation2 [shape = 'f32[8,128]{1,0:T(8,128)}', space=vmem, size = 0x1000, scoped, tag = 'scratch operand']
  #allocation3 [shape = 'f32[64,384]{1,0:T(8,128)}', space=vmem, size = 0x18000, scoped, tag = 'scratch operand']
  %s0 = inlined_call_operand.hbm [shape: bf16[8,1024], index: 0, kind: input, shape index: {}]
  %s1 = inlined_call_operand.hbm [shape: bf16[1024,1024], index: 1, kind: input, shape index: {}]
  %s2 = inlined_call_operand.hbm [shape: f32[1,1024], index: 2, kind: input, shape index: {}]
  %s3 = inlined_call_operand.hbm [shape: bf16[1024,128], index: 3, kind: input, shape index: {}]
  %s4 = inlined_call_operand.hbm [shape: f32[1,128], index: 4, kind: input, shape index: {}]
  %s5 = inlined_call_operand.hbm [shape: bf16[64,128], index: 5, kind: input, shape index: {}]
  %s6 = inlined_call_operand.hbm [shape: bf16[128,384], index: 6, kind: input, shape index: {}]
  %s7 = inlined_call_operand.hbm [shape: f32[1,384], index: 7, kind: input, shape index: {}]
  %s8 = inlined_call_operand.hbm [shape: bf16[128,384], index: 8, kind: input, shape index: {}]
  %s9 = inlined_call_operand.hbm [shape: f32[1,384], index: 9, kind: input, shape index: {}]
  %s10 = inlined_call_operand.hbm [shape: f32[64,128], index: 10, kind: output, shape index: {}]
  %s11 = sld [smem:[#allocation0]]
  $region90: #{tpu_custom_call.1} parent=0
    _
  %s13 = ssub.s32 1, %s11
  %s14 = scalar_select 0, %s13, %s11
  $region1: #{tpu_custom_call.1} parent=0
    #allocation4 [shape = 'u8[16384]{0}', space=vmem, size = 0x4000, scoped, tag = 'input window, operand 0, single buffered']
    #allocation5 [shape = 's32[1]{0}', space=sflag, size = 0x4, scoped, tag = 'scoped memory for tpu_custom_call.1']
    #allocation6 [shape = 's32[1]{0}', space=sflag, size = 0x4, scoped, tag = 'scoped memory for tpu_custom_call.1']
    #allocation7 [shape = 'u8[2097152]{0}', space=vmem, size = 0x200000, scoped, tag = 'input window, operand 1, single buffered']
    #allocation8 [shape = 's32[1]{0}', space=sflag, size = 0x4, scoped, tag = 'scoped memory for tpu_custom_call.1']
    #allocation9 [shape = 'u8[4096]{0}', space=vmem, size = 0x1000, scoped, tag = 'input window, operand 2, single buffered']
    #allocation10 [shape = 'u8[262144]{0}', space=vmem, size = 0x40000, scoped, tag = 'input window, operand 3, single buffered']
    #allocation11 [shape = 's32[1]{0}', space=sflag, size = 0x4, scoped, tag = 'scoped memory for tpu_custom_call.1']
    #allocation12 [shape = 'u8[512]{0}', space=vmem, size = 0x400, scoped, tag = 'input window, operand 4, single buffered']
    #allocation13 [shape = 'u8[16384]{0}', space=vmem, size = 0x4000, scoped, tag = 'input window, operand 5, single buffered']
    #allocation14 [shape = 's32[1]{0}', space=sflag, size = 0x4, scoped, tag = 'scoped memory for tpu_custom_call.1']
    #allocation15 [shape = 'u8[98304]{0}', space=vmem, size = 0x18000, scoped, tag = 'input window, operand 6, single buffered']
    #allocation16 [shape = 'u8[1536]{0}', space=vmem, size = 0x800, scoped, tag = 'input window, operand 7, single buffered']
    #allocation17 [shape = 's32[1]{0}', space=sflag, size = 0x4, scoped, tag = 'scoped memory for tpu_custom_call.1']
    #allocation18 [shape = 'u8[98304]{0}', space=vmem, size = 0x18000, scoped, tag = 'input window, operand 8, single buffered']
    #allocation19 [shape = 'u8[1536]{0}', space=vmem, size = 0x800, scoped, tag = 'input window, operand 9, single buffered']
    #allocation20 [shape = 's32[1]{0}', space=sflag, size = 0x4, scoped, tag = 'scoped memory for tpu_custom_call.1']
    #allocation21 [shape = 'u8[32768]{0}', space=vmem, size = 0x8000, scoped, tag = 'output window, operand 0, single buffered']
    %15 = vsyncpa [#allocation5], 0
    %16 = vsyncpa [#allocation8], 0
    %17 = vsyncpa [#allocation11], 0
    %18 = vsyncpa [#allocation14], 0
    %19 = vsyncpa [#allocation17], 0
    %20 = vsyncpa [#allocation20], 0
    %21 = vsyncpa [#allocation6], 0
    // Predicated region
    $region2: #{tpu_custom_call.1} parent=1 // pred_check
      _
    $region3: #{tpu_custom_call.1} parent=1 // pred_check_branch
      %23 = sbr.rel (0) target = $region5
    $region4: #{tpu_custom_call.1} parent=1 // pred_region
      %25 = vsyncadd [#allocation5], 0
      %s27 = sshll.u32 %s0, 4
      %s28 = int_to_ptr.hbm [resolvable:$true] %s27
      %s29 = sshll.u32 [#allocation4], 4
      %s30 = int_to_ptr.vmem [resolvable:$true] %s29
      %32 = dma.hbm_to_vmem [thread:$0]  %s28, 512, %s30, [#allocation5]
    $region5: #{tpu_custom_call.1} parent=1 // pred_fallthru
      _
    // Predicated region
    $region6: #{tpu_custom_call.1} parent=1 // pred_check
      _
    $region7: #{tpu_custom_call.1} parent=1 // pred_check_branch
      %34 = sbr.rel (0) target = $region9
    $region8: #{tpu_custom_call.1} parent=1 // pred_region
      %36 = vsyncadd [#allocation8], 0
      %s37 = sshll.u32 %s1, 4
      %s38 = int_to_ptr.hbm [resolvable:$true] %s37
      %s39 = sshll.u32 [#allocation7], 4
      %s40 = int_to_ptr.vmem [resolvable:$true] %s39
      %45 = dma.hbm_to_vmem [thread:$0]  %s38, 65536, %s40, [#allocation8], 512, 512, 32
    $region9: #{tpu_custom_call.1} parent=1 // pred_fallthru
      _
    // Predicated region
    $region10: #{tpu_custom_call.1} parent=1 // pred_check
      _
    $region11: #{tpu_custom_call.1} parent=1 // pred_check_branch
      %47 = sbr.rel (0) target = $region13
    $region12: #{tpu_custom_call.1} parent=1 // pred_region
      %49 = vsyncadd [#allocation8], 0
      %s51 = sshll.u32 %s2, 4
      %s52 = int_to_ptr.hbm [resolvable:$true] %s51
      %s53 = sshll.u32 [#allocation9], 4
      %s54 = int_to_ptr.vmem [resolvable:$true] %s53
      %56 = dma.hbm_to_vmem [thread:$0]  %s52, 128, %s54, [#allocation8]
    $region13: #{tpu_custom_call.1} parent=1 // pred_fallthru
      _
    // Predicated region
    $region14: #{tpu_custom_call.1} parent=1 // pred_check
      _
    $region15: #{tpu_custom_call.1} parent=1 // pred_check_branch
      %58 = sbr.rel (0) target = $region17
    $region16: #{tpu_custom_call.1} parent=1 // pred_region
      %60 = vsyncadd [#allocation11], 0
      %s61 = sshll.u32 %s3, 4
      %s62 = int_to_ptr.hbm [resolvable:$true] %s61
      %s63 = sshll.u32 [#allocation10], 4
      %s64 = int_to_ptr.vmem [resolvable:$true] %s63
      %69 = dma.hbm_to_vmem [thread:$0]  %s62, 8192, %s64, [#allocation11], 64, 64, 4
    $region17: #{tpu_custom_call.1} parent=1 // pred_fallthru
      _
    // Predicated region
    $region18: #{tpu_custom_call.1} parent=1 // pred_check
      _
    $region19: #{tpu_custom_call.1} parent=1 // pred_check_branch
      %71 = sbr.rel (0) target = $region21
    $region20: #{tpu_custom_call.1} parent=1 // pred_region
      %73 = vsyncadd [#allocation11], 0
      %s75 = sshll.u32 %s4, 4
      %s76 = int_to_ptr.hbm [resolvable:$true] %s75
      %s77 = sshll.u32 [#allocation12], 4
      %s78 = int_to_ptr.vmem [resolvable:$true] %s77
      %80 = dma.hbm_to_vmem [thread:$0]  %s76, 16, %s78, [#allocation11]
    $region21: #{tpu_custom_call.1} parent=1 // pred_fallthru
      _
    // Predicated region
    $region22: #{tpu_custom_call.1} parent=1 // pred_check
      _
    $region23: #{tpu_custom_call.1} parent=1 // pred_check_branch
      %82 = sbr.rel (0) target = $region25
    $region24: #{tpu_custom_call.1} parent=1 // pred_region
      %84 = vsyncadd [#allocation14], 0
      %s85 = sshll.u32 %s5, 4
      %s86 = int_to_ptr.hbm [resolvable:$true] %s85
      %s87 = sshll.u32 [#allocation13], 4
      %s88 = int_to_ptr.vmem [resolvable:$true] %s87
      %93 = dma.hbm_to_vmem [thread:$0]  %s86, 512, %s88, [#allocation14], 64, 64, 4
    $region25: #{tpu_custom_call.1} parent=1 // pred_fallthru
      _
    // Predicated region
    $region26: #{tpu_custom_call.1} parent=1 // pred_check
      _
    $region27: #{tpu_custom_call.1} parent=1 // pred_check_branch
      %95 = sbr.rel (0) target = $region29
    $region28: #{tpu_custom_call.1} parent=1 // pred_region
      %97 = vsyncadd [#allocation14], 0
      %s98 = sshll.u32 %s6, 4
      %s99 = int_to_ptr.hbm [resolvable:$true] %s98
      %s100 = sshll.u32 [#allocation15], 4
      %s101 = int_to_ptr.vmem [resolvable:$true] %s100
      %106 = dma.hbm_to_vmem [thread:$0]  %s99, 3072, %s101, [#allocation14], 192, 192, 12
    $region29: #{tpu_custom_call.1} parent=1 // pred_fallthru
      _
    // Predicated region
    $region30: #{tpu_custom_call.1} parent=1 // pred_check
      _
    $region31: #{tpu_custom_call.1} parent=1 // pred_check_branch
      %108 = sbr.rel (0) target = $region33
    $region32: #{tpu_custom_call.1} parent=1 // pred_region
      %110 = vsyncadd [#allocation17], 0
      %s112 = sshll.u32 %s7, 4
      %s113 = int_to_ptr.hbm [resolvable:$true] %s112
      %s114 = sshll.u32 [#allocation16], 4
      %s115 = int_to_ptr.vmem [resolvable:$true] %s114
      %117 = dma.hbm_to_vmem [thread:$0]  %s113, 48, %s115, [#allocation17]
    $region33: #{tpu_custom_call.1} parent=1 // pred_fallthru
      _
    // Predicated region
    $region34: #{tpu_custom_call.1} parent=1 // pred_check
      _
    $region35: #{tpu_custom_call.1} parent=1 // pred_check_branch
      %119 = sbr.rel (0) target = $region37
    $region36: #{tpu_custom_call.1} parent=1 // pred_region
      %121 = vsyncadd [#allocation17], 0
      %s122 = sshll.u32 %s8, 4
      %s123 = int_to_ptr.hbm [resolvable:$true] %s122
      %s124 = sshll.u32 [#allocation18], 4
      %s125 = int_to_ptr.vmem [resolvable:$true] %s124
      %130 = dma.hbm_to_vmem [thread:$0]  %s123, 3072, %s125, [#allocation17], 192, 192, 12
    $region37: #{tpu_custom_call.1} parent=1 // pred_fallthru
      _
    // Predicated region
    $region38: #{tpu_custom_call.1} parent=1 // pred_check
      _
    $region39: #{tpu_custom_call.1} parent=1 // pred_check_branch
      %132 = sbr.rel (0) target = $region41
    $region40: #{tpu_custom_call.1} parent=1 // pred_region
      %134 = vsyncadd [#allocation20], 0
      %s136 = sshll.u32 %s9, 4
      %s137 = int_to_ptr.hbm [resolvable:$true] %s136
      %s138 = sshll.u32 [#allocation19], 4
      %s139 = int_to_ptr.vmem [resolvable:$true] %s138
      %141 = dma.hbm_to_vmem [thread:$0]  %s137, 48, %s139, [#allocation20]
    $region41: #{tpu_custom_call.1} parent=1 // pred_fallthru
      _
    // Predicated region
    $region42: #{tpu_custom_call.1} parent=1 // pred_check
      _
    $region43: #{tpu_custom_call.1} parent=1 // pred_check_branch
      %143 = sbr.rel (0) target = $region45
    $region44: #{tpu_custom_call.1} parent=1 // pred_region
      %145 = dma.done [#allocation5], 512
    $region45: #{tpu_custom_call.1} parent=1 // pred_fallthru
      _
    // Predicated region
    $region46: #{tpu_custom_call.1} parent=1 // pred_check
      _
    $region47: #{tpu_custom_call.1} parent=1 // pred_check_branch
      %147 = sbr.rel (0) target = $region49
    $region48: #{tpu_custom_call.1} parent=1 // pred_region
      %149 = dma.done [#allocation8], 65536
    $region49: #{tpu_custom_call.1} parent=1 // pred_fallthru
      _
    // Predicated region
    $region50: #{tpu_custom_call.1} parent=1 // pred_check
      _
    $region51: #{tpu_custom_call.1} parent=1 // pred_check_branch
      %151 = sbr.rel (0) target = $region53
    $region52: #{tpu_custom_call.1} parent=1 // pred_region
      %153 = dma.done [#allocation8], 128
    $region53: #{tpu_custom_call.1} parent=1 // pred_fallthru
      _
    // Predicated region
    $region54: #{tpu_custom_call.1} parent=1 // pred_check
      _
    $region55: #{tpu_custom_call.1} parent=1 // pred_check_branch
      %155 = sbr.rel (0) target = $region57
    $region56: #{tpu_custom_call.1} parent=1 // pred_region
      %157 = dma.done [#allocation11], 8192
    $region57: #{tpu_custom_call.1} parent=1 // pred_fallthru
      _
    // Predicated region
    $region58: #{tpu_custom_call.1} parent=1 // pred_check
      _
    $region59: #{tpu_custom_call.1} parent=1 // pred_check_branch
      %159 = sbr.rel (0) target = $region61
    $region60: #{tpu_custom_call.1} parent=1 // pred_region
      %161 = dma.done [#allocation11], 16
    $region61: #{tpu_custom_call.1} parent=1 // pred_fallthru
      _
    // Predicated region
    $region62: #{tpu_custom_call.1} parent=1 // pred_check
      _
    $region63: #{tpu_custom_call.1} parent=1 // pred_check_branch
      %163 = sbr.rel (0) target = $region65
    $region64: #{tpu_custom_call.1} parent=1 // pred_region
      %165 = dma.done [#allocation14], 512
    $region65: #{tpu_custom_call.1} parent=1 // pred_fallthru
      _
    // Predicated region
    $region66: #{tpu_custom_call.1} parent=1 // pred_check
      _
    $region67: #{tpu_custom_call.1} parent=1 // pred_check_branch
      %167 = sbr.rel (0) target = $region69
    $region68: #{tpu_custom_call.1} parent=1 // pred_region
      %169 = dma.done [#allocation14], 3072
    $region69: #{tpu_custom_call.1} parent=1 // pred_fallthru
      _
    // Predicated region
    $region70: #{tpu_custom_call.1} parent=1 // pred_check
      _
    $region71: #{tpu_custom_call.1} parent=1 // pred_check_branch
      %171 = sbr.rel (0) target = $region73
    $region72: #{tpu_custom_call.1} parent=1 // pred_region
      %173 = dma.done [#allocation17], 48
    $region73: #{tpu_custom_call.1} parent=1 // pred_fallthru
      _
    // Predicated region
    $region74: #{tpu_custom_call.1} parent=1 // pred_check
      _
    $region75: #{tpu_custom_call.1} parent=1 // pred_check_branch
      %175 = sbr.rel (0) target = $region77
    $region76: #{tpu_custom_call.1} parent=1 // pred_region
      %177 = dma.done [#allocation17], 3072
    $region77: #{tpu_custom_call.1} parent=1 // pred_fallthru
      _
    // Predicated region
    $region78: #{tpu_custom_call.1} parent=1 // pred_check
      _
    $region79: #{tpu_custom_call.1} parent=1 // pred_check_branch
      %179 = sbr.rel (0) target = $region81
    $region80: #{tpu_custom_call.1} parent=1 // pred_region
      %181 = dma.done [#allocation20], 48
    $region81: #{tpu_custom_call.1} parent=1 // pred_fallthru
      _
    %v182 = vld [vmem:[#allocation4] sm:$0xff]
    %v183 = vld [vmem:[#allocation4 + $0x8] sm:$0xff]
    %v184 = vld [vmem:[#allocation4 + $0x10] sm:$0xff]
    %v185 = vld [vmem:[#allocation4 + $0x18] sm:$0xff]
    %v186 = vld [vmem:[#allocation7] sm:$0xff]
    %v187 = vld [vmem:[#allocation7 + $0x8] sm:$0xff]
    %v188 = vld [vmem:[#allocation7 + $0x10] sm:$0xff]
    %v189 = vld [vmem:[#allocation7 + $0x18] sm:$0xff]
    %v190 = vld [vmem:[#allocation7 + $0x20] sm:$0xff]
    %v191 = vld [vmem:[#allocation7 + $0x28] sm:$0xff]
    %v192 = vld [vmem:[#allocation7 + $0x30] sm:$0xff]
    %v193 = vld [vmem:[#allocation7 + $0x38] sm:$0xff]
    %v194 = vld [vmem:[#allocation7 + $0x40] sm:$0xff]
    %v195 = vld [vmem:[#allocation7 + $0x48] sm:$0xff]
    %v196 = vld [vmem:[#allocation7 + $0x50] sm:$0xff]
    %v197 = vld [vmem:[#allocation7 + $0x58] sm:$0xff]
    %v198 = vld [vmem:[#allocation7 + $0x60] sm:$0xff]
    %v199 = vld [vmem:[#allocation7 + $0x68] sm:$0xff]
    %v200 = vld [vmem:[#allocation7 + $0x70] sm:$0xff]
    %v201 = vld [vmem:[#allocation7 + $0x78] sm:$0xff]
    %v202 = vld [vmem:[#allocation7 + $0x80] sm:$0xff]
    %v203 = vld [vmem:[#allocation7 + $0x88] sm:$0xff]
    %v204 = vld [vmem:[#allocation7 + $0x90] sm:$0xff]
    %v205 = vld [vmem:[#allocation7 + $0x98] sm:$0xff]
    %v206 = vld [vmem:[#allocation7 + $0xa0] sm:$0xff]
    %v207 = vld [vmem:[#allocation7 + $0xa8] sm:$0xff]
    %v208 = vld [vmem:[#allocation7 + $0xb0] sm:$0xff]
    %v209 = vld [vmem:[#allocation7 + $0xb8] sm:$0xff]
    %v210 = vld [vmem:[#allocation7 + $0xc0] sm:$0xff]
    %v211 = vld [vmem:[#allocation7 + $0xc8] sm:$0xff]
    %v212 = vld [vmem:[#allocation7 + $0xd0] sm:$0xff]
    %v213 = vld [vmem:[#allocation7 + $0xd8] sm:$0xff]
    %v214 = vld [vmem:[#allocation7 + $0xe0] sm:$0xff]
    %v215 = vld [vmem:[#allocation7 + $0xe8] sm:$0xff]
    %v216 = vld [vmem:[#allocation7 + $0xf0] sm:$0xff]
    %v217 = vld [vmem:[#allocation7 + $0xf8] sm:$0xff]
    %v218 = vld [vmem:[#allocation7 + $0x100] sm:$0xff]
    %v219 = vld [vmem:[#allocation7 + $0x108] sm:$0xff]
    %v220 = vld [vmem:[#allocation7 + $0x110] sm:$0xff]
    %v221 = vld [vmem:[#allocation7 + $0x118] sm:$0xff]
    %v222 = vld [vmem:[#allocation7 + $0x120] sm:$0xff]
    %v223 = vld [vmem:[#allocation7 + $0x128] sm:$0xff]
    %v224 = vld [vmem:[#allocation7 + $0x130] sm:$0xff]
    %v225 = vld [vmem:[#allocation7 + $0x138] sm:$0xff]
    %v226 = vld [vmem:[#allocation7 + $0x140] sm:$0xff]
    %v227 = vld [vmem:[#allocation7 + $0x148] sm:$0xff]
    %v228 = vld [vmem:[#allocation7 + $0x150] sm:$0xff]
    %v229 = vld [vmem:[#allocation7 + $0x158] sm:$0xff]
    %v230 = vld [vmem:[#allocation7 + $0x160] sm:$0xff]
    %v231 = vld [vmem:[#allocation7 + $0x168] sm:$0xff]
    %v232 = vld [vmem:[#allocation7 + $0x170] sm:$0xff]
    %v233 = vld [vmem:[#allocation7 + $0x178] sm:$0xff]
    %v234 = vld [vmem:[#allocation7 + $0x180] sm:$0xff]
    %v235 = vld [vmem:[#allocation7 + $0x188] sm:$0xff]
    %v236 = vld [vmem:[#allocation7 + $0x190] sm:$0xff]
    %v237 = vld [vmem:[#allocation7 + $0x198] sm:$0xff]
    %v238 = vld [vmem:[#allocation7 + $0x1a0] sm:$0xff]
    %v239 = vld [vmem:[#allocation7 + $0x1a8] sm:$0xff]
    %v240 = vld [vmem:[#allocation7 + $0x1b0] sm:$0xff]
    %v241 = vld [vmem:[#allocation7 + $0x1b8] sm:$0xff]
    %v242 = vld [vmem:[#allocation7 + $0x1c0] sm:$0xff]
    %v243 = vld [vmem:[#allocation7 + $0x1c8] sm:$0xff]
    %v244 = vld [vmem:[#allocation7 + $0x1d0] sm:$0xff]
    %v245 = vld [vmem:[#allocation7 + $0x1d8] sm:$0xff]
    %v246 = vld [vmem:[#allocation7 + $0x1e0] sm:$0xff]
    %v247 = vld [vmem:[#allocation7 + $0x1e8] sm:$0xff]
    %v248 = vld [vmem:[#allocation7 + $0x1f0] sm:$0xff]
    %v249 = vld [vmem:[#allocation7 + $0x1f8] sm:$0xff]
    %v250 = vld [vmem:[#allocation7 + $0x200] sm:$0xff]
    %v251 = vld [vmem:[#allocation7 + $0x208] sm:$0xff]
    %v252 = vld [vmem:[#allocation7 + $0x210] sm:$0xff]
    %v253 = vld [vmem:[#allocation7 + $0x218] sm:$0xff]
    %v254 = vld [vmem:[#allocation7 + $0x220] sm:$0xff]
    %v255 = vld [vmem:[#allocation7 + $0x228] sm:$0xff]
    %v256 = vld [vmem:[#allocation7 + $0x230] sm:$0xff]
    %v257 = vld [vmem:[#allocation7 + $0x238] sm:$0xff]
    %v258 = vld [vmem:[#allocation7 + $0x240] sm:$0xff]
    %v259 = vld [vmem:[#allocation7 + $0x248] sm:$0xff]
    %v260 = vld [vmem:[#allocation7 + $0x250] sm:$0xff]
    %v261 = vld [vmem:[#allocation7 + $0x258] sm:$0xff]
    %v262 = vld [vmem:[#allocation7 + $0x260] sm:$0xff]
    %v263 = vld [vmem:[#allocation7 + $0x268] sm:$0xff]
    %v264 = vld [vmem:[#allocation7 + $0x270] sm:$0xff]
    %v265 = vld [vmem:[#allocation7 + $0x278] sm:$0xff]
    %v266 = vld [vmem:[#allocation7 + $0x280] sm:$0xff]
    %v267 = vld [vmem:[#allocation7 + $0x288] sm:$0xff]
    %v268 = vld [vmem:[#allocation7 + $0x290] sm:$0xff]
    %v269 = vld [vmem:[#allocation7 + $0x298] sm:$0xff]
    %v270 = vld [vmem:[#allocation7 + $0x2a0] sm:$0xff]
    %v271 = vld [vmem:[#allocation7 + $0x2a8] sm:$0xff]
    %v272 = vld [vmem:[#allocation7 + $0x2b0] sm:$0xff]
    %v273 = vld [vmem:[#allocation7 + $0x2b8] sm:$0xff]
    %v274 = vld [vmem:[#allocation7 + $0x2c0] sm:$0xff]
    %v275 = vld [vmem:[#allocation7 + $0x2c8] sm:$0xff]
    %v276 = vld [vmem:[#allocation7 + $0x2d0] sm:$0xff]
    %v277 = vld [vmem:[#allocation7 + $0x2d8] sm:$0xff]
    %v278 = vld [vmem:[#allocation7 + $0x2e0] sm:$0xff]
    %v279 = vld [vmem:[#allocation7 + $0x2e8] sm:$0xff]
    %v280 = vld [vmem:[#allocation7 + $0x2f0] sm:$0xff]
    %v281 = vld [vmem:[#allocation7 + $0x2f8] sm:$0xff]
    %v282 = vld [vmem:[#allocation7 + $0x300] sm:$0xff]
    %v283 = vld [vmem:[#allocation7 + $0x308] sm:$0xff]
    %v284 = vld [vmem:[#allocation7 + $0x310] sm:$0xff]
    %v285 = vld [vmem:[#allocation7 + $0x318] sm:$0xff]
    %v286 = vld [vmem:[#allocation7 + $0x320] sm:$0xff]
    %v287 = vld [vmem:[#allocation7 + $0x328] sm:$0xff]
    %v288 = vld [vmem:[#allocation7 + $0x330] sm:$0xff]
    %v289 = vld [vmem:[#allocation7 + $0x338] sm:$0xff]
    %v290 = vld [vmem:[#allocation7 + $0x340] sm:$0xff]
    %v291 = vld [vmem:[#allocation7 + $0x348] sm:$0xff]
    %v292 = vld [vmem:[#allocation7 + $0x350] sm:$0xff]
    %v293 = vld [vmem:[#allocation7 + $0x358] sm:$0xff]
    %v294 = vld [vmem:[#allocation7 + $0x360] sm:$0xff]
    %v295 = vld [vmem:[#allocation7 + $0x368] sm:$0xff]
    %v296 = vld [vmem:[#allocation7 + $0x370] sm:$0xff]
    %v297 = vld [vmem:[#allocation7 + $0x378] sm:$0xff]
    %v298 = vld [vmem:[#allocation7 + $0x380] sm:$0xff]
    %v299 = vld [vmem:[#allocation7 + $0x388] sm:$0xff]
    %v300 = vld [vmem:[#allocation7 + $0x390] sm:$0xff]
    %v301 = vld [vmem:[#allocation7 + $0x398] sm:$0xff]
    %v302 = vld [vmem:[#allocation7 + $0x3a0] sm:$0xff]
    %v303 = vld [vmem:[#allocation7 + $0x3a8] sm:$0xff]
    %v304 = vld [vmem:[#allocation7 + $0x3b0] sm:$0xff]
    %v305 = vld [vmem:[#allocation7 + $0x3b8] sm:$0xff]
    %v306 = vld [vmem:[#allocation7 + $0x3c0] sm:$0xff]
    %v307 = vld [vmem:[#allocation7 + $0x3c8] sm:$0xff]
    %v308 = vld [vmem:[#allocation7 + $0x3d0] sm:$0xff]
    %v309 = vld [vmem:[#allocation7 + $0x3d8] sm:$0xff]
    %v310 = vld [vmem:[#allocation7 + $0x3e0] sm:$0xff]
    %v311 = vld [vmem:[#allocation7 + $0x3e8] sm:$0xff]
    %v312 = vld [vmem:[#allocation7 + $0x3f0] sm:$0xff]
    %v313 = vld [vmem:[#allocation7 + $0x3f8] sm:$0xff]
    %v314 = vld [vmem:[#allocation7 + $0x400] sm:$0xff]
    %v315 = vld [vmem:[#allocation7 + $0x408] sm:$0xff]
    %v316 = vld [vmem:[#allocation7 + $0x410] sm:$0xff]
    %v317 = vld [vmem:[#allocation7 + $0x418] sm:$0xff]
    %v318 = vld [vmem:[#allocation7 + $0x420] sm:$0xff]
    %v319 = vld [vmem:[#allocation7 + $0x428] sm:$0xff]
    %v320 = vld [vmem:[#allocation7 + $0x430] sm:$0xff]
    %v321 = vld [vmem:[#allocation7 + $0x438] sm:$0xff]
    %v322 = vld [vmem:[#allocation7 + $0x440] sm:$0xff]
    %v323 = vld [vmem:[#allocation7 + $0x448] sm:$0xff]
    %v324 = vld [vmem:[#allocation7 + $0x450] sm:$0xff]
    %v325 = vld [vmem:[#allocation7 + $0x458] sm:$0xff]
    %v326 = vld [vmem:[#allocation7 + $0x460] sm:$0xff]
    %v327 = vld [vmem:[#allocation7 + $0x468] sm:$0xff]
    %v328 = vld [vmem:[#allocation7 + $0x470] sm:$0xff]
    %v329 = vld [vmem:[#allocation7 + $0x478] sm:$0xff]
    %v330 = vld [vmem:[#allocation7 + $0x480] sm:$0xff]
    %v331 = vld [vmem:[#allocation7 + $0x488] sm:$0xff]
    %v332 = vld [vmem:[#allocation7 + $0x490] sm:$0xff]
    %v333 = vld [vmem:[#allocation7 + $0x498] sm:$0xff]
    %v334 = vld [vmem:[#allocation7 + $0x4a0] sm:$0xff]
    %v335 = vld [vmem:[#allocation7 + $0x4a8] sm:$0xff]
    %v336 = vld [vmem:[#allocation7 + $0x4b0] sm:$0xff]
    %v337 = vld [vmem:[#allocation7 + $0x4b8] sm:$0xff]
    %v338 = vld [vmem:[#allocation7 + $0x4c0] sm:$0xff]
    %v339 = vld [vmem:[#allocation7 + $0x4c8] sm:$0xff]
    %v340 = vld [vmem:[#allocation7 + $0x4d0] sm:$0xff]
    %v341 = vld [vmem:[#allocation7 + $0x4d8] sm:$0xff]
    %v342 = vld [vmem:[#allocation7 + $0x4e0] sm:$0xff]
    %v343 = vld [vmem:[#allocation7 + $0x4e8] sm:$0xff]
    %v344 = vld [vmem:[#allocation7 + $0x4f0] sm:$0xff]
    %v345 = vld [vmem:[#allocation7 + $0x4f8] sm:$0xff]
    %v346 = vld [vmem:[#allocation7 + $0x500] sm:$0xff]
    %v347 = vld [vmem:[#allocation7 + $0x508] sm:$0xff]
    %v348 = vld [vmem:[#allocation7 + $0x510] sm:$0xff]
    %v349 = vld [vmem:[#allocation7 + $0x518] sm:$0xff]
    %v350 = vld [vmem:[#allocation7 + $0x520] sm:$0xff]
    %v351 = vld [vmem:[#allocation7 + $0x528] sm:$0xff]
    %v352 = vld [vmem:[#allocation7 + $0x530] sm:$0xff]
    %v353 = vld [vmem:[#allocation7 + $0x538] sm:$0xff]
    %v354 = vld [vmem:[#allocation7 + $0x540] sm:$0xff]
    %v355 = vld [vmem:[#allocation7 + $0x548] sm:$0xff]
    %v356 = vld [vmem:[#allocation7 + $0x550] sm:$0xff]
    %v357 = vld [vmem:[#allocation7 + $0x558] sm:$0xff]
    %v358 = vld [vmem:[#allocation7 + $0x560] sm:$0xff]
    %v359 = vld [vmem:[#allocation7 + $0x568] sm:$0xff]
    %v360 = vld [vmem:[#allocation7 + $0x570] sm:$0xff]
    %v361 = vld [vmem:[#allocation7 + $0x578] sm:$0xff]
    %v362 = vld [vmem:[#allocation7 + $0x580] sm:$0xff]
    %v363 = vld [vmem:[#allocation7 + $0x588] sm:$0xff]
    %v364 = vld [vmem:[#allocation7 + $0x590] sm:$0xff]
    %v365 = vld [vmem:[#allocation7 + $0x598] sm:$0xff]
    %v366 = vld [vmem:[#allocation7 + $0x5a0] sm:$0xff]
    %v367 = vld [vmem:[#allocation7 + $0x5a8] sm:$0xff]
    %v368 = vld [vmem:[#allocation7 + $0x5b0] sm:$0xff]
    %v369 = vld [vmem:[#allocation7 + $0x5b8] sm:$0xff]
    %v370 = vld [vmem:[#allocation7 + $0x5c0] sm:$0xff]
    %v371 = vld [vmem:[#allocation7 + $0x5c8] sm:$0xff]
    %v372 = vld [vmem:[#allocation7 + $0x5d0] sm:$0xff]
    %v373 = vld [vmem:[#allocation7 + $0x5d8] sm:$0xff]
    %v374 = vld [vmem:[#allocation7 + $0x5e0] sm:$0xff]
    %v375 = vld [vmem:[#allocation7 + $0x5e8] sm:$0xff]
    %v376 = vld [vmem:[#allocation7 + $0x5f0] sm:$0xff]
    %v377 = vld [vmem:[#allocation7 + $0x5f8] sm:$0xff]
    %v378 = vld [vmem:[#allocation7 + $0x600] sm:$0xff]
    %v379 = vld [vmem:[#allocation7 + $0x608] sm:$0xff]
    %v380 = vld [vmem:[#allocation7 + $0x610] sm:$0xff]
    %v381 = vld [vmem:[#allocation7 + $0x618] sm:$0xff]
    %v382 = vld [vmem:[#allocation7 + $0x620] sm:$0xff]
    %v383 = vld [vmem:[#allocation7 + $0x628] sm:$0xff]
    %v384 = vld [vmem:[#allocation7 + $0x630] sm:$0xff]
    %v385 = vld [vmem:[#allocation7 + $0x638] sm:$0xff]
    %v386 = vld [vmem:[#allocation7 + $0x640] sm:$0xff]
    %v387 = vld [vmem:[#allocation7 + $0x648] sm:$0xff]
    %v388 = vld [vmem:[#allocation7 + $0x650] sm:$0xff]
    %v389 = vld [vmem:[#allocation7 + $0x658] sm:$0xff]
    %v390 = vld [vmem:[#allocation7 + $0x660] sm:$0xff]
    %v391 = vld [vmem:[#allocation7 + $0x668] sm:$0xff]
    %v392 = vld [vmem:[#allocation7 + $0x670] sm:$0xff]
    %v393 = vld [vmem:[#allocation7 + $0x678] sm:$0xff]
    %v394 = vld [vmem:[#allocation7 + $0x680] sm:$0xff]
    %v395 = vld [vmem:[#allocation7 + $0x688] sm:$0xff]
    %v396 = vld [vmem:[#allocation7 + $0x690] sm:$0xff]
    %v397 = vld [vmem:[#allocation7 + $0x698] sm:$0xff]
    %v398 = vld [vmem:[#allocation7 + $0x6a0] sm:$0xff]
    %v399 = vld [vmem:[#allocation7 + $0x6a8] sm:$0xff]
    %v400 = vld [vmem:[#allocation7 + $0x6b0] sm:$0xff]
    %v401 = vld [vmem:[#allocation7 + $0x6b8] sm:$0xff]
    %v402 = vld [vmem:[#allocation7 + $0x6c0] sm:$0xff]
    %v403 = vld [vmem:[#allocation7 + $0x6c8] sm:$0xff]
    %v404 = vld [vmem:[#allocation7 + $0x6d0] sm:$0xff]
    %v405 = vld [vmem:[#allocation7 + $0x6d8] sm:$0xff]
    %v406 = vld [vmem:[#allocation7 + $0x6e0] sm:$0xff]
    %v407 = vld [vmem:[#allocation7 + $0x6e8] sm:$0xff]
    %v408 = vld [vmem:[#allocation7 + $0x6f0] sm:$0xff]
    %v409 = vld [vmem:[#allocation7 + $0x6f8] sm:$0xff]
    %v410 = vld [vmem:[#allocation7 + $0x700] sm:$0xff]
    %v411 = vld [vmem:[#allocation7 + $0x708] sm:$0xff]
    %v412 = vld [vmem:[#allocation7 + $0x710] sm:$0xff]
    %v413 = vld [vmem:[#allocation7 + $0x718] sm:$0xff]
    %v414 = vld [vmem:[#allocation7 + $0x720] sm:$0xff]
    %v415 = vld [vmem:[#allocation7 + $0x728] sm:$0xff]
    %v416 = vld [vmem:[#allocation7 + $0x730] sm:$0xff]
    %v417 = vld [vmem:[#allocation7 + $0x738] sm:$0xff]
    %v418 = vld [vmem:[#allocation7 + $0x740] sm:$0xff]
    %v419 = vld [vmem:[#allocation7 + $0x748] sm:$0xff]
    %v420 = vld [vmem:[#allocation7 + $0x750] sm:$0xff]
    %v421 = vld [vmem:[#allocation7 + $0x758] sm:$0xff]
    %v422 = vld [vmem:[#allocation7 + $0x760] sm:$0xff]
    %v423 = vld [vmem:[#allocation7 + $0x768] sm:$0xff]
    %v424 = vld [vmem:[#allocation7 + $0x770] sm:$0xff]
    %v425 = vld [vmem:[#allocation7 + $0x778] sm:$0xff]
    %v426 = vld [vmem:[#allocation7 + $0x780] sm:$0xff]
    %v427 = vld [vmem:[#allocation7 + $0x788] sm:$0xff]
    %v428 = vld [vmem:[#allocation7 + $0x790] sm:$0xff]
    %v429 = vld [vmem:[#allocation7 + $0x798] sm:$0xff]
    %v430 = vld [vmem:[#allocation7 + $0x7a0] sm:$0xff]
    %v431 = vld [vmem:[#allocation7 + $0x7a8] sm:$0xff]
    %v432 = vld [vmem:[#allocation7 + $0x7b0] sm:$0xff]
    %v433 = vld [vmem:[#allocation7 + $0x7b8] sm:$0xff]
    %v434 = vld [vmem:[#allocation7 + $0x7c0] sm:$0xff]
    %v435 = vld [vmem:[#allocation7 + $0x7c8] sm:$0xff]
    %v436 = vld [vmem:[#allocation7 + $0x7d0] sm:$0xff]
    %v437 = vld [vmem:[#allocation7 + $0x7d8] sm:$0xff]
    %v438 = vld [vmem:[#allocation7 + $0x7e0] sm:$0xff]
    %v439 = vld [vmem:[#allocation7 + $0x7e8] sm:$0xff]
    %v440 = vld [vmem:[#allocation7 + $0x7f0] sm:$0xff]
    %v441 = vld [vmem:[#allocation7 + $0x7f8] sm:$0xff]
    %v442 = vld [vmem:[#allocation7 + $0x800] sm:$0xff]
    %v443 = vld [vmem:[#allocation7 + $0x808] sm:$0xff]
    %v444 = vld [vmem:[#allocation7 + $0x810] sm:$0xff]
    %v445 = vld [vmem:[#allocation7 + $0x818] sm:$0xff]
    %v446 = vld [vmem:[#allocation7 + $0x820] sm:$0xff]
    %v447 = vld [vmem:[#allocation7 + $0x828] sm:$0xff]
    %v448 = vld [vmem:[#allocation7 + $0x830] sm:$0xff]
    %v449 = vld [vmem:[#allocation7 + $0x838] sm:$0xff]
    %v450 = vld [vmem:[#allocation7 + $0x840] sm:$0xff]
    %v451 = vld [vmem:[#allocation7 + $0x848] sm:$0xff]
    %v452 = vld [vmem:[#allocation7 + $0x850] sm:$0xff]
    %v453 = vld [vmem:[#allocation7 + $0x858] sm:$0xff]
    %v454 = vld [vmem:[#allocation7 + $0x860] sm:$0xff]
    %v455 = vld [vmem:[#allocation7 + $0x868] sm:$0xff]
    %v456 = vld [vmem:[#allocation7 + $0x870] sm:$0xff]
    %v457 = vld [vmem:[#allocation7 + $0x878] sm:$0xff]
    %v458 = vld [vmem:[#allocation7 + $0x880] sm:$0xff]
    %v459 = vld [vmem:[#allocation7 + $0x888] sm:$0xff]
    %v460 = vld [vmem:[#allocation7 + $0x890] sm:$0xff]
    %v461 = vld [vmem:[#allocation7 + $0x898] sm:$0xff]
    %v462 = vld [vmem:[#allocation7 + $0x8a0] sm:$0xff]
    %v463 = vld [vmem:[#allocation7 + $0x8a8] sm:$0xff]
    %v464 = vld [vmem:[#allocation7 + $0x8b0] sm:$0xff]
    %v465 = vld [vmem:[#allocation7 + $0x8b8] sm:$0xff]
    %v466 = vld [vmem:[#allocation7 + $0x8c0] sm:$0xff]
    %v467 = vld [vmem:[#allocation7 + $0x8c8] sm:$0xff]
    %v468 = vld [vmem:[#allocation7 + $0x8d0] sm:$0xff]
    %v469 = vld [vmem:[#allocation7 + $0x8d8] sm:$0xff]
    %v470 = vld [vmem:[#allocation7 + $0x8e0] sm:$0xff]
    %v471 = vld [vmem:[#allocation7 + $0x8e8] sm:$0xff]
    %v472 = vld [vmem:[#allocation7 + $0x8f0] sm:$0xff]
    %v473 = vld [vmem:[#allocation7 + $0x8f8] sm:$0xff]
    %v474 = vld [vmem:[#allocation7 + $0x900] sm:$0xff]
    %v475 = vld [vmem:[#allocation7 + $0x908] sm:$0xff]
    %v476 = vld [vmem:[#allocation7 + $0x910] sm:$0xff]
    %v477 = vld [vmem:[#allocation7 + $0x918] sm:$0xff]
    %v478 = vld [vmem:[#allocation7 + $0x920] sm:$0xff]
    %v479 = vld [vmem:[#allocation7 + $0x928] sm:$0xff]
    %v480 = vld [vmem:[#allocation7 + $0x930] sm:$0xff]
    %v481 = vld [vmem:[#allocation7 + $0x938] sm:$0xff]
    %v482 = vld [vmem:[#allocation7 + $0x940] sm:$0xff]
    %v483 = vld [vmem:[#allocation7 + $0x948] sm:$0xff]
    %v484 = vld [vmem:[#allocation7 + $0x950] sm:$0xff]
    %v485 = vld [vmem:[#allocation7 + $0x958] sm:$0xff]
    %v486 = vld [vmem:[#allocation7 + $0x960] sm:$0xff]
    %v487 = vld [vmem:[#allocation7 + $0x968] sm:$0xff]
    %v488 = vld [vmem:[#allocation7 + $0x970] sm:$0xff]
    %v489 = vld [vmem:[#allocation7 + $0x978] sm:$0xff]
    %v490 = vld [vmem:[#allocation7 + $0x980] sm:$0xff]
    %v491 = vld [vmem:[#allocation7 + $0x988] sm:$0xff]
    %v492 = vld [vmem:[#allocation7 + $0x990] sm:$0xff]
    %v493 = vld [vmem:[#allocation7 + $0x998] sm:$0xff]
    %v494 = vld [vmem:[#allocation7 + $0x9a0] sm:$0xff]
    %v495 = vld [vmem:[#allocation7 + $0x9a8] sm:$0xff]
    %v496 = vld [vmem:[#allocation7 + $0x9b0] sm:$0xff]
    %v497 = vld [vmem:[#allocation7 + $0x9b8] sm:$0xff]
    %v498 = vld [vmem:[#allocation7 + $0x9c0] sm:$0xff]
    %v499 = vld [vmem:[#allocation7 + $0x9c8] sm:$0xff]
    %v500 = vld [vmem:[#allocation7 + $0x9d0] sm:$0xff]
    %v501 = vld [vmem:[#allocation7 + $0x9d8] sm:$0xff]
    %v502 = vld [vmem:[#allocation7 + $0x9e0] sm:$0xff]
    %v503 = vld [vmem:[#allocation7 + $0x9e8] sm:$0xff]
    %v504 = vld [vmem:[#allocation7 + $0x9f0] sm:$0xff]
    %v505 = vld [vmem:[#allocation7 + $0x9f8] sm:$0xff]
    %v506 = vld [vmem:[#allocation7 + $0xa00] sm:$0xff]
    %v507 = vld [vmem:[#allocation7 + $0xa08] sm:$0xff]
    %v508 = vld [vmem:[#allocation7 + $0xa10] sm:$0xff]
    %v509 = vld [vmem:[#allocation7 + $0xa18] sm:$0xff]
    %v510 = vld [vmem:[#allocation7 + $0xa20] sm:$0xff]
    %v511 = vld [vmem:[#allocation7 + $0xa28] sm:$0xff]
    %v512 = vld [vmem:[#allocation7 + $0xa30] sm:$0xff]
    %v513 = vld [vmem:[#allocation7 + $0xa38] sm:$0xff]
    %v514 = vld [vmem:[#allocation7 + $0xa40] sm:$0xff]
    %v515 = vld [vmem:[#allocation7 + $0xa48] sm:$0xff]
    %v516 = vld [vmem:[#allocation7 + $0xa50] sm:$0xff]
    %v517 = vld [vmem:[#allocation7 + $0xa58] sm:$0xff]
    %v518 = vld [vmem:[#allocation7 + $0xa60] sm:$0xff]
    %v519 = vld [vmem:[#allocation7 + $0xa68] sm:$0xff]
    %v520 = vld [vmem:[#allocation7 + $0xa70] sm:$0xff]
    %v521 = vld [vmem:[#allocation7 + $0xa78] sm:$0xff]
    %v522 = vld [vmem:[#allocation7 + $0xa80] sm:$0xff]
    %v523 = vld [vmem:[#allocation7 + $0xa88] sm:$0xff]
    %v524 = vld [vmem:[#allocation7 + $0xa90] sm:$0xff]
    %v525 = vld [vmem:[#allocation7 + $0xa98] sm:$0xff]
    %v526 = vld [vmem:[#allocation7 + $0xaa0] sm:$0xff]
    %v527 = vld [vmem:[#allocation7 + $0xaa8] sm:$0xff]
    %v528 = vld [vmem:[#allocation7 + $0xab0] sm:$0xff]
    %v529 = vld [vmem:[#allocation7 + $0xab8] sm:$0xff]
    %v530 = vld [vmem:[#allocation7 + $0xac0] sm:$0xff]
    %v531 = vld [vmem:[#allocation7 + $0xac8] sm:$0xff]
    %v532 = vld [vmem:[#allocation7 + $0xad0] sm:$0xff]
    %v533 = vld [vmem:[#allocation7 + $0xad8] sm:$0xff]
    %v534 = vld [vmem:[#allocation7 + $0xae0] sm:$0xff]
    %v535 = vld [vmem:[#allocation7 + $0xae8] sm:$0xff]
    %v536 = vld [vmem:[#allocation7 + $0xaf0] sm:$0xff]
    %v537 = vld [vmem:[#allocation7 + $0xaf8] sm:$0xff]
    %v538 = vld [vmem:[#allocation7 + $0xb00] sm:$0xff]
    %v539 = vld [vmem:[#allocation7 + $0xb08] sm:$0xff]
    %v540 = vld [vmem:[#allocation7 + $0xb10] sm:$0xff]
    %v541 = vld [vmem:[#allocation7 + $0xb18] sm:$0xff]
    %v542 = vld [vmem:[#allocation7 + $0xb20] sm:$0xff]
    %v543 = vld [vmem:[#allocation7 + $0xb28] sm:$0xff]
    %v544 = vld [vmem:[#allocation7 + $0xb30] sm:$0xff]
    %v545 = vld [vmem:[#allocation7 + $0xb38] sm:$0xff]
    %v546 = vld [vmem:[#allocation7 + $0xb40] sm:$0xff]
    %v547 = vld [vmem:[#allocation7 + $0xb48] sm:$0xff]
    %v548 = vld [vmem:[#allocation7 + $0xb50] sm:$0xff]
    %v549 = vld [vmem:[#allocation7 + $0xb58] sm:$0xff]
    %v550 = vld [vmem:[#allocation7 + $0xb60] sm:$0xff]
    %v551 = vld [vmem:[#allocation7 + $0xb68] sm:$0xff]
    %v552 = vld [vmem:[#allocation7 + $0xb70] sm:$0xff]
    %v553 = vld [vmem:[#allocation7 + $0xb78] sm:$0xff]
    %v554 = vld [vmem:[#allocation7 + $0xb80] sm:$0xff]
    %v555 = vld [vmem:[#allocation7 + $0xb88] sm:$0xff]
    %v556 = vld [vmem:[#allocation7 + $0xb90] sm:$0xff]
    %v557 = vld [vmem:[#allocation7 + $0xb98] sm:$0xff]
    %v558 = vld [vmem:[#allocation7 + $0xba0] sm:$0xff]
    %v559 = vld [vmem:[#allocation7 + $0xba8] sm:$0xff]
    %v560 = vld [vmem:[#allocation7 + $0xbb0] sm:$0xff]
    %v561 = vld [vmem:[#allocation7 + $0xbb8] sm:$0xff]
    %v562 = vld [vmem:[#allocation7 + $0xbc0] sm:$0xff]
    %v563 = vld [vmem:[#allocation7 + $0xbc8] sm:$0xff]
    %v564 = vld [vmem:[#allocation7 + $0xbd0] sm:$0xff]
    %v565 = vld [vmem:[#allocation7 + $0xbd8] sm:$0xff]
    %v566 = vld [vmem:[#allocation7 + $0xbe0] sm:$0xff]
    %v567 = vld [vmem:[#allocation7 + $0xbe8] sm:$0xff]
    %v568 = vld [vmem:[#allocation7 + $0xbf0] sm:$0xff]
    %v569 = vld [vmem:[#allocation7 + $0xbf8] sm:$0xff]
    %v570 = vld [vmem:[#allocation7 + $0xc00] sm:$0xff]
    %v571 = vld [vmem:[#allocation7 + $0xc08] sm:$0xff]
    %v572 = vld [vmem:[#allocation7 + $0xc10] sm:$0xff]
    %v573 = vld [vmem:[#allocation7 + $0xc18] sm:$0xff]
    %v574 = vld [vmem:[#allocation7 + $0xc20] sm:$0xff]
    %v575 = vld [vmem:[#allocation7 + $0xc28] sm:$0xff]
    %v576 = vld [vmem:[#allocation7 + $0xc30] sm:$0xff]
    %v577 = vld [vmem:[#allocation7 + $0xc38] sm:$0xff]
    %v578 = vld [vmem:[#allocation7 + $0xc40] sm:$0xff]
    %v579 = vld [vmem:[#allocation7 + $0xc48] sm:$0xff]
    %v580 = vld [vmem:[#allocation7 + $0xc50] sm:$0xff]
    %v581 = vld [vmem:[#allocation7 + $0xc58] sm:$0xff]
    %v582 = vld [vmem:[#allocation7 + $0xc60] sm:$0xff]
    %v583 = vld [vmem:[#allocation7 + $0xc68] sm:$0xff]
    %v584 = vld [vmem:[#allocation7 + $0xc70] sm:$0xff]
    %v585 = vld [vmem:[#allocation7 + $0xc78] sm:$0xff]
    %v586 = vld [vmem:[#allocation7 + $0xc80] sm:$0xff]
    %v587 = vld [vmem:[#allocation7 + $0xc88] sm:$0xff]
    %v588 = vld [vmem:[#allocation7 + $0xc90] sm:$0xff]
    %v589 = vld [vmem:[#allocation7 + $0xc98] sm:$0xff]
    %v590 = vld [vmem:[#allocation7 + $0xca0] sm:$0xff]
    %v591 = vld [vmem:[#allocation7 + $0xca8] sm:$0xff]
    %v592 = vld [vmem:[#allocation7 + $0xcb0] sm:$0xff]
    %v593 = vld [vmem:[#allocation7 + $0xcb8] sm:$0xff]
    %v594 = vld [vmem:[#allocation7 + $0xcc0] sm:$0xff]
    %v595 = vld [vmem:[#allocation7 + $0xcc8] sm:$0xff]
    %v596 = vld [vmem:[#allocation7 + $0xcd0] sm:$0xff]
    %v597 = vld [vmem:[#allocation7 + $0xcd8] sm:$0xff]
    %v598 = vld [vmem:[#allocation7 + $0xce0] sm:$0xff]
    %v599 = vld [vmem:[#allocation7 + $0xce8] sm:$0xff]
    %v600 = vld [vmem:[#allocation7 + $0xcf0] sm:$0xff]
    %v601 = vld [vmem:[#allocation7 + $0xcf8] sm:$0xff]
    %v602 = vld [vmem:[#allocation7 + $0xd00] sm:$0xff]
    %v603 = vld [vmem:[#allocation7 + $0xd08] sm:$0xff]
    %v604 = vld [vmem:[#allocation7 + $0xd10] sm:$0xff]
    %v605 = vld [vmem:[#allocation7 + $0xd18] sm:$0xff]
    %v606 = vld [vmem:[#allocation7 + $0xd20] sm:$0xff]
    %v607 = vld [vmem:[#allocation7 + $0xd28] sm:$0xff]
    %v608 = vld [vmem:[#allocation7 + $0xd30] sm:$0xff]
    %v609 = vld [vmem:[#allocation7 + $0xd38] sm:$0xff]
    %v610 = vld [vmem:[#allocation7 + $0xd40] sm:$0xff]
    %v611 = vld [vmem:[#allocation7 + $0xd48] sm:$0xff]
    %v612 = vld [vmem:[#allocation7 + $0xd50] sm:$0xff]
    %v613 = vld [vmem:[#allocation7 + $0xd58] sm:$0xff]
    %v614 = vld [vmem:[#allocation7 + $0xd60] sm:$0xff]
    %v615 = vld [vmem:[#allocation7 + $0xd68] sm:$0xff]
    %v616 = vld [vmem:[#allocation7 + $0xd70] sm:$0xff]
    %v617 = vld [vmem:[#allocation7 + $0xd78] sm:$0xff]
    %v618 = vld [vmem:[#allocation7 + $0xd80] sm:$0xff]
    %v619 = vld [vmem:[#allocation7 + $0xd88] sm:$0xff]
    %v620 = vld [vmem:[#allocation7 + $0xd90] sm:$0xff]
    %v621 = vld [vmem:[#allocation7 + $0xd98] sm:$0xff]
    %v622 = vld [vmem:[#allocation7 + $0xda0] sm:$0xff]
    %v623 = vld [vmem:[#allocation7 + $0xda8] sm:$0xff]
    %v624 = vld [vmem:[#allocation7 + $0xdb0] sm:$0xff]
    %v625 = vld [vmem:[#allocation7 + $0xdb8] sm:$0xff]
    %v626 = vld [vmem:[#allocation7 + $0xdc0] sm:$0xff]
    %v627 = vld [vmem:[#allocation7 + $0xdc8] sm:$0xff]
    %v628 = vld [vmem:[#allocation7 + $0xdd0] sm:$0xff]
    %v629 = vld [vmem:[#allocation7 + $0xdd8] sm:$0xff]
    %v630 = vld [vmem:[#allocation7 + $0xde0] sm:$0xff]
    %v631 = vld [vmem:[#allocation7 + $0xde8] sm:$0xff]
    %v632 = vld [vmem:[#allocation7 + $0xdf0] sm:$0xff]
    %v633 = vld [vmem:[#allocation7 + $0xdf8] sm:$0xff]
    %v634 = vld [vmem:[#allocation7 + $0xe00] sm:$0xff]
    %v635 = vld [vmem:[#allocation7 + $0xe08] sm:$0xff]
    %v636 = vld [vmem:[#allocation7 + $0xe10] sm:$0xff]
    %v637 = vld [vmem:[#allocation7 + $0xe18] sm:$0xff]
    %v638 = vld [vmem:[#allocation7 + $0xe20] sm:$0xff]
    %v639 = vld [vmem:[#allocation7 + $0xe28] sm:$0xff]
    %v640 = vld [vmem:[#allocation7 + $0xe30] sm:$0xff]
    %v641 = vld [vmem:[#allocation7 + $0xe38] sm:$0xff]
    %v642 = vld [vmem:[#allocation7 + $0xe40] sm:$0xff]
    %v643 = vld [vmem:[#allocation7 + $0xe48] sm:$0xff]
    %v644 = vld [vmem:[#allocation7 + $0xe50] sm:$0xff]
    %v645 = vld [vmem:[#allocation7 + $0xe58] sm:$0xff]
    %v646 = vld [vmem:[#allocation7 + $0xe60] sm:$0xff]
    %v647 = vld [vmem:[#allocation7 + $0xe68] sm:$0xff]
    %v648 = vld [vmem:[#allocation7 + $0xe70] sm:$0xff]
    %v649 = vld [vmem:[#allocation7 + $0xe78] sm:$0xff]
    %v650 = vld [vmem:[#allocation7 + $0xe80] sm:$0xff]
    %v651 = vld [vmem:[#allocation7 + $0xe88] sm:$0xff]
    %v652 = vld [vmem:[#allocation7 + $0xe90] sm:$0xff]
    %v653 = vld [vmem:[#allocation7 + $0xe98] sm:$0xff]
    %v654 = vld [vmem:[#allocation7 + $0xea0] sm:$0xff]
    %v655 = vld [vmem:[#allocation7 + $0xea8] sm:$0xff]
    %v656 = vld [vmem:[#allocation7 + $0xeb0] sm:$0xff]
    %v657 = vld [vmem:[#allocation7 + $0xeb8] sm:$0xff]
    %v658 = vld [vmem:[#allocation7 + $0xec0] sm:$0xff]
    %v659 = vld [vmem:[#allocation7 + $0xec8] sm:$0xff]
    %v660 = vld [vmem:[#allocation7 + $0xed0] sm:$0xff]
    %v661 = vld [vmem:[#allocation7 + $0xed8] sm:$0xff]
    %v662 = vld [vmem:[#allocation7 + $0xee0] sm:$0xff]
    %v663 = vld [vmem:[#allocation7 + $0xee8] sm:$0xff]
    %v664 = vld [vmem:[#allocation7 + $0xef0] sm:$0xff]
    %v665 = vld [vmem:[#allocation7 + $0xef8] sm:$0xff]
    %v666 = vld [vmem:[#allocation7 + $0xf00] sm:$0xff]
    %v667 = vld [vmem:[#allocation7 + $0xf08] sm:$0xff]
    %v668 = vld [vmem:[#allocation7 + $0xf10] sm:$0xff]
    %v669 = vld [vmem:[#allocation7 + $0xf18] sm:$0xff]
    %v670 = vld [vmem:[#allocation7 + $0xf20] sm:$0xff]
    %v671 = vld [vmem:[#allocation7 + $0xf28] sm:$0xff]
    %v672 = vld [vmem:[#allocation7 + $0xf30] sm:$0xff]
    %v673 = vld [vmem:[#allocation7 + $0xf38] sm:$0xff]
    %v674 = vld [vmem:[#allocation7 + $0xf40] sm:$0xff]
    %v675 = vld [vmem:[#allocation7 + $0xf48] sm:$0xff]
    %v676 = vld [vmem:[#allocation7 + $0xf50] sm:$0xff]
    %v677 = vld [vmem:[#allocation7 + $0xf58] sm:$0xff]
    %v678 = vld [vmem:[#allocation7 + $0xf60] sm:$0xff]
    %v679 = vld [vmem:[#allocation7 + $0xf68] sm:$0xff]
    %v680 = vld [vmem:[#allocation7 + $0xf70] sm:$0xff]
    %v681 = vld [vmem:[#allocation7 + $0xf78] sm:$0xff]
    %v682 = vld [vmem:[#allocation7 + $0xf80] sm:$0xff]
    %v683 = vld [vmem:[#allocation7 + $0xf88] sm:$0xff]
    %v684 = vld [vmem:[#allocation7 + $0xf90] sm:$0xff]
    %v685 = vld [vmem:[#allocation7 + $0xf98] sm:$0xff]
    %v686 = vld [vmem:[#allocation7 + $0xfa0] sm:$0xff]
    %v687 = vld [vmem:[#allocation7 + $0xfa8] sm:$0xff]
    %v688 = vld [vmem:[#allocation7 + $0xfb0] sm:$0xff]
    %v689 = vld [vmem:[#allocation7 + $0xfb8] sm:$0xff]
    %v690 = vld [vmem:[#allocation7 + $0xfc0] sm:$0xff]
    %v691 = vld [vmem:[#allocation7 + $0xfc8] sm:$0xff]
    %v692 = vld [vmem:[#allocation7 + $0xfd0] sm:$0xff]
    %v693 = vld [vmem:[#allocation7 + $0xfd8] sm:$0xff]
    %v694 = vld [vmem:[#allocation7 + $0xfe0] sm:$0xff]
    %v695 = vld [vmem:[#allocation7 + $0xfe8] sm:$0xff]
    %v696 = vld [vmem:[#allocation7 + $0xff0] sm:$0xff]
    %v697 = vld [vmem:[#allocation7 + $0xff8] sm:$0xff]
    %v698 = vld [vmem:[#allocation9] sm:$0xff]
    %v700 = vperm.slane %v698, 0
    %v701 = vperm.slane %v698, 1
    %v702 = vperm.slane %v698, 2
    %v703 = vperm.slane %v698, 3
    %v704 = vperm.slane %v698, 4
    %v705 = vperm.slane %v698, 5
    %v706 = vperm.slane %v698, 6
    %v707 = vperm.slane %v698, 7
    %v720 = vunpack.c.l.b16 %v182
    %v721 = vunpack.c.h.b16 %v182
    %v722 = vunpack.c.l.b16 %v183
    %v723 = vunpack.c.h.b16 %v183
    %v724 = vunpack.c.l.b16 %v184
    %v725 = vunpack.c.h.b16 %v184
    %v726 = vunpack.c.l.b16 %v185
    %v727 = vunpack.c.h.b16 %v185
    %v728 = vpack.c.b16 %v720, %v720
    %v729 = vpack.c.b16 %v721, %v721
    %v730 = vpack.c.b16 %v722, %v722
    %v731 = vpack.c.b16 %v723, %v723
    %v732 = vpack.c.b16 %v724, %v724
    %v733 = vpack.c.b16 %v725, %v725
    %v734 = vpack.c.b16 %v726, %v726
    %v735 = vpack.c.b16 %v727, %v727
    %v1256 = vunpack.c.l.b16 %v186
    %v1257 = vunpack.c.h.b16 %v186
    %v1258 = vunpack.c.l.b16 %v187
    %v1259 = vunpack.c.h.b16 %v187
    %v1260 = vunpack.c.l.b16 %v188
    %v1261 = vunpack.c.h.b16 %v188
    %v1262 = vunpack.c.l.b16 %v189
    %v1263 = vunpack.c.h.b16 %v189
    %v1264 = vunpack.c.l.b16 %v190
    %v1265 = vunpack.c.h.b16 %v190
    %v1266 = vunpack.c.l.b16 %v191
    %v1267 = vunpack.c.h.b16 %v191
    %v1268 = vunpack.c.l.b16 %v192
    %v1269 = vunpack.c.h.b16 %v192
    %v1270 = vunpack.c.l.b16 %v193
    %v1271 = vunpack.c.h.b16 %v193
    %v1272 = vunpack.c.l.b16 %v194
    %v1273 = vunpack.c.h.b16 %v194
    %v1274 = vunpack.c.l.b16 %v195
    %v1275 = vunpack.c.h.b16 %v195
    %v1276 = vunpack.c.l.b16 %v196
    %v1277 = vunpack.c.h.b16 %v196
    %v1278 = vunpack.c.l.b16 %v197
    %v1279 = vunpack.c.h.b16 %v197
    %v1280 = vunpack.c.l.b16 %v198
    %v1281 = vunpack.c.h.b16 %v198
    %v1282 = vunpack.c.l.b16 %v199
    %v1283 = vunpack.c.h.b16 %v199
    %v1284 = vunpack.c.l.b16 %v200
    %v1285 = vunpack.c.h.b16 %v200
    %v1286 = vunpack.c.l.b16 %v201
    %v1287 = vunpack.c.h.b16 %v201
    %v1288 = vunpack.c.l.b16 %v202
    %v1289 = vunpack.c.h.b16 %v202
    %v1290 = vunpack.c.l.b16 %v203
    %v1291 = vunpack.c.h.b16 %v203
    %v1292 = vunpack.c.l.b16 %v204
    %v1293 = vunpack.c.h.b16 %v204
    %v1294 = vunpack.c.l.b16 %v205
    %v1295 = vunpack.c.h.b16 %v205
    %v1296 = vunpack.c.l.b16 %v206
    %v1297 = vunpack.c.h.b16 %v206
    %v1298 = vunpack.c.l.b16 %v207
    %v1299 = vunpack.c.h.b16 %v207
    %v1300 = vunpack.c.l.b16 %v208
    %v1301 = vunpack.c.h.b16 %v208
    %v1302 = vunpack.c.l.b16 %v209
    %v1303 = vunpack.c.h.b16 %v209
    %v1304 = vunpack.c.l.b16 %v210
    %v1305 = vunpack.c.h.b16 %v210
    %v1306 = vunpack.c.l.b16 %v211
    %v1307 = vunpack.c.h.b16 %v211
    %v1308 = vunpack.c.l.b16 %v212
    %v1309 = vunpack.c.h.b16 %v212
    %v1310 = vunpack.c.l.b16 %v213
    %v1311 = vunpack.c.h.b16 %v213
    %v1312 = vunpack.c.l.b16 %v214
    %v1313 = vunpack.c.h.b16 %v214
    %v1314 = vunpack.c.l.b16 %v215
    %v1315 = vunpack.c.h.b16 %v215
    %v1316 = vunpack.c.l.b16 %v216
    %v1317 = vunpack.c.h.b16 %v216
    %v1318 = vunpack.c.l.b16 %v217
    %v1319 = vunpack.c.h.b16 %v217
    %v1320 = vunpack.c.l.b16 %v218
    %v1321 = vunpack.c.h.b16 %v218
    %v1322 = vunpack.c.l.b16 %v219
    %v1323 = vunpack.c.h.b16 %v219
    %v1324 = vunpack.c.l.b16 %v220
    %v1325 = vunpack.c.h.b16 %v220
    %v1326 = vunpack.c.l.b16 %v221
    %v1327 = vunpack.c.h.b16 %v221
    %v1328 = vunpack.c.l.b16 %v222
    %v1329 = vunpack.c.h.b16 %v222
    %v1330 = vunpack.c.l.b16 %v223
    %v1331 = vunpack.c.h.b16 %v223
    %v1332 = vunpack.c.l.b16 %v224
    %v1333 = vunpack.c.h.b16 %v224
    %v1334 = vunpack.c.l.b16 %v225
    %v1335 = vunpack.c.h.b16 %v225
    %v1336 = vunpack.c.l.b16 %v226
    %v1337 = vunpack.c.h.b16 %v226
    %v1338 = vunpack.c.l.b16 %v227
    %v1339 = vunpack.c.h.b16 %v227
    %v1340 = vunpack.c.l.b16 %v228
    %v1341 = vunpack.c.h.b16 %v228
    %v1342 = vunpack.c.l.b16 %v229
    %v1343 = vunpack.c.h.b16 %v229
    %v1344 = vunpack.c.l.b16 %v230
    %v1345 = vunpack.c.h.b16 %v230
    %v1346 = vunpack.c.l.b16 %v231
    %v1347 = vunpack.c.h.b16 %v231
    %v1348 = vunpack.c.l.b16 %v232
    %v1349 = vunpack.c.h.b16 %v232
    %v1350 = vunpack.c.l.b16 %v233
    %v1351 = vunpack.c.h.b16 %v233
    %v1352 = vunpack.c.l.b16 %v234
    %v1353 = vunpack.c.h.b16 %v234
    %v1354 = vunpack.c.l.b16 %v235
    %v1355 = vunpack.c.h.b16 %v235
    %v1356 = vunpack.c.l.b16 %v236
    %v1357 = vunpack.c.h.b16 %v236
    %v1358 = vunpack.c.l.b16 %v237
    %v1359 = vunpack.c.h.b16 %v237
    %v1360 = vunpack.c.l.b16 %v238
    %v1361 = vunpack.c.h.b16 %v238
    %v1362 = vunpack.c.l.b16 %v239
    %v1363 = vunpack.c.h.b16 %v239
    %v1364 = vunpack.c.l.b16 %v240
    %v1365 = vunpack.c.h.b16 %v240
    %v1366 = vunpack.c.l.b16 %v241
    %v1367 = vunpack.c.h.b16 %v241
    %v1368 = vunpack.c.l.b16 %v242
    %v1369 = vunpack.c.h.b16 %v242
    %v1370 = vunpack.c.l.b16 %v243
    %v1371 = vunpack.c.h.b16 %v243
    %v1372 = vunpack.c.l.b16 %v244
    %v1373 = vunpack.c.h.b16 %v244
    %v1374 = vunpack.c.l.b16 %v245
    %v1375 = vunpack.c.h.b16 %v245
    %v1376 = vunpack.c.l.b16 %v246
    %v1377 = vunpack.c.h.b16 %v246
    %v1378 = vunpack.c.l.b16 %v247
    %v1379 = vunpack.c.h.b16 %v247
    %v1380 = vunpack.c.l.b16 %v248
    %v1381 = vunpack.c.h.b16 %v248
    %v1382 = vunpack.c.l.b16 %v249
    %v1383 = vunpack.c.h.b16 %v249
    %v1384 = vunpack.c.l.b16 %v250
    %v1385 = vunpack.c.h.b16 %v250
    %v1386 = vunpack.c.l.b16 %v251
    %v1387 = vunpack.c.h.b16 %v251
    %v1388 = vunpack.c.l.b16 %v252
    %v1389 = vunpack.c.h.b16 %v252
    %v1390 = vunpack.c.l.b16 %v253
    %v1391 = vunpack.c.h.b16 %v253
    %v1392 = vunpack.c.l.b16 %v254
    %v1393 = vunpack.c.h.b16 %v254
    %v1394 = vunpack.c.l.b16 %v255
    %v1395 = vunpack.c.h.b16 %v255
    %v1396 = vunpack.c.l.b16 %v256
    %v1397 = vunpack.c.h.b16 %v256
    %v1398 = vunpack.c.l.b16 %v257
    %v1399 = vunpack.c.h.b16 %v257
    %v1400 = vunpack.c.l.b16 %v258
    %v1401 = vunpack.c.h.b16 %v258
    %v1402 = vunpack.c.l.b16 %v259
    %v1403 = vunpack.c.h.b16 %v259
    %v1404 = vunpack.c.l.b16 %v260
    %v1405 = vunpack.c.h.b16 %v260
    %v1406 = vunpack.c.l.b16 %v261
    %v1407 = vunpack.c.h.b16 %v261
    %v1408 = vunpack.c.l.b16 %v262
    %v1409 = vunpack.c.h.b16 %v262
    %v1410 = vunpack.c.l.b16 %v263
    %v1411 = vunpack.c.h.b16 %v263
    %v1412 = vunpack.c.l.b16 %v264
    %v1413 = vunpack.c.h.b16 %v264
    %v1414 = vunpack.c.l.b16 %v265
    %v1415 = vunpack.c.h.b16 %v265
    %v1416 = vunpack.c.l.b16 %v266
    %v1417 = vunpack.c.h.b16 %v266
    %v1418 = vunpack.c.l.b16 %v267
    %v1419 = vunpack.c.h.b16 %v267
    %v1420 = vunpack.c.l.b16 %v268
    %v1421 = vunpack.c.h.b16 %v268
    %v1422 = vunpack.c.l.b16 %v269
    %v1423 = vunpack.c.h.b16 %v269
    %v1424 = vunpack.c.l.b16 %v270
    %v1425 = vunpack.c.h.b16 %v270
    %v1426 = vunpack.c.l.b16 %v271
    %v1427 = vunpack.c.h.b16 %v271
    %v1428 = vunpack.c.l.b16 %v272
    %v1429 = vunpack.c.h.b16 %v272
    %v1430 = vunpack.c.l.b16 %v273
    %v1431 = vunpack.c.h.b16 %v273
    %v1432 = vunpack.c.l.b16 %v274
    %v1433 = vunpack.c.h.b16 %v274
    %v1434 = vunpack.c.l.b16 %v275
    %v1435 = vunpack.c.h.b16 %v275
    %v1436 = vunpack.c.l.b16 %v276
    %v1437 = vunpack.c.h.b16 %v276
    %v1438 = vunpack.c.l.b16 %v277
    %v1439 = vunpack.c.h.b16 %v277
    %v1440 = vunpack.c.l.b16 %v278
    %v1441 = vunpack.c.h.b16 %v278
    %v1442 = vunpack.c.l.b16 %v279
    %v1443 = vunpack.c.h.b16 %v279
    %v1444 = vunpack.c.l.b16 %v280
    %v1445 = vunpack.c.h.b16 %v280
    %v1446 = vunpack.c.l.b16 %v281
    %v1447 = vunpack.c.h.b16 %v281
    %v1448 = vunpack.c.l.b16 %v282
    %v1449 = vunpack.c.h.b16 %v282
    %v1450 = vunpack.c.l.b16 %v283
    %v1451 = vunpack.c.h.b16 %v283
    %v1452 = vunpack.c.l.b16 %v284
    %v1453 = vunpack.c.h.b16 %v284
    %v1454 = vunpack.c.l.b16 %v285
    %v1455 = vunpack.c.h.b16 %v285
    %v1456 = vunpack.c.l.b16 %v286
    %v1457 = vunpack.c.h.b16 %v286
    %v1458 = vunpack.c.l.b16 %v287
    %v1459 = vunpack.c.h.b16 %v287
    %v1460 = vunpack.c.l.b16 %v288
    %v1461 = vunpack.c.h.b16 %v288
    %v1462 = vunpack.c.l.b16 %v289
    %v1463 = vunpack.c.h.b16 %v289
    %v1464 = vunpack.c.l.b16 %v290
    %v1465 = vunpack.c.h.b16 %v290
    %v1466 = vunpack.c.l.b16 %v291
    %v1467 = vunpack.c.h.b16 %v291
    %v1468 = vunpack.c.l.b16 %v292
    %v1469 = vunpack.c.h.b16 %v292
    %v1470 = vunpack.c.l.b16 %v293
    %v1471 = vunpack.c.h.b16 %v293
    %v1472 = vunpack.c.l.b16 %v294
    %v1473 = vunpack.c.h.b16 %v294
    %v1474 = vunpack.c.l.b16 %v295
    %v1475 = vunpack.c.h.b16 %v295
    %v1476 = vunpack.c.l.b16 %v296
    %v1477 = vunpack.c.h.b16 %v296
    %v1478 = vunpack.c.l.b16 %v297
    %v1479 = vunpack.c.h.b16 %v297
    %v1480 = vunpack.c.l.b16 %v298
    %v1481 = vunpack.c.h.b16 %v298
    %v1482 = vunpack.c.l.b16 %v299
    %v1483 = vunpack.c.h.b16 %v299
    %v1484 = vunpack.c.l.b16 %v300
    %v1485 = vunpack.c.h.b16 %v300
    %v1486 = vunpack.c.l.b16 %v301
    %v1487 = vunpack.c.h.b16 %v301
    %v1488 = vunpack.c.l.b16 %v302
    %v1489 = vunpack.c.h.b16 %v302
    %v1490 = vunpack.c.l.b16 %v303
    %v1491 = vunpack.c.h.b16 %v303
    %v1492 = vunpack.c.l.b16 %v304
    %v1493 = vunpack.c.h.b16 %v304
    %v1494 = vunpack.c.l.b16 %v305
    %v1495 = vunpack.c.h.b16 %v305
    %v1496 = vunpack.c.l.b16 %v306
    %v1497 = vunpack.c.h.b16 %v306
    %v1498 = vunpack.c.l.b16 %v307
    %v1499 = vunpack.c.h.b16 %v307
    %v1500 = vunpack.c.l.b16 %v308
    %v1501 = vunpack.c.h.b16 %v308
    %v1502 = vunpack.c.l.b16 %v309
    %v1503 = vunpack.c.h.b16 %v309
    %v1504 = vunpack.c.l.b16 %v310
    %v1505 = vunpack.c.h.b16 %v310
    %v1506 = vunpack.c.l.b16 %v311
    %v1507 = vunpack.c.h.b16 %v311
    %v1508 = vunpack.c.l.b16 %v312
    %v1509 = vunpack.c.h.b16 %v312
    %v1510 = vunpack.c.l.b16 %v313
    %v1511 = vunpack.c.h.b16 %v313
    %v1512 = vunpack.c.l.b16 %v314
    %v1513 = vunpack.c.h.b16 %v314
    %v1514 = vunpack.c.l.b16 %v315
    %v1515 = vunpack.c.h.b16 %v315
    %v1516 = vunpack.c.l.b16 %v316
    %v1517 = vunpack.c.h.b16 %v316
    %v1518 = vunpack.c.l.b16 %v317
    %v1519 = vunpack.c.h.b16 %v317
    %v1520 = vunpack.c.l.b16 %v318
    %v1521 = vunpack.c.h.b16 %v318
    %v1522 = vunpack.c.l.b16 %v319
    %v1523 = vunpack.c.h.b16 %v319
    %v1524 = vunpack.c.l.b16 %v320
    %v1525 = vunpack.c.h.b16 %v320
    %v1526 = vunpack.c.l.b16 %v321
    %v1527 = vunpack.c.h.b16 %v321
    %v1528 = vunpack.c.l.b16 %v322
    %v1529 = vunpack.c.h.b16 %v322
    %v1530 = vunpack.c.l.b16 %v323
    %v1531 = vunpack.c.h.b16 %v323
    %v1532 = vunpack.c.l.b16 %v324
    %v1533 = vunpack.c.h.b16 %v324
    %v1534 = vunpack.c.l.b16 %v325
    %v1535 = vunpack.c.h.b16 %v325
    %v1536 = vunpack.c.l.b16 %v326
    %v1537 = vunpack.c.h.b16 %v326
    %v1538 = vunpack.c.l.b16 %v327
    %v1539 = vunpack.c.h.b16 %v327
    %v1540 = vunpack.c.l.b16 %v328
    %v1541 = vunpack.c.h.b16 %v328
    %v1542 = vunpack.c.l.b16 %v329
    %v1543 = vunpack.c.h.b16 %v329
    %v1544 = vunpack.c.l.b16 %v330
    %v1545 = vunpack.c.h.b16 %v330
    %v1546 = vunpack.c.l.b16 %v331
    %v1547 = vunpack.c.h.b16 %v331
    %v1548 = vunpack.c.l.b16 %v332
    %v1549 = vunpack.c.h.b16 %v332
    %v1550 = vunpack.c.l.b16 %v333
    %v1551 = vunpack.c.h.b16 %v333
    %v1552 = vunpack.c.l.b16 %v334
    %v1553 = vunpack.c.h.b16 %v334
    %v1554 = vunpack.c.l.b16 %v335
    %v1555 = vunpack.c.h.b16 %v335
    %v1556 = vunpack.c.l.b16 %v336
    %v1557 = vunpack.c.h.b16 %v336
    %v1558 = vunpack.c.l.b16 %v337
    %v1559 = vunpack.c.h.b16 %v337
    %v1560 = vunpack.c.l.b16 %v338
    %v1561 = vunpack.c.h.b16 %v338
    %v1562 = vunpack.c.l.b16 %v339
    %v1563 = vunpack.c.h.b16 %v339
    %v1564 = vunpack.c.l.b16 %v340
    %v1565 = vunpack.c.h.b16 %v340
    %v1566 = vunpack.c.l.b16 %v341
    %v1567 = vunpack.c.h.b16 %v341
    %v1568 = vunpack.c.l.b16 %v342
    %v1569 = vunpack.c.h.b16 %v342
    %v1570 = vunpack.c.l.b16 %v343
    %v1571 = vunpack.c.h.b16 %v343
    %v1572 = vunpack.c.l.b16 %v344
    %v1573 = vunpack.c.h.b16 %v344
    %v1574 = vunpack.c.l.b16 %v345
    %v1575 = vunpack.c.h.b16 %v345
    %v1576 = vunpack.c.l.b16 %v346
    %v1577 = vunpack.c.h.b16 %v346
    %v1578 = vunpack.c.l.b16 %v347
    %v1579 = vunpack.c.h.b16 %v347
    %v1580 = vunpack.c.l.b16 %v348
    %v1581 = vunpack.c.h.b16 %v348
    %v1582 = vunpack.c.l.b16 %v349
    %v1583 = vunpack.c.h.b16 %v349
    %v1584 = vunpack.c.l.b16 %v350
    %v1585 = vunpack.c.h.b16 %v350
    %v1586 = vunpack.c.l.b16 %v351
    %v1587 = vunpack.c.h.b16 %v351
    %v1588 = vunpack.c.l.b16 %v352
    %v1589 = vunpack.c.h.b16 %v352
    %v1590 = vunpack.c.l.b16 %v353
    %v1591 = vunpack.c.h.b16 %v353
    %v1592 = vunpack.c.l.b16 %v354
    %v1593 = vunpack.c.h.b16 %v354
    %v1594 = vunpack.c.l.b16 %v355
    %v1595 = vunpack.c.h.b16 %v355
    %v1596 = vunpack.c.l.b16 %v356
    %v1597 = vunpack.c.h.b16 %v356
    %v1598 = vunpack.c.l.b16 %v357
    %v1599 = vunpack.c.h.b16 %v357
    %v1600 = vunpack.c.l.b16 %v358
    %v1601 = vunpack.c.h.b16 %v358
    %v1602 = vunpack.c.l.b16 %v359
    %v1603 = vunpack.c.h.b16 %v359
    %v1604 = vunpack.c.l.b16 %v360
    %v1605 = vunpack.c.h.b16 %v360
    %v1606 = vunpack.c.l.b16 %v361
    %v1607 = vunpack.c.h.b16 %v361
    %v1608 = vunpack.c.l.b16 %v362
    %v1609 = vunpack.c.h.b16 %v362
    %v1610 = vunpack.c.l.b16 %v363
    %v1611 = vunpack.c.h.b16 %v363
    %v1612 = vunpack.c.l.b16 %v364
    %v1613 = vunpack.c.h.b16 %v364
    %v1614 = vunpack.c.l.b16 %v365
    %v1615 = vunpack.c.h.b16 %v365
    %v1616 = vunpack.c.l.b16 %v366
    %v1617 = vunpack.c.h.b16 %v366
    %v1618 = vunpack.c.l.b16 %v367
    %v1619 = vunpack.c.h.b16 %v367
    %v1620 = vunpack.c.l.b16 %v368
    %v1621 = vunpack.c.h.b16 %v368
    %v1622 = vunpack.c.l.b16 %v369
    %v1623 = vunpack.c.h.b16 %v369
    %v1624 = vunpack.c.l.b16 %v370
    %v1625 = vunpack.c.h.b16 %v370
    %v1626 = vunpack.c.l.b16 %v371
    %v1627 = vunpack.c.h.b16 %v371
    %v1628 = vunpack.c.l.b16 %v372
    %v1629 = vunpack.c.h.b16 %v372
    %v1630 = vunpack.c.l.b16 %v373
    %v1631 = vunpack.c.h.b16 %v373
    %v1632 = vunpack.c.l.b16 %v374
    %v1633 = vunpack.c.h.b16 %v374
    %v1634 = vunpack.c.l.b16 %v375
    %v1635 = vunpack.c.h.b16 %v375
    %v1636 = vunpack.c.l.b16 %v376
    %v1637 = vunpack.c.h.b16 %v376
    %v1638 = vunpack.c.l.b16 %v377
    %v1639 = vunpack.c.h.b16 %v377
    %v1640 = vunpack.c.l.b16 %v378
    %v1641 = vunpack.c.h.b16 %v378
    %v1642 = vunpack.c.l.b16 %v379
    %v1643 = vunpack.c.h.b16 %v379
    %v1644 = vunpack.c.l.b16 %v380
    %v1645 = vunpack.c.h.b16 %v380
    %v1646 = vunpack.c.l.b16 %v381
    %v1647 = vunpack.c.h.b16 %v381
    %v1648 = vunpack.c.l.b16 %v382
    %v1649 = vunpack.c.h.b16 %v382
    %v1650 = vunpack.c.l.b16 %v383
    %v1651 = vunpack.c.h.b16 %v383
    %v1652 = vunpack.c.l.b16 %v384
    %v1653 = vunpack.c.h.b16 %v384
    %v1654 = vunpack.c.l.b16 %v385
    %v1655 = vunpack.c.h.b16 %v385
    %v1656 = vunpack.c.l.b16 %v386
    %v1657 = vunpack.c.h.b16 %v386
    %v1658 = vunpack.c.l.b16 %v387
    %v1659 = vunpack.c.h.b16 %v387
    %v1660 = vunpack.c.l.b16 %v388
    %v1661 = vunpack.c.h.b16 %v388
    %v1662 = vunpack.c.l.b16 %v389
    %v1663 = vunpack.c.h.b16 %v389
    %v1664 = vunpack.c.l.b16 %v390
    %v1665 = vunpack.c.h.b16 %v390
    %v1666 = vunpack.c.l.b16 %v391
    %v1667 = vunpack.c.h.b16 %v391
    %v1668 = vunpack.c.l.b16 %v392
    %v1669 = vunpack.c.h.b16 %v392
    %v1670 = vunpack.c.l.b16 %v393
    %v1671 = vunpack.c.h.b16 %v393
    %v1672 = vunpack.c.l.b16 %v394
    %v1673 = vunpack.c.h.b16 %v394
    %v1674 = vunpack.c.l.b16 %v395
    %v1675 = vunpack.c.h.b16 %v395
    %v1676 = vunpack.c.l.b16 %v396
    %v1677 = vunpack.c.h.b16 %v396
    %v1678 = vunpack.c.l.b16 %v397
    %v1679 = vunpack.c.h.b16 %v397
    %v1680 = vunpack.c.l.b16 %v398
    %v1681 = vunpack.c.h.b16 %v398
    %v1682 = vunpack.c.l.b16 %v399
    %v1683 = vunpack.c.h.b16 %v399
    %v1684 = vunpack.c.l.b16 %v400
    %v1685 = vunpack.c.h.b16 %v400
    %v1686 = vunpack.c.l.b16 %v401
    %v1687 = vunpack.c.h.b16 %v401
    %v1688 = vunpack.c.l.b16 %v402
    %v1689 = vunpack.c.h.b16 %v402
    %v1690 = vunpack.c.l.b16 %v403
    %v1691 = vunpack.c.h.b16 %v403
    %v1692 = vunpack.c.l.b16 %v404
    %v1693 = vunpack.c.h.b16 %v404
    %v1694 = vunpack.c.l.b16 %v405
    %v1695 = vunpack.c.h.b16 %v405
    %v1696 = vunpack.c.l.b16 %v406
    %v1697 = vunpack.c.h.b16 %v406
    %v1698 = vunpack.c.l.b16 %v407
    %v1699 = vunpack.c.h.b16 %v407
    %v1700 = vunpack.c.l.b16 %v408
    %v1701 = vunpack.c.h.b16 %v408
    %v1702 = vunpack.c.l.b16 %v409
    %v1703 = vunpack.c.h.b16 %v409
    %v1704 = vunpack.c.l.b16 %v410
    %v1705 = vunpack.c.h.b16 %v410
    %v1706 = vunpack.c.l.b16 %v411
    %v1707 = vunpack.c.h.b16 %v411
    %v1708 = vunpack.c.l.b16 %v412
    %v1709 = vunpack.c.h.b16 %v412
    %v1710 = vunpack.c.l.b16 %v413
    %v1711 = vunpack.c.h.b16 %v413
    %v1712 = vunpack.c.l.b16 %v414
    %v1713 = vunpack.c.h.b16 %v414
    %v1714 = vunpack.c.l.b16 %v415
    %v1715 = vunpack.c.h.b16 %v415
    %v1716 = vunpack.c.l.b16 %v416
    %v1717 = vunpack.c.h.b16 %v416
    %v1718 = vunpack.c.l.b16 %v417
    %v1719 = vunpack.c.h.b16 %v417
    %v1720 = vunpack.c.l.b16 %v418
    %v1721 = vunpack.c.h.b16 %v418
    %v1722 = vunpack.c.l.b16 %v419
    %v1723 = vunpack.c.h.b16 %v419
    %v1724 = vunpack.c.l.b16 %v420
    %v1725 = vunpack.c.h.b16 %v420
    %v1726 = vunpack.c.l.b16 %v421
    %v1727 = vunpack.c.h.b16 %v421
    %v1728 = vunpack.c.l.b16 %v422
    %v1729 = vunpack.c.h.b16 %v422
    %v1730 = vunpack.c.l.b16 %v423
    %v1731 = vunpack.c.h.b16 %v423
    %v1732 = vunpack.c.l.b16 %v424
    %v1733 = vunpack.c.h.b16 %v424
    %v1734 = vunpack.c.l.b16 %v425
    %v1735 = vunpack.c.h.b16 %v425
    %v1736 = vunpack.c.l.b16 %v426
    %v1737 = vunpack.c.h.b16 %v426
    %v1738 = vunpack.c.l.b16 %v427
    %v1739 = vunpack.c.h.b16 %v427
    %v1740 = vunpack.c.l.b16 %v428
    %v1741 = vunpack.c.h.b16 %v428
    %v1742 = vunpack.c.l.b16 %v429
    %v1743 = vunpack.c.h.b16 %v429
    %v1744 = vunpack.c.l.b16 %v430
    %v1745 = vunpack.c.h.b16 %v430
    %v1746 = vunpack.c.l.b16 %v431
    %v1747 = vunpack.c.h.b16 %v431
    %v1748 = vunpack.c.l.b16 %v432
    %v1749 = vunpack.c.h.b16 %v432
    %v1750 = vunpack.c.l.b16 %v433
    %v1751 = vunpack.c.h.b16 %v433
    %v1752 = vunpack.c.l.b16 %v434
    %v1753 = vunpack.c.h.b16 %v434
    %v1754 = vunpack.c.l.b16 %v435
    %v1755 = vunpack.c.h.b16 %v435
    %v1756 = vunpack.c.l.b16 %v436
    %v1757 = vunpack.c.h.b16 %v436
    %v1758 = vunpack.c.l.b16 %v437
    %v1759 = vunpack.c.h.b16 %v437
    %v1760 = vunpack.c.l.b16 %v438
    %v1761 = vunpack.c.h.b16 %v438
    %v1762 = vunpack.c.l.b16 %v439
    %v1763 = vunpack.c.h.b16 %v439
    %v1764 = vunpack.c.l.b16 %v440
    %v1765 = vunpack.c.h.b16 %v440
    %v1766 = vunpack.c.l.b16 %v441
    %v1767 = vunpack.c.h.b16 %v441
    %v1768 = vunpack.c.l.b16 %v442
    %v1769 = vunpack.c.h.b16 %v442
    %v1770 = vunpack.c.l.b16 %v443
    %v1771 = vunpack.c.h.b16 %v443
    %v1772 = vunpack.c.l.b16 %v444
    %v1773 = vunpack.c.h.b16 %v444
    %v1774 = vunpack.c.l.b16 %v445
    %v1775 = vunpack.c.h.b16 %v445
    %v1776 = vunpack.c.l.b16 %v446
    %v1777 = vunpack.c.h.b16 %v446
    %v1778 = vunpack.c.l.b16 %v447
    %v1779 = vunpack.c.h.b16 %v447
    %v1780 = vunpack.c.l.b16 %v448
    %v1781 = vunpack.c.h.b16 %v448
    %v1782 = vunpack.c.l.b16 %v449
    %v1783 = vunpack.c.h.b16 %v449
    %v1784 = vunpack.c.l.b16 %v450
    %v1785 = vunpack.c.h.b16 %v450
    %v1786 = vunpack.c.l.b16 %v451
    %v1787 = vunpack.c.h.b16 %v451
    %v1788 = vunpack.c.l.b16 %v452
    %v1789 = vunpack.c.h.b16 %v452
    %v1790 = vunpack.c.l.b16 %v453
    %v1791 = vunpack.c.h.b16 %v453
    %v1792 = vunpack.c.l.b16 %v454
    %v1793 = vunpack.c.h.b16 %v454
    %v1794 = vunpack.c.l.b16 %v455
    %v1795 = vunpack.c.h.b16 %v455
    %v1796 = vunpack.c.l.b16 %v456
    %v1797 = vunpack.c.h.b16 %v456
    %v1798 = vunpack.c.l.b16 %v457
    %v1799 = vunpack.c.h.b16 %v457
    %v1800 = vunpack.c.l.b16 %v458
    %v1801 = vunpack.c.h.b16 %v458
    %v1802 = vunpack.c.l.b16 %v459
    %v1803 = vunpack.c.h.b16 %v459
    %v1804 = vunpack.c.l.b16 %v460
    %v1805 = vunpack.c.h.b16 %v460
    %v1806 = vunpack.c.l.b16 %v461
    %v1807 = vunpack.c.h.b16 %v461
    %v1808 = vunpack.c.l.b16 %v462
    %v1809 = vunpack.c.h.b16 %v462
    %v1810 = vunpack.c.l.b16 %v463
    %v1811 = vunpack.c.h.b16 %v463
    %v1812 = vunpack.c.l.b16 %v464
    %v1813 = vunpack.c.h.b16 %v464
    %v1814 = vunpack.c.l.b16 %v465
    %v1815 = vunpack.c.h.b16 %v465
    %v1816 = vunpack.c.l.b16 %v466
    %v1817 = vunpack.c.h.b16 %v466
    %v1818 = vunpack.c.l.b16 %v467
    %v1819 = vunpack.c.h.b16 %v467
    %v1820 = vunpack.c.l.b16 %v468
    %v1821 = vunpack.c.h.b16 %v468
    %v1822 = vunpack.c.l.b16 %v469
    %v1823 = vunpack.c.h.b16 %v469
    %v1824 = vunpack.c.l.b16 %v470
    %v1825 = vunpack.c.h.b16 %v470
    %v1826 = vunpack.c.l.b16 %v471
    %v1827 = vunpack.c.h.b16 %v471
    %v1828 = vunpack.c.l.b16 %v472
    %v1829 = vunpack.c.h.b16 %v472
    %v1830 = vunpack.c.l.b16 %v473
    %v1831 = vunpack.c.h.b16 %v473
    %v1832 = vunpack.c.l.b16 %v474
    %v1833 = vunpack.c.h.b16 %v474
    %v1834 = vunpack.c.l.b16 %v475
    %v1835 = vunpack.c.h.b16 %v475
    %v1836 = vunpack.c.l.b16 %v476
    %v1837 = vunpack.c.h.b16 %v476
    %v1838 = vunpack.c.l.b16 %v477
    %v1839 = vunpack.c.h.b16 %v477
    %v1840 = vunpack.c.l.b16 %v478
    %v1841 = vunpack.c.h.b16 %v478
    %v1842 = vunpack.c.l.b16 %v479
    %v1843 = vunpack.c.h.b16 %v479
    %v1844 = vunpack.c.l.b16 %v480
    %v1845 = vunpack.c.h.b16 %v480
    %v1846 = vunpack.c.l.b16 %v481
    %v1847 = vunpack.c.h.b16 %v481
    %v1848 = vunpack.c.l.b16 %v482
    %v1849 = vunpack.c.h.b16 %v482
    %v1850 = vunpack.c.l.b16 %v483
    %v1851 = vunpack.c.h.b16 %v483
    %v1852 = vunpack.c.l.b16 %v484
    %v1853 = vunpack.c.h.b16 %v484
    %v1854 = vunpack.c.l.b16 %v485
    %v1855 = vunpack.c.h.b16 %v485
    %v1856 = vunpack.c.l.b16 %v486
    %v1857 = vunpack.c.h.b16 %v486
    %v1858 = vunpack.c.l.b16 %v487
    %v1859 = vunpack.c.h.b16 %v487
    %v1860 = vunpack.c.l.b16 %v488
    %v1861 = vunpack.c.h.b16 %v488
    %v1862 = vunpack.c.l.b16 %v489
    %v1863 = vunpack.c.h.b16 %v489
    %v1864 = vunpack.c.l.b16 %v490
    %v1865 = vunpack.c.h.b16 %v490
    %v1866 = vunpack.c.l.b16 %v491
    %v1867 = vunpack.c.h.b16 %v491
    %v1868 = vunpack.c.l.b16 %v492
    %v1869 = vunpack.c.h.b16 %v492
    %v1870 = vunpack.c.l.b16 %v493
    %v1871 = vunpack.c.h.b16 %v493
    %v1872 = vunpack.c.l.b16 %v494
    %v1873 = vunpack.c.h.b16 %v494
    %v1874 = vunpack.c.l.b16 %v495
    %v1875 = vunpack.c.h.b16 %v495
    %v1876 = vunpack.c.l.b16 %v496
    %v1877 = vunpack.c.h.b16 %v496
    %v1878 = vunpack.c.l.b16 %v497
    %v1879 = vunpack.c.h.b16 %v497
    %v1880 = vunpack.c.l.b16 %v498
    %v1881 = vunpack.c.h.b16 %v498
    %v1882 = vunpack.c.l.b16 %v499
    %v1883 = vunpack.c.h.b16 %v499
    %v1884 = vunpack.c.l.b16 %v500
    %v1885 = vunpack.c.h.b16 %v500
    %v1886 = vunpack.c.l.b16 %v501
    %v1887 = vunpack.c.h.b16 %v501
    %v1888 = vunpack.c.l.b16 %v502
    %v1889 = vunpack.c.h.b16 %v502
    %v1890 = vunpack.c.l.b16 %v503
    %v1891 = vunpack.c.h.b16 %v503
    %v1892 = vunpack.c.l.b16 %v504
    %v1893 = vunpack.c.h.b16 %v504
    %v1894 = vunpack.c.l.b16 %v505
    %v1895 = vunpack.c.h.b16 %v505
    %v1896 = vunpack.c.l.b16 %v506
    %v1897 = vunpack.c.h.b16 %v506
    %v1898 = vunpack.c.l.b16 %v507
    %v1899 = vunpack.c.h.b16 %v507
    %v1900 = vunpack.c.l.b16 %v508
    %v1901 = vunpack.c.h.b16 %v508
    %v1902 = vunpack.c.l.b16 %v509
    %v1903 = vunpack.c.h.b16 %v509
    %v1904 = vunpack.c.l.b16 %v510
    %v1905 = vunpack.c.h.b16 %v510
    %v1906 = vunpack.c.l.b16 %v511
    %v1907 = vunpack.c.h.b16 %v511
    %v1908 = vunpack.c.l.b16 %v512
    %v1909 = vunpack.c.h.b16 %v512
    %v1910 = vunpack.c.l.b16 %v513
    %v1911 = vunpack.c.h.b16 %v513
    %v1912 = vunpack.c.l.b16 %v514
    %v1913 = vunpack.c.h.b16 %v514
    %v1914 = vunpack.c.l.b16 %v515
    %v1915 = vunpack.c.h.b16 %v515
    %v1916 = vunpack.c.l.b16 %v516
    %v1917 = vunpack.c.h.b16 %v516
    %v1918 = vunpack.c.l.b16 %v517
    %v1919 = vunpack.c.h.b16 %v517
    %v1920 = vunpack.c.l.b16 %v518
    %v1921 = vunpack.c.h.b16 %v518
    %v1922 = vunpack.c.l.b16 %v519
    %v1923 = vunpack.c.h.b16 %v519
    %v1924 = vunpack.c.l.b16 %v520
    %v1925 = vunpack.c.h.b16 %v520
    %v1926 = vunpack.c.l.b16 %v521
    %v1927 = vunpack.c.h.b16 %v521
    %v1928 = vunpack.c.l.b16 %v522
    %v1929 = vunpack.c.h.b16 %v522
    %v1930 = vunpack.c.l.b16 %v523
    %v1931 = vunpack.c.h.b16 %v523
    %v1932 = vunpack.c.l.b16 %v524
    %v1933 = vunpack.c.h.b16 %v524
    %v1934 = vunpack.c.l.b16 %v525
    %v1935 = vunpack.c.h.b16 %v525
    %v1936 = vunpack.c.l.b16 %v526
    %v1937 = vunpack.c.h.b16 %v526
    %v1938 = vunpack.c.l.b16 %v527
    %v1939 = vunpack.c.h.b16 %v527
    %v1940 = vunpack.c.l.b16 %v528
    %v1941 = vunpack.c.h.b16 %v528
    %v1942 = vunpack.c.l.b16 %v529
    %v1943 = vunpack.c.h.b16 %v529
    %v1944 = vunpack.c.l.b16 %v530
    %v1945 = vunpack.c.h.b16 %v530
    %v1946 = vunpack.c.l.b16 %v531
    %v1947 = vunpack.c.h.b16 %v531
    %v1948 = vunpack.c.l.b16 %v532
    %v1949 = vunpack.c.h.b16 %v532
    %v1950 = vunpack.c.l.b16 %v533
    %v1951 = vunpack.c.h.b16 %v533
    %v1952 = vunpack.c.l.b16 %v534
    %v1953 = vunpack.c.h.b16 %v534
    %v1954 = vunpack.c.l.b16 %v535
    %v1955 = vunpack.c.h.b16 %v535
    %v1956 = vunpack.c.l.b16 %v536
    %v1957 = vunpack.c.h.b16 %v536
    %v1958 = vunpack.c.l.b16 %v537
    %v1959 = vunpack.c.h.b16 %v537
    %v1960 = vunpack.c.l.b16 %v538
    %v1961 = vunpack.c.h.b16 %v538
    %v1962 = vunpack.c.l.b16 %v539
    %v1963 = vunpack.c.h.b16 %v539
    %v1964 = vunpack.c.l.b16 %v540
    %v1965 = vunpack.c.h.b16 %v540
    %v1966 = vunpack.c.l.b16 %v541
    %v1967 = vunpack.c.h.b16 %v541
    %v1968 = vunpack.c.l.b16 %v542
    %v1969 = vunpack.c.h.b16 %v542
    %v1970 = vunpack.c.l.b16 %v543
    %v1971 = vunpack.c.h.b16 %v543
    %v1972 = vunpack.c.l.b16 %v544
    %v1973 = vunpack.c.h.b16 %v544
    %v1974 = vunpack.c.l.b16 %v545
    %v1975 = vunpack.c.h.b16 %v545
    %v1976 = vunpack.c.l.b16 %v546
    %v1977 = vunpack.c.h.b16 %v546
    %v1978 = vunpack.c.l.b16 %v547
    %v1979 = vunpack.c.h.b16 %v547
    %v1980 = vunpack.c.l.b16 %v548
    %v1981 = vunpack.c.h.b16 %v548
    %v1982 = vunpack.c.l.b16 %v549
    %v1983 = vunpack.c.h.b16 %v549
    %v1984 = vunpack.c.l.b16 %v550
    %v1985 = vunpack.c.h.b16 %v550
    %v1986 = vunpack.c.l.b16 %v551
    %v1987 = vunpack.c.h.b16 %v551
    %v1988 = vunpack.c.l.b16 %v552
    %v1989 = vunpack.c.h.b16 %v552
    %v1990 = vunpack.c.l.b16 %v553
    %v1991 = vunpack.c.h.b16 %v553
    %v1992 = vunpack.c.l.b16 %v554
    %v1993 = vunpack.c.h.b16 %v554
    %v1994 = vunpack.c.l.b16 %v555
    %v1995 = vunpack.c.h.b16 %v555
    %v1996 = vunpack.c.l.b16 %v556
    %v1997 = vunpack.c.h.b16 %v556
    %v1998 = vunpack.c.l.b16 %v557
    %v1999 = vunpack.c.h.b16 %v557
    %v2000 = vunpack.c.l.b16 %v558
    %v2001 = vunpack.c.h.b16 %v558
    %v2002 = vunpack.c.l.b16 %v559
    %v2003 = vunpack.c.h.b16 %v559
    %v2004 = vunpack.c.l.b16 %v560
    %v2005 = vunpack.c.h.b16 %v560
    %v2006 = vunpack.c.l.b16 %v561
    %v2007 = vunpack.c.h.b16 %v561
    %v2008 = vunpack.c.l.b16 %v562
    %v2009 = vunpack.c.h.b16 %v562
    %v2010 = vunpack.c.l.b16 %v563
    %v2011 = vunpack.c.h.b16 %v563
    %v2012 = vunpack.c.l.b16 %v564
    %v2013 = vunpack.c.h.b16 %v564
    %v2014 = vunpack.c.l.b16 %v565
    %v2015 = vunpack.c.h.b16 %v565
    %v2016 = vunpack.c.l.b16 %v566
    %v2017 = vunpack.c.h.b16 %v566
    %v2018 = vunpack.c.l.b16 %v567
    %v2019 = vunpack.c.h.b16 %v567
    %v2020 = vunpack.c.l.b16 %v568
    %v2021 = vunpack.c.h.b16 %v568
    %v2022 = vunpack.c.l.b16 %v569
    %v2023 = vunpack.c.h.b16 %v569
    %v2024 = vunpack.c.l.b16 %v570
    %v2025 = vunpack.c.h.b16 %v570
    %v2026 = vunpack.c.l.b16 %v571
    %v2027 = vunpack.c.h.b16 %v571
    %v2028 = vunpack.c.l.b16 %v572
    %v2029 = vunpack.c.h.b16 %v572
    %v2030 = vunpack.c.l.b16 %v573
    %v2031 = vunpack.c.h.b16 %v573
    %v2032 = vunpack.c.l.b16 %v574
    %v2033 = vunpack.c.h.b16 %v574
    %v2034 = vunpack.c.l.b16 %v575
    %v2035 = vunpack.c.h.b16 %v575
    %v2036 = vunpack.c.l.b16 %v576
    %v2037 = vunpack.c.h.b16 %v576
    %v2038 = vunpack.c.l.b16 %v577
    %v2039 = vunpack.c.h.b16 %v577
    %v2040 = vunpack.c.l.b16 %v578
    %v2041 = vunpack.c.h.b16 %v578
    %v2042 = vunpack.c.l.b16 %v579
    %v2043 = vunpack.c.h.b16 %v579
    %v2044 = vunpack.c.l.b16 %v580
    %v2045 = vunpack.c.h.b16 %v580
    %v2046 = vunpack.c.l.b16 %v581
    %v2047 = vunpack.c.h.b16 %v581
    %v2048 = vunpack.c.l.b16 %v582
    %v2049 = vunpack.c.h.b16 %v582
    %v2050 = vunpack.c.l.b16 %v583
    %v2051 = vunpack.c.h.b16 %v583
    %v2052 = vunpack.c.l.b16 %v584
    %v2053 = vunpack.c.h.b16 %v584
    %v2054 = vunpack.c.l.b16 %v585
    %v2055 = vunpack.c.h.b16 %v585
    %v2056 = vunpack.c.l.b16 %v586
    %v2057 = vunpack.c.h.b16 %v586
    %v2058 = vunpack.c.l.b16 %v587
    %v2059 = vunpack.c.h.b16 %v587
    %v2060 = vunpack.c.l.b16 %v588
    %v2061 = vunpack.c.h.b16 %v588
    %v2062 = vunpack.c.l.b16 %v589
    %v2063 = vunpack.c.h.b16 %v589
    %v2064 = vunpack.c.l.b16 %v590
    %v2065 = vunpack.c.h.b16 %v590
    %v2066 = vunpack.c.l.b16 %v591
    %v2067 = vunpack.c.h.b16 %v591
    %v2068 = vunpack.c.l.b16 %v592
    %v2069 = vunpack.c.h.b16 %v592
    %v2070 = vunpack.c.l.b16 %v593
    %v2071 = vunpack.c.h.b16 %v593
    %v2072 = vunpack.c.l.b16 %v594
    %v2073 = vunpack.c.h.b16 %v594
    %v2074 = vunpack.c.l.b16 %v595
    %v2075 = vunpack.c.h.b16 %v595
    %v2076 = vunpack.c.l.b16 %v596
    %v2077 = vunpack.c.h.b16 %v596
    %v2078 = vunpack.c.l.b16 %v597
    %v2079 = vunpack.c.h.b16 %v597
    %v2080 = vunpack.c.l.b16 %v598
    %v2081 = vunpack.c.h.b16 %v598
    %v2082 = vunpack.c.l.b16 %v599
    %v2083 = vunpack.c.h.b16 %v599
    %v2084 = vunpack.c.l.b16 %v600
    %v2085 = vunpack.c.h.b16 %v600
    %v2086 = vunpack.c.l.b16 %v601
    %v2087 = vunpack.c.h.b16 %v601
    %v2088 = vunpack.c.l.b16 %v602
    %v2089 = vunpack.c.h.b16 %v602
    %v2090 = vunpack.c.l.b16 %v603
    %v2091 = vunpack.c.h.b16 %v603
    %v2092 = vunpack.c.l.b16 %v604
    %v2093 = vunpack.c.h.b16 %v604
    %v2094 = vunpack.c.l.b16 %v605
    %v2095 = vunpack.c.h.b16 %v605
    %v2096 = vunpack.c.l.b16 %v606
    %v2097 = vunpack.c.h.b16 %v606
    %v2098 = vunpack.c.l.b16 %v607
    %v2099 = vunpack.c.h.b16 %v607
    %v2100 = vunpack.c.l.b16 %v608
    %v2101 = vunpack.c.h.b16 %v608
    %v2102 = vunpack.c.l.b16 %v609
    %v2103 = vunpack.c.h.b16 %v609
    %v2104 = vunpack.c.l.b16 %v610
    %v2105 = vunpack.c.h.b16 %v610
    %v2106 = vunpack.c.l.b16 %v611
    %v2107 = vunpack.c.h.b16 %v611
    %v2108 = vunpack.c.l.b16 %v612
    %v2109 = vunpack.c.h.b16 %v612
    %v2110 = vunpack.c.l.b16 %v613
    %v2111 = vunpack.c.h.b16 %v613
    %v2112 = vunpack.c.l.b16 %v614
    %v2113 = vunpack.c.h.b16 %v614
    %v2114 = vunpack.c.l.b16 %v615
    %v2115 = vunpack.c.h.b16 %v615
    %v2116 = vunpack.c.l.b16 %v616
    %v2117 = vunpack.c.h.b16 %v616
    %v2118 = vunpack.c.l.b16 %v617
    %v2119 = vunpack.c.h.b16 %v617
    %v2120 = vunpack.c.l.b16 %v618
    %v2121 = vunpack.c.h.b16 %v618
    %v2122 = vunpack.c.l.b16 %v619
    %v2123 = vunpack.c.h.b16 %v619
    %v2124 = vunpack.c.l.b16 %v620
    %v2125 = vunpack.c.h.b16 %v620
    %v2126 = vunpack.c.l.b16 %v621
    %v2127 = vunpack.c.h.b16 %v621
    %v2128 = vunpack.c.l.b16 %v622
    %v2129 = vunpack.c.h.b16 %v622
    %v2130 = vunpack.c.l.b16 %v623
    %v2131 = vunpack.c.h.b16 %v623
    %v2132 = vunpack.c.l.b16 %v624
    %v2133 = vunpack.c.h.b16 %v624
    %v2134 = vunpack.c.l.b16 %v625
    %v2135 = vunpack.c.h.b16 %v625
    %v2136 = vunpack.c.l.b16 %v626
    %v2137 = vunpack.c.h.b16 %v626
    %v2138 = vunpack.c.l.b16 %v627
    %v2139 = vunpack.c.h.b16 %v627
    %v2140 = vunpack.c.l.b16 %v628
    %v2141 = vunpack.c.h.b16 %v628
    %v2142 = vunpack.c.l.b16 %v629
    %v2143 = vunpack.c.h.b16 %v629
    %v2144 = vunpack.c.l.b16 %v630
    %v2145 = vunpack.c.h.b16 %v630
    %v2146 = vunpack.c.l.b16 %v631
    %v2147 = vunpack.c.h.b16 %v631
    %v2148 = vunpack.c.l.b16 %v632
    %v2149 = vunpack.c.h.b16 %v632
    %v2150 = vunpack.c.l.b16 %v633
    %v2151 = vunpack.c.h.b16 %v633
    %v2152 = vunpack.c.l.b16 %v634
    %v2153 = vunpack.c.h.b16 %v634
    %v2154 = vunpack.c.l.b16 %v635
    %v2155 = vunpack.c.h.b16 %v635
    %v2156 = vunpack.c.l.b16 %v636
    %v2157 = vunpack.c.h.b16 %v636
    %v2158 = vunpack.c.l.b16 %v637
    %v2159 = vunpack.c.h.b16 %v637
    %v2160 = vunpack.c.l.b16 %v638
    %v2161 = vunpack.c.h.b16 %v638
    %v2162 = vunpack.c.l.b16 %v639
    %v2163 = vunpack.c.h.b16 %v639
    %v2164 = vunpack.c.l.b16 %v640
    %v2165 = vunpack.c.h.b16 %v640
    %v2166 = vunpack.c.l.b16 %v641
    %v2167 = vunpack.c.h.b16 %v641
    %v2168 = vunpack.c.l.b16 %v642
    %v2169 = vunpack.c.h.b16 %v642
    %v2170 = vunpack.c.l.b16 %v643
    %v2171 = vunpack.c.h.b16 %v643
    %v2172 = vunpack.c.l.b16 %v644
    %v2173 = vunpack.c.h.b16 %v644
    %v2174 = vunpack.c.l.b16 %v645
    %v2175 = vunpack.c.h.b16 %v645
    %v2176 = vunpack.c.l.b16 %v646
    %v2177 = vunpack.c.h.b16 %v646
    %v2178 = vunpack.c.l.b16 %v647
    %v2179 = vunpack.c.h.b16 %v647
    %v2180 = vunpack.c.l.b16 %v648
    %v2181 = vunpack.c.h.b16 %v648
    %v2182 = vunpack.c.l.b16 %v649
    %v2183 = vunpack.c.h.b16 %v649
    %v2184 = vunpack.c.l.b16 %v650
    %v2185 = vunpack.c.h.b16 %v650
    %v2186 = vunpack.c.l.b16 %v651
    %v2187 = vunpack.c.h.b16 %v651
    %v2188 = vunpack.c.l.b16 %v652
    %v2189 = vunpack.c.h.b16 %v652
    %v2190 = vunpack.c.l.b16 %v653
    %v2191 = vunpack.c.h.b16 %v653
    %v2192 = vunpack.c.l.b16 %v654
    %v2193 = vunpack.c.h.b16 %v654
    %v2194 = vunpack.c.l.b16 %v655
    %v2195 = vunpack.c.h.b16 %v655
    %v2196 = vunpack.c.l.b16 %v656
    %v2197 = vunpack.c.h.b16 %v656
    %v2198 = vunpack.c.l.b16 %v657
    %v2199 = vunpack.c.h.b16 %v657
    %v2200 = vunpack.c.l.b16 %v658
    %v2201 = vunpack.c.h.b16 %v658
    %v2202 = vunpack.c.l.b16 %v659
    %v2203 = vunpack.c.h.b16 %v659
    %v2204 = vunpack.c.l.b16 %v660
    %v2205 = vunpack.c.h.b16 %v660
    %v2206 = vunpack.c.l.b16 %v661
    %v2207 = vunpack.c.h.b16 %v661
    %v2208 = vunpack.c.l.b16 %v662
    %v2209 = vunpack.c.h.b16 %v662
    %v2210 = vunpack.c.l.b16 %v663
    %v2211 = vunpack.c.h.b16 %v663
    %v2212 = vunpack.c.l.b16 %v664
    %v2213 = vunpack.c.h.b16 %v664
    %v2214 = vunpack.c.l.b16 %v665
    %v2215 = vunpack.c.h.b16 %v665
    %v2216 = vunpack.c.l.b16 %v666
    %v2217 = vunpack.c.h.b16 %v666
    %v2218 = vunpack.c.l.b16 %v667
    %v2219 = vunpack.c.h.b16 %v667
    %v2220 = vunpack.c.l.b16 %v668
    %v2221 = vunpack.c.h.b16 %v668
    %v2222 = vunpack.c.l.b16 %v669
    %v2223 = vunpack.c.h.b16 %v669
    %v2224 = vunpack.c.l.b16 %v670
    %v2225 = vunpack.c.h.b16 %v670
    %v2226 = vunpack.c.l.b16 %v671
    %v2227 = vunpack.c.h.b16 %v671
    %v2228 = vunpack.c.l.b16 %v672
    %v2229 = vunpack.c.h.b16 %v672
    %v2230 = vunpack.c.l.b16 %v673
    %v2231 = vunpack.c.h.b16 %v673
    %v2232 = vunpack.c.l.b16 %v674
    %v2233 = vunpack.c.h.b16 %v674
    %v2234 = vunpack.c.l.b16 %v675
    %v2235 = vunpack.c.h.b16 %v675
    %v2236 = vunpack.c.l.b16 %v676
    %v2237 = vunpack.c.h.b16 %v676
    %v2238 = vunpack.c.l.b16 %v677
    %v2239 = vunpack.c.h.b16 %v677
    %v2240 = vunpack.c.l.b16 %v678
    %v2241 = vunpack.c.h.b16 %v678
    %v2242 = vunpack.c.l.b16 %v679
    %v2243 = vunpack.c.h.b16 %v679
    %v2244 = vunpack.c.l.b16 %v680
    %v2245 = vunpack.c.h.b16 %v680
    %v2246 = vunpack.c.l.b16 %v681
    %v2247 = vunpack.c.h.b16 %v681
    %v2248 = vunpack.c.l.b16 %v682
    %v2249 = vunpack.c.h.b16 %v682
    %v2250 = vunpack.c.l.b16 %v683
    %v2251 = vunpack.c.h.b16 %v683
    %v2252 = vunpack.c.l.b16 %v684
    %v2253 = vunpack.c.h.b16 %v684
    %v2254 = vunpack.c.l.b16 %v685
    %v2255 = vunpack.c.h.b16 %v685
    %v2256 = vunpack.c.l.b16 %v686
    %v2257 = vunpack.c.h.b16 %v686
    %v2258 = vunpack.c.l.b16 %v687
    %v2259 = vunpack.c.h.b16 %v687
    %v2260 = vunpack.c.l.b16 %v688
    %v2261 = vunpack.c.h.b16 %v688
    %v2262 = vunpack.c.l.b16 %v689
    %v2263 = vunpack.c.h.b16 %v689
    %v2264 = vunpack.c.l.b16 %v690
    %v2265 = vunpack.c.h.b16 %v690
    %v2266 = vunpack.c.l.b16 %v691
    %v2267 = vunpack.c.h.b16 %v691
    %v2268 = vunpack.c.l.b16 %v692
    %v2269 = vunpack.c.h.b16 %v692
    %v2270 = vunpack.c.l.b16 %v693
    %v2271 = vunpack.c.h.b16 %v693
    %v2272 = vunpack.c.l.b16 %v694
    %v2273 = vunpack.c.h.b16 %v694
    %v2274 = vunpack.c.l.b16 %v695
    %v2275 = vunpack.c.h.b16 %v695
    %v2276 = vunpack.c.l.b16 %v696
    %v2277 = vunpack.c.h.b16 %v696
    %v2278 = vunpack.c.l.b16 %v697
    %v2279 = vunpack.c.h.b16 %v697
    %v2280 = vpack.c.b16 %v1264, %v1256
    %v2281 = vpack.c.b16 %v1265, %v1257
    %v2282 = vpack.c.b16 %v1266, %v1258
    %v2283 = vpack.c.b16 %v1267, %v1259
    %v2284 = vpack.c.b16 %v1268, %v1260
    %v2285 = vpack.c.b16 %v1269, %v1261
    %v2286 = vpack.c.b16 %v1270, %v1262
    %v2287 = vpack.c.b16 %v1271, %v1263
    %v2288 = vpack.c.b16 %v1280, %v1272
    %v2289 = vpack.c.b16 %v1281, %v1273
    %v2290 = vpack.c.b16 %v1282, %v1274
    %v2291 = vpack.c.b16 %v1283, %v1275
    %v2292 = vpack.c.b16 %v1284, %v1276
    %v2293 = vpack.c.b16 %v1285, %v1277
    %v2294 = vpack.c.b16 %v1286, %v1278
    %v2295 = vpack.c.b16 %v1287, %v1279
    %v2296 = vpack.c.b16 %v1296, %v1288
    %v2297 = vpack.c.b16 %v1297, %v1289
    %v2298 = vpack.c.b16 %v1298, %v1290
    %v2299 = vpack.c.b16 %v1299, %v1291
    %v2300 = vpack.c.b16 %v1300, %v1292
    %v2301 = vpack.c.b16 %v1301, %v1293
    %v2302 = vpack.c.b16 %v1302, %v1294
    %v2303 = vpack.c.b16 %v1303, %v1295
    %v2304 = vpack.c.b16 %v1312, %v1304
    %v2305 = vpack.c.b16 %v1313, %v1305
    %v2306 = vpack.c.b16 %v1314, %v1306
    %v2307 = vpack.c.b16 %v1315, %v1307
    %v2308 = vpack.c.b16 %v1316, %v1308
    %v2309 = vpack.c.b16 %v1317, %v1309
    %v2310 = vpack.c.b16 %v1318, %v1310
    %v2311 = vpack.c.b16 %v1319, %v1311
    %v2312 = vpack.c.b16 %v1328, %v1320
    %v2313 = vpack.c.b16 %v1329, %v1321
    %v2314 = vpack.c.b16 %v1330, %v1322
    %v2315 = vpack.c.b16 %v1331, %v1323
    %v2316 = vpack.c.b16 %v1332, %v1324
    %v2317 = vpack.c.b16 %v1333, %v1325
    %v2318 = vpack.c.b16 %v1334, %v1326
    %v2319 = vpack.c.b16 %v1335, %v1327
    %v2320 = vpack.c.b16 %v1344, %v1336
    %v2321 = vpack.c.b16 %v1345, %v1337
    %v2322 = vpack.c.b16 %v1346, %v1338
    %v2323 = vpack.c.b16 %v1347, %v1339
    %v2324 = vpack.c.b16 %v1348, %v1340
    %v2325 = vpack.c.b16 %v1349, %v1341
    %v2326 = vpack.c.b16 %v1350, %v1342
    %v2327 = vpack.c.b16 %v1351, %v1343
    %v2328 = vpack.c.b16 %v1360, %v1352
    %v2329 = vpack.c.b16 %v1361, %v1353
    %v2330 = vpack.c.b16 %v1362, %v1354
    %v2331 = vpack.c.b16 %v1363, %v1355
    %v2332 = vpack.c.b16 %v1364, %v1356
    %v2333 = vpack.c.b16 %v1365, %v1357
    %v2334 = vpack.c.b16 %v1366, %v1358
    %v2335 = vpack.c.b16 %v1367, %v1359
    %v2336 = vpack.c.b16 %v1376, %v1368
    %v2337 = vpack.c.b16 %v1377, %v1369
    %v2338 = vpack.c.b16 %v1378, %v1370
    %v2339 = vpack.c.b16 %v1379, %v1371
    %v2340 = vpack.c.b16 %v1380, %v1372
    %v2341 = vpack.c.b16 %v1381, %v1373
    %v2342 = vpack.c.b16 %v1382, %v1374
    %v2343 = vpack.c.b16 %v1383, %v1375
    %v2344 = vpack.c.b16 %v1392, %v1384
    %v2345 = vpack.c.b16 %v1393, %v1385
    %v2346 = vpack.c.b16 %v1394, %v1386
    %v2347 = vpack.c.b16 %v1395, %v1387
    %v2348 = vpack.c.b16 %v1396, %v1388
    %v2349 = vpack.c.b16 %v1397, %v1389
    %v2350 = vpack.c.b16 %v1398, %v1390
    %v2351 = vpack.c.b16 %v1399, %v1391
    %v2352 = vpack.c.b16 %v1408, %v1400
    %v2353 = vpack.c.b16 %v1409, %v1401
    %v2354 = vpack.c.b16 %v1410, %v1402
    %v2355 = vpack.c.b16 %v1411, %v1403
    %v2356 = vpack.c.b16 %v1412, %v1404
    %v2357 = vpack.c.b16 %v1413, %v1405
    %v2358 = vpack.c.b16 %v1414, %v1406
    %v2359 = vpack.c.b16 %v1415, %v1407
    %v2360 = vpack.c.b16 %v1424, %v1416
    %v2361 = vpack.c.b16 %v1425, %v1417
    %v2362 = vpack.c.b16 %v1426, %v1418
    %v2363 = vpack.c.b16 %v1427, %v1419
    %v2364 = vpack.c.b16 %v1428, %v1420
    %v2365 = vpack.c.b16 %v1429, %v1421
    %v2366 = vpack.c.b16 %v1430, %v1422
    %v2367 = vpack.c.b16 %v1431, %v1423
    %v2368 = vpack.c.b16 %v1440, %v1432
    %v2369 = vpack.c.b16 %v1441, %v1433
    %v2370 = vpack.c.b16 %v1442, %v1434
    %v2371 = vpack.c.b16 %v1443, %v1435
    %v2372 = vpack.c.b16 %v1444, %v1436
    %v2373 = vpack.c.b16 %v1445, %v1437
    %v2374 = vpack.c.b16 %v1446, %v1438
    %v2375 = vpack.c.b16 %v1447, %v1439
    %v2376 = vpack.c.b16 %v1456, %v1448
    %v2377 = vpack.c.b16 %v1457, %v1449
    %v2378 = vpack.c.b16 %v1458, %v1450
    %v2379 = vpack.c.b16 %v1459, %v1451
    %v2380 = vpack.c.b16 %v1460, %v1452
    %v2381 = vpack.c.b16 %v1461, %v1453
    %v2382 = vpack.c.b16 %v1462, %v1454
    %v2383 = vpack.c.b16 %v1463, %v1455
    %v2384 = vpack.c.b16 %v1472, %v1464
    %v2385 = vpack.c.b16 %v1473, %v1465
    %v2386 = vpack.c.b16 %v1474, %v1466
    %v2387 = vpack.c.b16 %v1475, %v1467
    %v2388 = vpack.c.b16 %v1476, %v1468
    %v2389 = vpack.c.b16 %v1477, %v1469
    %v2390 = vpack.c.b16 %v1478, %v1470
    %v2391 = vpack.c.b16 %v1479, %v1471
    %v2392 = vpack.c.b16 %v1488, %v1480
    %v2393 = vpack.c.b16 %v1489, %v1481
    %v2394 = vpack.c.b16 %v1490, %v1482
    %v2395 = vpack.c.b16 %v1491, %v1483
    %v2396 = vpack.c.b16 %v1492, %v1484
    %v2397 = vpack.c.b16 %v1493, %v1485
    %v2398 = vpack.c.b16 %v1494, %v1486
    %v2399 = vpack.c.b16 %v1495, %v1487
    %v2400 = vpack.c.b16 %v1504, %v1496
    %v2401 = vpack.c.b16 %v1505, %v1497
    %v2402 = vpack.c.b16 %v1506, %v1498
    %v2403 = vpack.c.b16 %v1507, %v1499
    %v2404 = vpack.c.b16 %v1508, %v1500
    %v2405 = vpack.c.b16 %v1509, %v1501
    %v2406 = vpack.c.b16 %v1510, %v1502
    %v2407 = vpack.c.b16 %v1511, %v1503
    %v2408 = vpack.c.b16 %v1520, %v1512
    %v2409 = vpack.c.b16 %v1521, %v1513
    %v2410 = vpack.c.b16 %v1522, %v1514
    %v2411 = vpack.c.b16 %v1523, %v1515
    %v2412 = vpack.c.b16 %v1524, %v1516
    %v2413 = vpack.c.b16 %v1525, %v1517
    %v2414 = vpack.c.b16 %v1526, %v1518
    %v2415 = vpack.c.b16 %v1527, %v1519
    %v2416 = vpack.c.b16 %v1536, %v1528
    %v2417 = vpack.c.b16 %v1537, %v1529
    %v2418 = vpack.c.b16 %v1538, %v1530
    %v2419 = vpack.c.b16 %v1539, %v1531
    %v2420 = vpack.c.b16 %v1540, %v1532
    %v2421 = vpack.c.b16 %v1541, %v1533
    %v2422 = vpack.c.b16 %v1542, %v1534
    %v2423 = vpack.c.b16 %v1543, %v1535
    %v2424 = vpack.c.b16 %v1552, %v1544
    %v2425 = vpack.c.b16 %v1553, %v1545
    %v2426 = vpack.c.b16 %v1554, %v1546
    %v2427 = vpack.c.b16 %v1555, %v1547
    %v2428 = vpack.c.b16 %v1556, %v1548
    %v2429 = vpack.c.b16 %v1557, %v1549
    %v2430 = vpack.c.b16 %v1558, %v1550
    %v2431 = vpack.c.b16 %v1559, %v1551
    %v2432 = vpack.c.b16 %v1568, %v1560
    %v2433 = vpack.c.b16 %v1569, %v1561
    %v2434 = vpack.c.b16 %v1570, %v1562
    %v2435 = vpack.c.b16 %v1571, %v1563
    %v2436 = vpack.c.b16 %v1572, %v1564
    %v2437 = vpack.c.b16 %v1573, %v1565
    %v2438 = vpack.c.b16 %v1574, %v1566
    %v2439 = vpack.c.b16 %v1575, %v1567
    %v2440 = vpack.c.b16 %v1584, %v1576
    %v2441 = vpack.c.b16 %v1585, %v1577
    %v2442 = vpack.c.b16 %v1586, %v1578
    %v2443 = vpack.c.b16 %v1587, %v1579
    %v2444 = vpack.c.b16 %v1588, %v1580
    %v2445 = vpack.c.b16 %v1589, %v1581
    %v2446 = vpack.c.b16 %v1590, %v1582
    %v2447 = vpack.c.b16 %v1591, %v1583
    %v2448 = vpack.c.b16 %v1600, %v1592
    %v2449 = vpack.c.b16 %v1601, %v1593
    %v2450 = vpack.c.b16 %v1602, %v1594
    %v2451 = vpack.c.b16 %v1603, %v1595
    %v2452 = vpack.c.b16 %v1604, %v1596
    %v2453 = vpack.c.b16 %v1605, %v1597
    %v2454 = vpack.c.b16 %v1606, %v1598
    %v2455 = vpack.c.b16 %v1607, %v1599
    %v2456 = vpack.c.b16 %v1616, %v1608
    %v2457 = vpack.c.b16 %v1617, %v1609
    %v2458 = vpack.c.b16 %v1618, %v1610
    %v2459 = vpack.c.b16 %v1619, %v1611
    %v2460 = vpack.c.b16 %v1620, %v1612
    %v2461 = vpack.c.b16 %v1621, %v1613
    %v2462 = vpack.c.b16 %v1622, %v1614
    %v2463 = vpack.c.b16 %v1623, %v1615
    %v2464 = vpack.c.b16 %v1632, %v1624
    %v2465 = vpack.c.b16 %v1633, %v1625
    %v2466 = vpack.c.b16 %v1634, %v1626
    %v2467 = vpack.c.b16 %v1635, %v1627
    %v2468 = vpack.c.b16 %v1636, %v1628
    %v2469 = vpack.c.b16 %v1637, %v1629
    %v2470 = vpack.c.b16 %v1638, %v1630
    %v2471 = vpack.c.b16 %v1639, %v1631
    %v2472 = vpack.c.b16 %v1648, %v1640
    %v2473 = vpack.c.b16 %v1649, %v1641
    %v2474 = vpack.c.b16 %v1650, %v1642
    %v2475 = vpack.c.b16 %v1651, %v1643
    %v2476 = vpack.c.b16 %v1652, %v1644
    %v2477 = vpack.c.b16 %v1653, %v1645
    %v2478 = vpack.c.b16 %v1654, %v1646
    %v2479 = vpack.c.b16 %v1655, %v1647
    %v2480 = vpack.c.b16 %v1664, %v1656
    %v2481 = vpack.c.b16 %v1665, %v1657
    %v2482 = vpack.c.b16 %v1666, %v1658
    %v2483 = vpack.c.b16 %v1667, %v1659
    %v2484 = vpack.c.b16 %v1668, %v1660
    %v2485 = vpack.c.b16 %v1669, %v1661
    %v2486 = vpack.c.b16 %v1670, %v1662
    %v2487 = vpack.c.b16 %v1671, %v1663
    %v2488 = vpack.c.b16 %v1680, %v1672
    %v2489 = vpack.c.b16 %v1681, %v1673
    %v2490 = vpack.c.b16 %v1682, %v1674
    %v2491 = vpack.c.b16 %v1683, %v1675
    %v2492 = vpack.c.b16 %v1684, %v1676
    %v2493 = vpack.c.b16 %v1685, %v1677
    %v2494 = vpack.c.b16 %v1686, %v1678
    %v2495 = vpack.c.b16 %v1687, %v1679
    %v2496 = vpack.c.b16 %v1696, %v1688
    %v2497 = vpack.c.b16 %v1697, %v1689
    %v2498 = vpack.c.b16 %v1698, %v1690
    %v2499 = vpack.c.b16 %v1699, %v1691
    %v2500 = vpack.c.b16 %v1700, %v1692
    %v2501 = vpack.c.b16 %v1701, %v1693
    %v2502 = vpack.c.b16 %v1702, %v1694
    %v2503 = vpack.c.b16 %v1703, %v1695
    %v2504 = vpack.c.b16 %v1712, %v1704
    %v2505 = vpack.c.b16 %v1713, %v1705
    %v2506 = vpack.c.b16 %v1714, %v1706
    %v2507 = vpack.c.b16 %v1715, %v1707
    %v2508 = vpack.c.b16 %v1716, %v1708
    %v2509 = vpack.c.b16 %v1717, %v1709
    %v2510 = vpack.c.b16 %v1718, %v1710
    %v2511 = vpack.c.b16 %v1719, %v1711
    %v2512 = vpack.c.b16 %v1728, %v1720
    %v2513 = vpack.c.b16 %v1729, %v1721
    %v2514 = vpack.c.b16 %v1730, %v1722
    %v2515 = vpack.c.b16 %v1731, %v1723
    %v2516 = vpack.c.b16 %v1732, %v1724
    %v2517 = vpack.c.b16 %v1733, %v1725
    %v2518 = vpack.c.b16 %v1734, %v1726
    %v2519 = vpack.c.b16 %v1735, %v1727
    %v2520 = vpack.c.b16 %v1744, %v1736
    %v2521 = vpack.c.b16 %v1745, %v1737
    %v2522 = vpack.c.b16 %v1746, %v1738
    %v2523 = vpack.c.b16 %v1747, %v1739
    %v2524 = vpack.c.b16 %v1748, %v1740
    %v2525 = vpack.c.b16 %v1749, %v1741
    %v2526 = vpack.c.b16 %v1750, %v1742
    %v2527 = vpack.c.b16 %v1751, %v1743
    %v2528 = vpack.c.b16 %v1760, %v1752
    %v2529 = vpack.c.b16 %v1761, %v1753
    %v2530 = vpack.c.b16 %v1762, %v1754
    %v2531 = vpack.c.b16 %v1763, %v1755
    %v2532 = vpack.c.b16 %v1764, %v1756
    %v2533 = vpack.c.b16 %v1765, %v1757
    %v2534 = vpack.c.b16 %v1766, %v1758
    %v2535 = vpack.c.b16 %v1767, %v1759
    %v2536 = vpack.c.b16 %v1776, %v1768
    %v2537 = vpack.c.b16 %v1777, %v1769
    %v2538 = vpack.c.b16 %v1778, %v1770
    %v2539 = vpack.c.b16 %v1779, %v1771
    %v2540 = vpack.c.b16 %v1780, %v1772
    %v2541 = vpack.c.b16 %v1781, %v1773
    %v2542 = vpack.c.b16 %v1782, %v1774
    %v2543 = vpack.c.b16 %v1783, %v1775
    %v2544 = vpack.c.b16 %v1792, %v1784
    %v2545 = vpack.c.b16 %v1793, %v1785
    %v2546 = vpack.c.b16 %v1794, %v1786
    %v2547 = vpack.c.b16 %v1795, %v1787
    %v2548 = vpack.c.b16 %v1796, %v1788
    %v2549 = vpack.c.b16 %v1797, %v1789
    %v2550 = vpack.c.b16 %v1798, %v1790
    %v2551 = vpack.c.b16 %v1799, %v1791
    %v2552 = vpack.c.b16 %v1808, %v1800
    %v2553 = vpack.c.b16 %v1809, %v1801
    %v2554 = vpack.c.b16 %v1810, %v1802
    %v2555 = vpack.c.b16 %v1811, %v1803
    %v2556 = vpack.c.b16 %v1812, %v1804
    %v2557 = vpack.c.b16 %v1813, %v1805
    %v2558 = vpack.c.b16 %v1814, %v1806
    %v2559 = vpack.c.b16 %v1815, %v1807
    %v2560 = vpack.c.b16 %v1824, %v1816
    %v2561 = vpack.c.b16 %v1825, %v1817
    %v2562 = vpack.c.b16 %v1826, %v1818
    %v2563 = vpack.c.b16 %v1827, %v1819
    %v2564 = vpack.c.b16 %v1828, %v1820
    %v2565 = vpack.c.b16 %v1829, %v1821
    %v2566 = vpack.c.b16 %v1830, %v1822
    %v2567 = vpack.c.b16 %v1831, %v1823
    %v2568 = vpack.c.b16 %v1840, %v1832
    %v2569 = vpack.c.b16 %v1841, %v1833
    %v2570 = vpack.c.b16 %v1842, %v1834
    %v2571 = vpack.c.b16 %v1843, %v1835
    %v2572 = vpack.c.b16 %v1844, %v1836
    %v2573 = vpack.c.b16 %v1845, %v1837
    %v2574 = vpack.c.b16 %v1846, %v1838
    %v2575 = vpack.c.b16 %v1847, %v1839
    %v2576 = vpack.c.b16 %v1856, %v1848
    %v2577 = vpack.c.b16 %v1857, %v1849
    %v2578 = vpack.c.b16 %v1858, %v1850
    %v2579 = vpack.c.b16 %v1859, %v1851
    %v2580 = vpack.c.b16 %v1860, %v1852
    %v2581 = vpack.c.b16 %v1861, %v1853
    %v2582 = vpack.c.b16 %v1862, %v1854
    %v2583 = vpack.c.b16 %v1863, %v1855
    %v2584 = vpack.c.b16 %v1872, %v1864
    %v2585 = vpack.c.b16 %v1873, %v1865
    %v2586 = vpack.c.b16 %v1874, %v1866
    %v2587 = vpack.c.b16 %v1875, %v1867
    %v2588 = vpack.c.b16 %v1876, %v1868
    %v2589 = vpack.c.b16 %v1877, %v1869
    %v2590 = vpack.c.b16 %v1878, %v1870
    %v2591 = vpack.c.b16 %v1879, %v1871
    %v2592 = vpack.c.b16 %v1888, %v1880
    %v2593 = vpack.c.b16 %v1889, %v1881
    %v2594 = vpack.c.b16 %v1890, %v1882
    %v2595 = vpack.c.b16 %v1891, %v1883
    %v2596 = vpack.c.b16 %v1892, %v1884
    %v2597 = vpack.c.b16 %v1893, %v1885
    %v2598 = vpack.c.b16 %v1894, %v1886
    %v2599 = vpack.c.b16 %v1895, %v1887
    %v2600 = vpack.c.b16 %v1904, %v1896
    %v2601 = vpack.c.b16 %v1905, %v1897
    %v2602 = vpack.c.b16 %v1906, %v1898
    %v2603 = vpack.c.b16 %v1907, %v1899
    %v2604 = vpack.c.b16 %v1908, %v1900
    %v2605 = vpack.c.b16 %v1909, %v1901
    %v2606 = vpack.c.b16 %v1910, %v1902
    %v2607 = vpack.c.b16 %v1911, %v1903
    %v2608 = vpack.c.b16 %v1920, %v1912
    %v2609 = vpack.c.b16 %v1921, %v1913
    %v2610 = vpack.c.b16 %v1922, %v1914
    %v2611 = vpack.c.b16 %v1923, %v1915
    %v2612 = vpack.c.b16 %v1924, %v1916
    %v2613 = vpack.c.b16 %v1925, %v1917
    %v2614 = vpack.c.b16 %v1926, %v1918
    %v2615 = vpack.c.b16 %v1927, %v1919
    %v2616 = vpack.c.b16 %v1936, %v1928
    %v2617 = vpack.c.b16 %v1937, %v1929
    %v2618 = vpack.c.b16 %v1938, %v1930
    %v2619 = vpack.c.b16 %v1939, %v1931
    %v2620 = vpack.c.b16 %v1940, %v1932
    %v2621 = vpack.c.b16 %v1941, %v1933
    %v2622 = vpack.c.b16 %v1942, %v1934
    %v2623 = vpack.c.b16 %v1943, %v1935
    %v2624 = vpack.c.b16 %v1952, %v1944
    %v2625 = vpack.c.b16 %v1953, %v1945
    %v2626 = vpack.c.b16 %v1954, %v1946
    %v2627 = vpack.c.b16 %v1955, %v1947
    %v2628 = vpack.c.b16 %v1956, %v1948
    %v2629 = vpack.c.b16 %v1957, %v1949
    %v2630 = vpack.c.b16 %v1958, %v1950
    %v2631 = vpack.c.b16 %v1959, %v1951
    %v2632 = vpack.c.b16 %v1968, %v1960
    %v2633 = vpack.c.b16 %v1969, %v1961
    %v2634 = vpack.c.b16 %v1970, %v1962
    %v2635 = vpack.c.b16 %v1971, %v1963
    %v2636 = vpack.c.b16 %v1972, %v1964
    %v2637 = vpack.c.b16 %v1973, %v1965
    %v2638 = vpack.c.b16 %v1974, %v1966
    %v2639 = vpack.c.b16 %v1975, %v1967
    %v2640 = vpack.c.b16 %v1984, %v1976
    %v2641 = vpack.c.b16 %v1985, %v1977
    %v2642 = vpack.c.b16 %v1986, %v1978
    %v2643 = vpack.c.b16 %v1987, %v1979
    %v2644 = vpack.c.b16 %v1988, %v1980
    %v2645 = vpack.c.b16 %v1989, %v1981
    %v2646 = vpack.c.b16 %v1990, %v1982
    %v2647 = vpack.c.b16 %v1991, %v1983
    %v2648 = vpack.c.b16 %v2000, %v1992
    %v2649 = vpack.c.b16 %v2001, %v1993
    %v2650 = vpack.c.b16 %v2002, %v1994
    %v2651 = vpack.c.b16 %v2003, %v1995
    %v2652 = vpack.c.b16 %v2004, %v1996
    %v2653 = vpack.c.b16 %v2005, %v1997
    %v2654 = vpack.c.b16 %v2006, %v1998
    %v2655 = vpack.c.b16 %v2007, %v1999
    %v2656 = vpack.c.b16 %v2016, %v2008
    %v2657 = vpack.c.b16 %v2017, %v2009
    %v2658 = vpack.c.b16 %v2018, %v2010
    %v2659 = vpack.c.b16 %v2019, %v2011
    %v2660 = vpack.c.b16 %v2020, %v2012
    %v2661 = vpack.c.b16 %v2021, %v2013
    %v2662 = vpack.c.b16 %v2022, %v2014
    %v2663 = vpack.c.b16 %v2023, %v2015
    %v2664 = vpack.c.b16 %v2032, %v2024
    %v2665 = vpack.c.b16 %v2033, %v2025
    %v2666 = vpack.c.b16 %v2034, %v2026
    %v2667 = vpack.c.b16 %v2035, %v2027
    %v2668 = vpack.c.b16 %v2036, %v2028
    %v2669 = vpack.c.b16 %v2037, %v2029
    %v2670 = vpack.c.b16 %v2038, %v2030
    %v2671 = vpack.c.b16 %v2039, %v2031
    %v2672 = vpack.c.b16 %v2048, %v2040
    %v2673 = vpack.c.b16 %v2049, %v2041
    %v2674 = vpack.c.b16 %v2050, %v2042
    %v2675 = vpack.c.b16 %v2051, %v2043
    %v2676 = vpack.c.b16 %v2052, %v2044
    %v2677 = vpack.c.b16 %v2053, %v2045
    %v2678 = vpack.c.b16 %v2054, %v2046
    %v2679 = vpack.c.b16 %v2055, %v2047
    %v2680 = vpack.c.b16 %v2064, %v2056
    %v2681 = vpack.c.b16 %v2065, %v2057
    %v2682 = vpack.c.b16 %v2066, %v2058
    %v2683 = vpack.c.b16 %v2067, %v2059
    %v2684 = vpack.c.b16 %v2068, %v2060
    %v2685 = vpack.c.b16 %v2069, %v2061
    %v2686 = vpack.c.b16 %v2070, %v2062
    %v2687 = vpack.c.b16 %v2071, %v2063
    %v2688 = vpack.c.b16 %v2080, %v2072
    %v2689 = vpack.c.b16 %v2081, %v2073
    %v2690 = vpack.c.b16 %v2082, %v2074
    %v2691 = vpack.c.b16 %v2083, %v2075
    %v2692 = vpack.c.b16 %v2084, %v2076
    %v2693 = vpack.c.b16 %v2085, %v2077
    %v2694 = vpack.c.b16 %v2086, %v2078
    %v2695 = vpack.c.b16 %v2087, %v2079
    %v2696 = vpack.c.b16 %v2096, %v2088
    %v2697 = vpack.c.b16 %v2097, %v2089
    %v2698 = vpack.c.b16 %v2098, %v2090
    %v2699 = vpack.c.b16 %v2099, %v2091
    %v2700 = vpack.c.b16 %v2100, %v2092
    %v2701 = vpack.c.b16 %v2101, %v2093
    %v2702 = vpack.c.b16 %v2102, %v2094
    %v2703 = vpack.c.b16 %v2103, %v2095
    %v2704 = vpack.c.b16 %v2112, %v2104
    %v2705 = vpack.c.b16 %v2113, %v2105
    %v2706 = vpack.c.b16 %v2114, %v2106
    %v2707 = vpack.c.b16 %v2115, %v2107
    %v2708 = vpack.c.b16 %v2116, %v2108
    %v2709 = vpack.c.b16 %v2117, %v2109
    %v2710 = vpack.c.b16 %v2118, %v2110
    %v2711 = vpack.c.b16 %v2119, %v2111
    %v2712 = vpack.c.b16 %v2128, %v2120
    %v2713 = vpack.c.b16 %v2129, %v2121
    %v2714 = vpack.c.b16 %v2130, %v2122
    %v2715 = vpack.c.b16 %v2131, %v2123
    %v2716 = vpack.c.b16 %v2132, %v2124
    %v2717 = vpack.c.b16 %v2133, %v2125
    %v2718 = vpack.c.b16 %v2134, %v2126
    %v2719 = vpack.c.b16 %v2135, %v2127
    %v2720 = vpack.c.b16 %v2144, %v2136
    %v2721 = vpack.c.b16 %v2145, %v2137
    %v2722 = vpack.c.b16 %v2146, %v2138
    %v2723 = vpack.c.b16 %v2147, %v2139
    %v2724 = vpack.c.b16 %v2148, %v2140
    %v2725 = vpack.c.b16 %v2149, %v2141
    %v2726 = vpack.c.b16 %v2150, %v2142
    %v2727 = vpack.c.b16 %v2151, %v2143
    %v2728 = vpack.c.b16 %v2160, %v2152
    %v2729 = vpack.c.b16 %v2161, %v2153
    %v2730 = vpack.c.b16 %v2162, %v2154
    %v2731 = vpack.c.b16 %v2163, %v2155
    %v2732 = vpack.c.b16 %v2164, %v2156
    %v2733 = vpack.c.b16 %v2165, %v2157
    %v2734 = vpack.c.b16 %v2166, %v2158
    %v2735 = vpack.c.b16 %v2167, %v2159
    %v2736 = vpack.c.b16 %v2176, %v2168
    %v2737 = vpack.c.b16 %v2177, %v2169
    %v2738 = vpack.c.b16 %v2178, %v2170
    %v2739 = vpack.c.b16 %v2179, %v2171
    %v2740 = vpack.c.b16 %v2180, %v2172
    %v2741 = vpack.c.b16 %v2181, %v2173
    %v2742 = vpack.c.b16 %v2182, %v2174
    %v2743 = vpack.c.b16 %v2183, %v2175
    %v2744 = vpack.c.b16 %v2192, %v2184
    %v2745 = vpack.c.b16 %v2193, %v2185
    %v2746 = vpack.c.b16 %v2194, %v2186
    %v2747 = vpack.c.b16 %v2195, %v2187
    %v2748 = vpack.c.b16 %v2196, %v2188
    %v2749 = vpack.c.b16 %v2197, %v2189
    %v2750 = vpack.c.b16 %v2198, %v2190
    %v2751 = vpack.c.b16 %v2199, %v2191
    %v2752 = vpack.c.b16 %v2208, %v2200
    %v2753 = vpack.c.b16 %v2209, %v2201
    %v2754 = vpack.c.b16 %v2210, %v2202
    %v2755 = vpack.c.b16 %v2211, %v2203
    %v2756 = vpack.c.b16 %v2212, %v2204
    %v2757 = vpack.c.b16 %v2213, %v2205
    %v2758 = vpack.c.b16 %v2214, %v2206
    %v2759 = vpack.c.b16 %v2215, %v2207
    %v2760 = vpack.c.b16 %v2224, %v2216
    %v2761 = vpack.c.b16 %v2225, %v2217
    %v2762 = vpack.c.b16 %v2226, %v2218
    %v2763 = vpack.c.b16 %v2227, %v2219
    %v2764 = vpack.c.b16 %v2228, %v2220
    %v2765 = vpack.c.b16 %v2229, %v2221
    %v2766 = vpack.c.b16 %v2230, %v2222
    %v2767 = vpack.c.b16 %v2231, %v2223
    %v2768 = vpack.c.b16 %v2240, %v2232
    %v2769 = vpack.c.b16 %v2241, %v2233
    %v2770 = vpack.c.b16 %v2242, %v2234
    %v2771 = vpack.c.b16 %v2243, %v2235
    %v2772 = vpack.c.b16 %v2244, %v2236
    %v2773 = vpack.c.b16 %v2245, %v2237
    %v2774 = vpack.c.b16 %v2246, %v2238
    %v2775 = vpack.c.b16 %v2247, %v2239
    %v2776 = vpack.c.b16 %v2256, %v2248
    %v2777 = vpack.c.b16 %v2257, %v2249
    %v2778 = vpack.c.b16 %v2258, %v2250
    %v2779 = vpack.c.b16 %v2259, %v2251
    %v2780 = vpack.c.b16 %v2260, %v2252
    %v2781 = vpack.c.b16 %v2261, %v2253
    %v2782 = vpack.c.b16 %v2262, %v2254
    %v2783 = vpack.c.b16 %v2263, %v2255
    %v2784 = vpack.c.b16 %v2272, %v2264
    %v2785 = vpack.c.b16 %v2273, %v2265
    %v2786 = vpack.c.b16 %v2274, %v2266
    %v2787 = vpack.c.b16 %v2275, %v2267
    %v2788 = vpack.c.b16 %v2276, %v2268
    %v2789 = vpack.c.b16 %v2277, %v2269
    %v2790 = vpack.c.b16 %v2278, %v2270
    %v2791 = vpack.c.b16 %v2279, %v2271
    %3304 = vmatpush.bf16.msra.mxu0 %v2336
    %3305 = vmatpush.bf16.msra.mxu0 %v2328
    %3306 = vmatpush.bf16.msra.mxu0 %v2320
    %3307 = vmatpush.bf16.msra.mxu0 %v2312
    %3308 = vmatpush.bf16.msra.mxu0 %v2304
    %3309 = vmatpush.bf16.msra.mxu0 %v2296
    %3310 = vmatpush.bf16.msra.mxu0 %v2288
    %3311 = vmatpush.bf16.msra.mxu0 %v2280
    %3312 = vmatmul.bf16.gmra.mxu0 %v728
    %v3313 = vpop.f32.mrf.mxu0
    %v3314 = vadd.f32 %v700, %v3313
    %v3315 = vpop.f32.mrf.mxu0
    %3316 = vdwg.mxu0
    %3317 = vmatpush.bf16.msra.mxu0 %v2400
    %3318 = vmatpush.bf16.msra.mxu0 %v2392
    %3319 = vmatpush.bf16.msra.mxu0 %v2384
    %3320 = vmatpush.bf16.msra.mxu0 %v2376
    %3321 = vmatpush.bf16.msra.mxu0 %v2368
    %3322 = vmatpush.bf16.msra.mxu0 %v2360
    %3323 = vmatpush.bf16.msra.mxu0 %v2352
    %3324 = vmatpush.bf16.msra.mxu0 %v2344
    %3325 = vmatmul.bf16.gmra.mxu0 %v729
    %v3326 = vpop.f32.mrf.mxu0
    %v3327 = vadd.f32 %v3314, %v3326
    %v3328 = vpop.f32.mrf.mxu0
    %3329 = vdwg.mxu0
    %3330 = vmatpush.bf16.msra.mxu0 %v2464
    %3331 = vmatpush.bf16.msra.mxu0 %v2456
    %3332 = vmatpush.bf16.msra.mxu0 %v2448
    %3333 = vmatpush.bf16.msra.mxu0 %v2440
    %3334 = vmatpush.bf16.msra.mxu0 %v2432
    %3335 = vmatpush.bf16.msra.mxu0 %v2424
    %3336 = vmatpush.bf16.msra.mxu0 %v2416
    %3337 = vmatpush.bf16.msra.mxu0 %v2408
    %3338 = vmatmul.bf16.gmra.mxu0 %v730
    %v3339 = vpop.f32.mrf.mxu0
    %v3340 = vadd.f32 %v3327, %v3339
    %v3341 = vpop.f32.mrf.mxu0
    %3342 = vdwg.mxu0
    %3343 = vmatpush.bf16.msra.mxu0 %v2528
    %3344 = vmatpush.bf16.msra.mxu0 %v2520
    %3345 = vmatpush.bf16.msra.mxu0 %v2512
    %3346 = vmatpush.bf16.msra.mxu0 %v2504
    %3347 = vmatpush.bf16.msra.mxu0 %v2496
    %3348 = vmatpush.bf16.msra.mxu0 %v2488
    %3349 = vmatpush.bf16.msra.mxu0 %v2480
    %3350 = vmatpush.bf16.msra.mxu0 %v2472
    %3351 = vmatmul.bf16.gmra.mxu0 %v731
    %v3352 = vpop.f32.mrf.mxu0
    %v3353 = vadd.f32 %v3340, %v3352
    %v3354 = vpop.f32.mrf.mxu0
    %3355 = vdwg.mxu0
    %3356 = vmatpush.bf16.msra.mxu0 %v2592
    %3357 = vmatpush.bf16.msra.mxu0 %v2584
    %3358 = vmatpush.bf16.msra.mxu0 %v2576
    %3359 = vmatpush.bf16.msra.mxu0 %v2568
    %3360 = vmatpush.bf16.msra.mxu0 %v2560
    %3361 = vmatpush.bf16.msra.mxu0 %v2552
    %3362 = vmatpush.bf16.msra.mxu0 %v2544
    %3363 = vmatpush.bf16.msra.mxu0 %v2536
    %3364 = vmatmul.bf16.gmra.mxu0 %v732
    %v3365 = vpop.f32.mrf.mxu0
    %v3366 = vadd.f32 %v3353, %v3365
    %v3367 = vpop.f32.mrf.mxu0
    %3368 = vdwg.mxu0
    %3369 = vmatpush.bf16.msra.mxu0 %v2656
    %3370 = vmatpush.bf16.msra.mxu0 %v2648
    %3371 = vmatpush.bf16.msra.mxu0 %v2640
    %3372 = vmatpush.bf16.msra.mxu0 %v2632
    %3373 = vmatpush.bf16.msra.mxu0 %v2624
    %3374 = vmatpush.bf16.msra.mxu0 %v2616
    %3375 = vmatpush.bf16.msra.mxu0 %v2608
    %3376 = vmatpush.bf16.msra.mxu0 %v2600
    %3377 = vmatmul.bf16.gmra.mxu0 %v733
    %v3378 = vpop.f32.mrf.mxu0
    %v3379 = vadd.f32 %v3366, %v3378
    %v3380 = vpop.f32.mrf.mxu0
    %3381 = vdwg.mxu0
    %3382 = vmatpush.bf16.msra.mxu0 %v2720
    %3383 = vmatpush.bf16.msra.mxu0 %v2712
    %3384 = vmatpush.bf16.msra.mxu0 %v2704
    %3385 = vmatpush.bf16.msra.mxu0 %v2696
    %3386 = vmatpush.bf16.msra.mxu0 %v2688
    %3387 = vmatpush.bf16.msra.mxu0 %v2680
    %3388 = vmatpush.bf16.msra.mxu0 %v2672
    %3389 = vmatpush.bf16.msra.mxu0 %v2664
    %3390 = vmatmul.bf16.gmra.mxu0 %v734
    %v3391 = vpop.f32.mrf.mxu0
    %v3392 = vadd.f32 %v3379, %v3391
    %v3393 = vpop.f32.mrf.mxu0
    %3394 = vdwg.mxu0
    %3395 = vmatpush.bf16.msra.mxu0 %v2784
    %3396 = vmatpush.bf16.msra.mxu0 %v2776
    %3397 = vmatpush.bf16.msra.mxu0 %v2768
    %3398 = vmatpush.bf16.msra.mxu0 %v2760
    %3399 = vmatpush.bf16.msra.mxu0 %v2752
    %3400 = vmatpush.bf16.msra.mxu0 %v2744
    %3401 = vmatpush.bf16.msra.mxu0 %v2736
    %3402 = vmatpush.bf16.msra.mxu0 %v2728
    %3403 = vmatmul.bf16.gmra.mxu0 %v735
    %v3404 = vpop.f32.mrf.mxu0
    %v3405 = vadd.f32 %v3392, %v3404
    %v3406 = vpop.f32.mrf.mxu0
    %3407 = vdwg.mxu0
    %3408 = vmatpush.bf16.msra.mxu0 %v2337
    %3409 = vmatpush.bf16.msra.mxu0 %v2329
    %3410 = vmatpush.bf16.msra.mxu0 %v2321
    %3411 = vmatpush.bf16.msra.mxu0 %v2313
    %3412 = vmatpush.bf16.msra.mxu0 %v2305
    %3413 = vmatpush.bf16.msra.mxu0 %v2297
    %3414 = vmatpush.bf16.msra.mxu0 %v2289
    %3415 = vmatpush.bf16.msra.mxu0 %v2281
    %3416 = vmatmul.bf16.gmra.mxu0 %v728
    %v3417 = vpop.f32.mrf.mxu0
    %v3418 = vadd.f32 %v701, %v3417
    %v3419 = vpop.f32.mrf.mxu0
    %3420 = vdwg.mxu0
    %3421 = vmatpush.bf16.msra.mxu0 %v2401
    %3422 = vmatpush.bf16.msra.mxu0 %v2393
    %3423 = vmatpush.bf16.msra.mxu0 %v2385
    %3424 = vmatpush.bf16.msra.mxu0 %v2377
    %3425 = vmatpush.bf16.msra.mxu0 %v2369
    %3426 = vmatpush.bf16.msra.mxu0 %v2361
    %3427 = vmatpush.bf16.msra.mxu0 %v2353
    %3428 = vmatpush.bf16.msra.mxu0 %v2345
    %3429 = vmatmul.bf16.gmra.mxu0 %v729
    %v3430 = vpop.f32.mrf.mxu0
    %v3431 = vadd.f32 %v3418, %v3430
    %v3432 = vpop.f32.mrf.mxu0
    %3433 = vdwg.mxu0
    %3434 = vmatpush.bf16.msra.mxu0 %v2465
    %3435 = vmatpush.bf16.msra.mxu0 %v2457
    %3436 = vmatpush.bf16.msra.mxu0 %v2449
    %3437 = vmatpush.bf16.msra.mxu0 %v2441
    %3438 = vmatpush.bf16.msra.mxu0 %v2433
    %3439 = vmatpush.bf16.msra.mxu0 %v2425
    %3440 = vmatpush.bf16.msra.mxu0 %v2417
    %3441 = vmatpush.bf16.msra.mxu0 %v2409
    %3442 = vmatmul.bf16.gmra.mxu0 %v730
    %v3443 = vpop.f32.mrf.mxu0
    %v3444 = vadd.f32 %v3431, %v3443
    %v3445 = vpop.f32.mrf.mxu0
    %3446 = vdwg.mxu0
    %3447 = vmatpush.bf16.msra.mxu0 %v2529
    %3448 = vmatpush.bf16.msra.mxu0 %v2521
    %3449 = vmatpush.bf16.msra.mxu0 %v2513
    %3450 = vmatpush.bf16.msra.mxu0 %v2505
    %3451 = vmatpush.bf16.msra.mxu0 %v2497
    %3452 = vmatpush.bf16.msra.mxu0 %v2489
    %3453 = vmatpush.bf16.msra.mxu0 %v2481
    %3454 = vmatpush.bf16.msra.mxu0 %v2473
    %3455 = vmatmul.bf16.gmra.mxu0 %v731
    %v3456 = vpop.f32.mrf.mxu0
    %v3457 = vadd.f32 %v3444, %v3456
    %v3458 = vpop.f32.mrf.mxu0
    %3459 = vdwg.mxu0
    %3460 = vmatpush.bf16.msra.mxu0 %v2593
    %3461 = vmatpush.bf16.msra.mxu0 %v2585
    %3462 = vmatpush.bf16.msra.mxu0 %v2577
    %3463 = vmatpush.bf16.msra.mxu0 %v2569
    %3464 = vmatpush.bf16.msra.mxu0 %v2561
    %3465 = vmatpush.bf16.msra.mxu0 %v2553
    %3466 = vmatpush.bf16.msra.mxu0 %v2545
    %3467 = vmatpush.bf16.msra.mxu0 %v2537
    %3468 = vmatmul.bf16.gmra.mxu0 %v732
    %v3469 = vpop.f32.mrf.mxu0
    %v3470 = vadd.f32 %v3457, %v3469
    %v3471 = vpop.f32.mrf.mxu0
    %3472 = vdwg.mxu0
    %3473 = vmatpush.bf16.msra.mxu0 %v2657
    %3474 = vmatpush.bf16.msra.mxu0 %v2649
    %3475 = vmatpush.bf16.msra.mxu0 %v2641
    %3476 = vmatpush.bf16.msra.mxu0 %v2633
    %3477 = vmatpush.bf16.msra.mxu0 %v2625
    %3478 = vmatpush.bf16.msra.mxu0 %v2617
    %3479 = vmatpush.bf16.msra.mxu0 %v2609
    %3480 = vmatpush.bf16.msra.mxu0 %v2601
    %3481 = vmatmul.bf16.gmra.mxu0 %v733
    %v3482 = vpop.f32.mrf.mxu0
    %v3483 = vadd.f32 %v3470, %v3482
    %v3484 = vpop.f32.mrf.mxu0
    %3485 = vdwg.mxu0
    %3486 = vmatpush.bf16.msra.mxu0 %v2721
    %3487 = vmatpush.bf16.msra.mxu0 %v2713
    %3488 = vmatpush.bf16.msra.mxu0 %v2705
    %3489 = vmatpush.bf16.msra.mxu0 %v2697
    %3490 = vmatpush.bf16.msra.mxu0 %v2689
    %3491 = vmatpush.bf16.msra.mxu0 %v2681
    %3492 = vmatpush.bf16.msra.mxu0 %v2673
    %3493 = vmatpush.bf16.msra.mxu0 %v2665
    %3494 = vmatmul.bf16.gmra.mxu0 %v734
    %v3495 = vpop.f32.mrf.mxu0
    %v3496 = vadd.f32 %v3483, %v3495
    %v3497 = vpop.f32.mrf.mxu0
    %3498 = vdwg.mxu0
    %3499 = vmatpush.bf16.msra.mxu0 %v2785
    %3500 = vmatpush.bf16.msra.mxu0 %v2777
    %3501 = vmatpush.bf16.msra.mxu0 %v2769
    %3502 = vmatpush.bf16.msra.mxu0 %v2761
    %3503 = vmatpush.bf16.msra.mxu0 %v2753
    %3504 = vmatpush.bf16.msra.mxu0 %v2745
    %3505 = vmatpush.bf16.msra.mxu0 %v2737
    %3506 = vmatpush.bf16.msra.mxu0 %v2729
    %3507 = vmatmul.bf16.gmra.mxu0 %v735
    %v3508 = vpop.f32.mrf.mxu0
    %v3509 = vadd.f32 %v3496, %v3508
    %v3510 = vpop.f32.mrf.mxu0
    %3511 = vdwg.mxu0
    %3512 = vmatpush.bf16.msra.mxu0 %v2338
    %3513 = vmatpush.bf16.msra.mxu0 %v2330
    %3514 = vmatpush.bf16.msra.mxu0 %v2322
    %3515 = vmatpush.bf16.msra.mxu0 %v2314
    %3516 = vmatpush.bf16.msra.mxu0 %v2306
    %3517 = vmatpush.bf16.msra.mxu0 %v2298
    %3518 = vmatpush.bf16.msra.mxu0 %v2290
    %3519 = vmatpush.bf16.msra.mxu0 %v2282
    %3520 = vmatmul.bf16.gmra.mxu0 %v728
    %v3521 = vpop.f32.mrf.mxu0
    %v3522 = vadd.f32 %v702, %v3521
    %v3523 = vpop.f32.mrf.mxu0
    %3524 = vdwg.mxu0
    %3525 = vmatpush.bf16.msra.mxu0 %v2402
    %3526 = vmatpush.bf16.msra.mxu0 %v2394
    %3527 = vmatpush.bf16.msra.mxu0 %v2386
    %3528 = vmatpush.bf16.msra.mxu0 %v2378
    %3529 = vmatpush.bf16.msra.mxu0 %v2370
    %3530 = vmatpush.bf16.msra.mxu0 %v2362
    %3531 = vmatpush.bf16.msra.mxu0 %v2354
    %3532 = vmatpush.bf16.msra.mxu0 %v2346
    %3533 = vmatmul.bf16.gmra.mxu0 %v729
    %v3534 = vpop.f32.mrf.mxu0
    %v3535 = vadd.f32 %v3522, %v3534
    %v3536 = vpop.f32.mrf.mxu0
    %3537 = vdwg.mxu0
    %3538 = vmatpush.bf16.msra.mxu0 %v2466
    %3539 = vmatpush.bf16.msra.mxu0 %v2458
    %3540 = vmatpush.bf16.msra.mxu0 %v2450
    %3541 = vmatpush.bf16.msra.mxu0 %v2442
    %3542 = vmatpush.bf16.msra.mxu0 %v2434
    %3543 = vmatpush.bf16.msra.mxu0 %v2426
    %3544 = vmatpush.bf16.msra.mxu0 %v2418
    %3545 = vmatpush.bf16.msra.mxu0 %v2410
    %3546 = vmatmul.bf16.gmra.mxu0 %v730
    %v3547 = vpop.f32.mrf.mxu0
    %v3548 = vadd.f32 %v3535, %v3547
    %v3549 = vpop.f32.mrf.mxu0
    %3550 = vdwg.mxu0
    %3551 = vmatpush.bf16.msra.mxu0 %v2530
    %3552 = vmatpush.bf16.msra.mxu0 %v2522
    %3553 = vmatpush.bf16.msra.mxu0 %v2514
    %3554 = vmatpush.bf16.msra.mxu0 %v2506
    %3555 = vmatpush.bf16.msra.mxu0 %v2498
    %3556 = vmatpush.bf16.msra.mxu0 %v2490
    %3557 = vmatpush.bf16.msra.mxu0 %v2482
    %3558 = vmatpush.bf16.msra.mxu0 %v2474
    %3559 = vmatmul.bf16.gmra.mxu0 %v731
    %v3560 = vpop.f32.mrf.mxu0
    %v3561 = vadd.f32 %v3548, %v3560
    %v3562 = vpop.f32.mrf.mxu0
    %3563 = vdwg.mxu0
    %3564 = vmatpush.bf16.msra.mxu0 %v2594
    %3565 = vmatpush.bf16.msra.mxu0 %v2586
    %3566 = vmatpush.bf16.msra.mxu0 %v2578
    %3567 = vmatpush.bf16.msra.mxu0 %v2570
    %3568 = vmatpush.bf16.msra.mxu0 %v2562
    %3569 = vmatpush.bf16.msra.mxu0 %v2554
    %3570 = vmatpush.bf16.msra.mxu0 %v2546
    %3571 = vmatpush.bf16.msra.mxu0 %v2538
    %3572 = vmatmul.bf16.gmra.mxu0 %v732
    %v3573 = vpop.f32.mrf.mxu0
    %v3574 = vadd.f32 %v3561, %v3573
    %v3575 = vpop.f32.mrf.mxu0
    %3576 = vdwg.mxu0
    %3577 = vmatpush.bf16.msra.mxu0 %v2658
    %3578 = vmatpush.bf16.msra.mxu0 %v2650
    %3579 = vmatpush.bf16.msra.mxu0 %v2642
    %3580 = vmatpush.bf16.msra.mxu0 %v2634
    %3581 = vmatpush.bf16.msra.mxu0 %v2626
    %3582 = vmatpush.bf16.msra.mxu0 %v2618
    %3583 = vmatpush.bf16.msra.mxu0 %v2610
    %3584 = vmatpush.bf16.msra.mxu0 %v2602
    %3585 = vmatmul.bf16.gmra.mxu0 %v733
    %v3586 = vpop.f32.mrf.mxu0
    %v3587 = vadd.f32 %v3574, %v3586
    %v3588 = vpop.f32.mrf.mxu0
    %3589 = vdwg.mxu0
    %3590 = vmatpush.bf16.msra.mxu0 %v2722
    %3591 = vmatpush.bf16.msra.mxu0 %v2714
    %3592 = vmatpush.bf16.msra.mxu0 %v2706
    %3593 = vmatpush.bf16.msra.mxu0 %v2698
    %3594 = vmatpush.bf16.msra.mxu0 %v2690
    %3595 = vmatpush.bf16.msra.mxu0 %v2682
    %3596 = vmatpush.bf16.msra.mxu0 %v2674
    %3597 = vmatpush.bf16.msra.mxu0 %v2666
    %3598 = vmatmul.bf16.gmra.mxu0 %v734
    %v3599 = vpop.f32.mrf.mxu0
    %v3600 = vadd.f32 %v3587, %v3599
    %v3601 = vpop.f32.mrf.mxu0
    %3602 = vdwg.mxu0
    %3603 = vmatpush.bf16.msra.mxu0 %v2786
    %3604 = vmatpush.bf16.msra.mxu0 %v2778
    %3605 = vmatpush.bf16.msra.mxu0 %v2770
    %3606 = vmatpush.bf16.msra.mxu0 %v2762
    %3607 = vmatpush.bf16.msra.mxu0 %v2754
    %3608 = vmatpush.bf16.msra.mxu0 %v2746
    %3609 = vmatpush.bf16.msra.mxu0 %v2738
    %3610 = vmatpush.bf16.msra.mxu0 %v2730
    %3611 = vmatmul.bf16.gmra.mxu0 %v735
    %v3612 = vpop.f32.mrf.mxu0
    %v3613 = vadd.f32 %v3600, %v3612
    %v3614 = vpop.f32.mrf.mxu0
    %3615 = vdwg.mxu0
    %3616 = vmatpush.bf16.msra.mxu0 %v2339
    %3617 = vmatpush.bf16.msra.mxu0 %v2331
    %3618 = vmatpush.bf16.msra.mxu0 %v2323
    %3619 = vmatpush.bf16.msra.mxu0 %v2315
    %3620 = vmatpush.bf16.msra.mxu0 %v2307
    %3621 = vmatpush.bf16.msra.mxu0 %v2299
    %3622 = vmatpush.bf16.msra.mxu0 %v2291
    %3623 = vmatpush.bf16.msra.mxu0 %v2283
    %3624 = vmatmul.bf16.gmra.mxu0 %v728
    %v3625 = vpop.f32.mrf.mxu0
    %v3626 = vadd.f32 %v703, %v3625
    %v3627 = vpop.f32.mrf.mxu0
    %3628 = vdwg.mxu0
    %3629 = vmatpush.bf16.msra.mxu0 %v2403
    %3630 = vmatpush.bf16.msra.mxu0 %v2395
    %3631 = vmatpush.bf16.msra.mxu0 %v2387
    %3632 = vmatpush.bf16.msra.mxu0 %v2379
    %3633 = vmatpush.bf16.msra.mxu0 %v2371
    %3634 = vmatpush.bf16.msra.mxu0 %v2363
    %3635 = vmatpush.bf16.msra.mxu0 %v2355
    %3636 = vmatpush.bf16.msra.mxu0 %v2347
    %3637 = vmatmul.bf16.gmra.mxu0 %v729
    %v3638 = vpop.f32.mrf.mxu0
    %v3639 = vadd.f32 %v3626, %v3638
    %v3640 = vpop.f32.mrf.mxu0
    %3641 = vdwg.mxu0
    %3642 = vmatpush.bf16.msra.mxu0 %v2467
    %3643 = vmatpush.bf16.msra.mxu0 %v2459
    %3644 = vmatpush.bf16.msra.mxu0 %v2451
    %3645 = vmatpush.bf16.msra.mxu0 %v2443
    %3646 = vmatpush.bf16.msra.mxu0 %v2435
    %3647 = vmatpush.bf16.msra.mxu0 %v2427
    %3648 = vmatpush.bf16.msra.mxu0 %v2419
    %3649 = vmatpush.bf16.msra.mxu0 %v2411
    %3650 = vmatmul.bf16.gmra.mxu0 %v730
    %v3651 = vpop.f32.mrf.mxu0
    %v3652 = vadd.f32 %v3639, %v3651
    %v3653 = vpop.f32.mrf.mxu0
    %3654 = vdwg.mxu0
    %3655 = vmatpush.bf16.msra.mxu0 %v2531
    %3656 = vmatpush.bf16.msra.mxu0 %v2523
    %3657 = vmatpush.bf16.msra.mxu0 %v2515
    %3658 = vmatpush.bf16.msra.mxu0 %v2507
    %3659 = vmatpush.bf16.msra.mxu0 %v2499
    %3660 = vmatpush.bf16.msra.mxu0 %v2491
    %3661 = vmatpush.bf16.msra.mxu0 %v2483
    %3662 = vmatpush.bf16.msra.mxu0 %v2475
    %3663 = vmatmul.bf16.gmra.mxu0 %v731
    %v3664 = vpop.f32.mrf.mxu0
    %v3665 = vadd.f32 %v3652, %v3664
    %v3666 = vpop.f32.mrf.mxu0
    %3667 = vdwg.mxu0
    %3668 = vmatpush.bf16.msra.mxu0 %v2595
    %3669 = vmatpush.bf16.msra.mxu0 %v2587
    %3670 = vmatpush.bf16.msra.mxu0 %v2579
    %3671 = vmatpush.bf16.msra.mxu0 %v2571
    %3672 = vmatpush.bf16.msra.mxu0 %v2563
    %3673 = vmatpush.bf16.msra.mxu0 %v2555
    %3674 = vmatpush.bf16.msra.mxu0 %v2547
    %3675 = vmatpush.bf16.msra.mxu0 %v2539
    %3676 = vmatmul.bf16.gmra.mxu0 %v732
    %v3677 = vpop.f32.mrf.mxu0
    %v3678 = vadd.f32 %v3665, %v3677
    %v3679 = vpop.f32.mrf.mxu0
    %3680 = vdwg.mxu0
    %3681 = vmatpush.bf16.msra.mxu0 %v2659
    %3682 = vmatpush.bf16.msra.mxu0 %v2651
    %3683 = vmatpush.bf16.msra.mxu0 %v2643
    %3684 = vmatpush.bf16.msra.mxu0 %v2635
    %3685 = vmatpush.bf16.msra.mxu0 %v2627
    %3686 = vmatpush.bf16.msra.mxu0 %v2619
    %3687 = vmatpush.bf16.msra.mxu0 %v2611
    %3688 = vmatpush.bf16.msra.mxu0 %v2603
    %3689 = vmatmul.bf16.gmra.mxu0 %v733
    %v3690 = vpop.f32.mrf.mxu0
    %v3691 = vadd.f32 %v3678, %v3690
    %v3692 = vpop.f32.mrf.mxu0
    %3693 = vdwg.mxu0
    %3694 = vmatpush.bf16.msra.mxu0 %v2723
    %3695 = vmatpush.bf16.msra.mxu0 %v2715
    %3696 = vmatpush.bf16.msra.mxu0 %v2707
    %3697 = vmatpush.bf16.msra.mxu0 %v2699
    %3698 = vmatpush.bf16.msra.mxu0 %v2691
    %3699 = vmatpush.bf16.msra.mxu0 %v2683
    %3700 = vmatpush.bf16.msra.mxu0 %v2675
    %3701 = vmatpush.bf16.msra.mxu0 %v2667
    %3702 = vmatmul.bf16.gmra.mxu0 %v734
    %v3703 = vpop.f32.mrf.mxu0
    %v3704 = vadd.f32 %v3691, %v3703
    %v3705 = vpop.f32.mrf.mxu0
    %3706 = vdwg.mxu0
    %3707 = vmatpush.bf16.msra.mxu0 %v2787
    %3708 = vmatpush.bf16.msra.mxu0 %v2779
    %3709 = vmatpush.bf16.msra.mxu0 %v2771
    %3710 = vmatpush.bf16.msra.mxu0 %v2763
    %3711 = vmatpush.bf16.msra.mxu0 %v2755
    %3712 = vmatpush.bf16.msra.mxu0 %v2747
    %3713 = vmatpush.bf16.msra.mxu0 %v2739
    %3714 = vmatpush.bf16.msra.mxu0 %v2731
    %3715 = vmatmul.bf16.gmra.mxu0 %v735
    %v3716 = vpop.f32.mrf.mxu0
    %v3717 = vadd.f32 %v3704, %v3716
    %v3718 = vpop.f32.mrf.mxu0
    %3719 = vdwg.mxu0
    %3720 = vmatpush.bf16.msra.mxu0 %v2340
    %3721 = vmatpush.bf16.msra.mxu0 %v2332
    %3722 = vmatpush.bf16.msra.mxu0 %v2324
    %3723 = vmatpush.bf16.msra.mxu0 %v2316
    %3724 = vmatpush.bf16.msra.mxu0 %v2308
    %3725 = vmatpush.bf16.msra.mxu0 %v2300
    %3726 = vmatpush.bf16.msra.mxu0 %v2292
    %3727 = vmatpush.bf16.msra.mxu0 %v2284
    %3728 = vmatmul.bf16.gmra.mxu0 %v728
    %v3729 = vpop.f32.mrf.mxu0
    %v3730 = vadd.f32 %v704, %v3729
    %v3731 = vpop.f32.mrf.mxu0
    %3732 = vdwg.mxu0
    %3733 = vmatpush.bf16.msra.mxu0 %v2404
    %3734 = vmatpush.bf16.msra.mxu0 %v2396
    %3735 = vmatpush.bf16.msra.mxu0 %v2388
    %3736 = vmatpush.bf16.msra.mxu0 %v2380
    %3737 = vmatpush.bf16.msra.mxu0 %v2372
    %3738 = vmatpush.bf16.msra.mxu0 %v2364
    %3739 = vmatpush.bf16.msra.mxu0 %v2356
    %3740 = vmatpush.bf16.msra.mxu0 %v2348
    %3741 = vmatmul.bf16.gmra.mxu0 %v729
    %v3742 = vpop.f32.mrf.mxu0
    %v3743 = vadd.f32 %v3730, %v3742
    %v3744 = vpop.f32.mrf.mxu0
    %3745 = vdwg.mxu0
    %3746 = vmatpush.bf16.msra.mxu0 %v2468
    %3747 = vmatpush.bf16.msra.mxu0 %v2460
    %3748 = vmatpush.bf16.msra.mxu0 %v2452
    %3749 = vmatpush.bf16.msra.mxu0 %v2444
    %3750 = vmatpush.bf16.msra.mxu0 %v2436
    %3751 = vmatpush.bf16.msra.mxu0 %v2428
    %3752 = vmatpush.bf16.msra.mxu0 %v2420
    %3753 = vmatpush.bf16.msra.mxu0 %v2412
    %3754 = vmatmul.bf16.gmra.mxu0 %v730
    %v3755 = vpop.f32.mrf.mxu0
    %v3756 = vadd.f32 %v3743, %v3755
    %v3757 = vpop.f32.mrf.mxu0
    %3758 = vdwg.mxu0
    %3759 = vmatpush.bf16.msra.mxu0 %v2532
    %3760 = vmatpush.bf16.msra.mxu0 %v2524
    %3761 = vmatpush.bf16.msra.mxu0 %v2516
    %3762 = vmatpush.bf16.msra.mxu0 %v2508
    %3763 = vmatpush.bf16.msra.mxu0 %v2500
    %3764 = vmatpush.bf16.msra.mxu0 %v2492
    %3765 = vmatpush.bf16.msra.mxu0 %v2484
    %3766 = vmatpush.bf16.msra.mxu0 %v2476
    %3767 = vmatmul.bf16.gmra.mxu0 %v731
    %v3768 = vpop.f32.mrf.mxu0
    %v3769 = vadd.f32 %v3756, %v3768
    %v3770 = vpop.f32.mrf.mxu0
    %3771 = vdwg.mxu0
    %3772 = vmatpush.bf16.msra.mxu0 %v2596
    %3773 = vmatpush.bf16.msra.mxu0 %v2588
    %3774 = vmatpush.bf16.msra.mxu0 %v2580
    %3775 = vmatpush.bf16.msra.mxu0 %v2572
    %3776 = vmatpush.bf16.msra.mxu0 %v2564
    %3777 = vmatpush.bf16.msra.mxu0 %v2556
    %3778 = vmatpush.bf16.msra.mxu0 %v2548
    %3779 = vmatpush.bf16.msra.mxu0 %v2540
    %3780 = vmatmul.bf16.gmra.mxu0 %v732
    %v3781 = vpop.f32.mrf.mxu0
    %v3782 = vadd.f32 %v3769, %v3781
    %v3783 = vpop.f32.mrf.mxu0
    %3784 = vdwg.mxu0
    %3785 = vmatpush.bf16.msra.mxu0 %v2660
    %3786 = vmatpush.bf16.msra.mxu0 %v2652
    %3787 = vmatpush.bf16.msra.mxu0 %v2644
    %3788 = vmatpush.bf16.msra.mxu0 %v2636
    %3789 = vmatpush.bf16.msra.mxu0 %v2628
    %3790 = vmatpush.bf16.msra.mxu0 %v2620
    %3791 = vmatpush.bf16.msra.mxu0 %v2612
    %3792 = vmatpush.bf16.msra.mxu0 %v2604
    %3793 = vmatmul.bf16.gmra.mxu0 %v733
    %v3794 = vpop.f32.mrf.mxu0
    %v3795 = vadd.f32 %v3782, %v3794
    %v3796 = vpop.f32.mrf.mxu0
    %3797 = vdwg.mxu0
    %3798 = vmatpush.bf16.msra.mxu0 %v2724
    %3799 = vmatpush.bf16.msra.mxu0 %v2716
    %3800 = vmatpush.bf16.msra.mxu0 %v2708
    %3801 = vmatpush.bf16.msra.mxu0 %v2700
    %3802 = vmatpush.bf16.msra.mxu0 %v2692
    %3803 = vmatpush.bf16.msra.mxu0 %v2684
    %3804 = vmatpush.bf16.msra.mxu0 %v2676
    %3805 = vmatpush.bf16.msra.mxu0 %v2668
    %3806 = vmatmul.bf16.gmra.mxu0 %v734
    %v3807 = vpop.f32.mrf.mxu0
    %v3808 = vadd.f32 %v3795, %v3807
    %v3809 = vpop.f32.mrf.mxu0
    %3810 = vdwg.mxu0
    %3811 = vmatpush.bf16.msra.mxu0 %v2788
    %3812 = vmatpush.bf16.msra.mxu0 %v2780
    %3813 = vmatpush.bf16.msra.mxu0 %v2772
    %3814 = vmatpush.bf16.msra.mxu0 %v2764
    %3815 = vmatpush.bf16.msra.mxu0 %v2756
    %3816 = vmatpush.bf16.msra.mxu0 %v2748
    %3817 = vmatpush.bf16.msra.mxu0 %v2740
    %3818 = vmatpush.bf16.msra.mxu0 %v2732
    %3819 = vmatmul.bf16.gmra.mxu0 %v735
    %v3820 = vpop.f32.mrf.mxu0
    %v3821 = vadd.f32 %v3808, %v3820
    %v3822 = vpop.f32.mrf.mxu0
    %3823 = vdwg.mxu0
    %3824 = vmatpush.bf16.msra.mxu0 %v2341
    %3825 = vmatpush.bf16.msra.mxu0 %v2333
    %3826 = vmatpush.bf16.msra.mxu0 %v2325
    %3827 = vmatpush.bf16.msra.mxu0 %v2317
    %3828 = vmatpush.bf16.msra.mxu0 %v2309
    %3829 = vmatpush.bf16.msra.mxu0 %v2301
    %3830 = vmatpush.bf16.msra.mxu0 %v2293
    %3831 = vmatpush.bf16.msra.mxu0 %v2285
    %3832 = vmatmul.bf16.gmra.mxu0 %v728
    %v3833 = vpop.f32.mrf.mxu0
    %v3834 = vadd.f32 %v705, %v3833
    %v3835 = vpop.f32.mrf.mxu0
    %3836 = vdwg.mxu0
    %3837 = vmatpush.bf16.msra.mxu0 %v2405
    %3838 = vmatpush.bf16.msra.mxu0 %v2397
    %3839 = vmatpush.bf16.msra.mxu0 %v2389
    %3840 = vmatpush.bf16.msra.mxu0 %v2381
    %3841 = vmatpush.bf16.msra.mxu0 %v2373
    %3842 = vmatpush.bf16.msra.mxu0 %v2365
    %3843 = vmatpush.bf16.msra.mxu0 %v2357
    %3844 = vmatpush.bf16.msra.mxu0 %v2349
    %3845 = vmatmul.bf16.gmra.mxu0 %v729
    %v3846 = vpop.f32.mrf.mxu0
    %v3847 = vadd.f32 %v3834, %v3846
    %v3848 = vpop.f32.mrf.mxu0
    %3849 = vdwg.mxu0
    %3850 = vmatpush.bf16.msra.mxu0 %v2469
    %3851 = vmatpush.bf16.msra.mxu0 %v2461
    %3852 = vmatpush.bf16.msra.mxu0 %v2453
    %3853 = vmatpush.bf16.msra.mxu0 %v2445
    %3854 = vmatpush.bf16.msra.mxu0 %v2437
    %3855 = vmatpush.bf16.msra.mxu0 %v2429
    %3856 = vmatpush.bf16.msra.mxu0 %v2421
    %3857 = vmatpush.bf16.msra.mxu0 %v2413
    %3858 = vmatmul.bf16.gmra.mxu0 %v730
    %v3859 = vpop.f32.mrf.mxu0
    %v3860 = vadd.f32 %v3847, %v3859
    %v3861 = vpop.f32.mrf.mxu0
    %3862 = vdwg.mxu0
    %3863 = vmatpush.bf16.msra.mxu0 %v2533
    %3864 = vmatpush.bf16.msra.mxu0 %v2525
    %3865 = vmatpush.bf16.msra.mxu0 %v2517
    %3866 = vmatpush.bf16.msra.mxu0 %v2509
    %3867 = vmatpush.bf16.msra.mxu0 %v2501
    %3868 = vmatpush.bf16.msra.mxu0 %v2493
    %3869 = vmatpush.bf16.msra.mxu0 %v2485
    %3870 = vmatpush.bf16.msra.mxu0 %v2477
    %3871 = vmatmul.bf16.gmra.mxu0 %v731
    %v3872 = vpop.f32.mrf.mxu0
    %v3873 = vadd.f32 %v3860, %v3872
    %v3874 = vpop.f32.mrf.mxu0
    %3875 = vdwg.mxu0
    %3876 = vmatpush.bf16.msra.mxu0 %v2597
    %3877 = vmatpush.bf16.msra.mxu0 %v2589
    %3878 = vmatpush.bf16.msra.mxu0 %v2581
    %3879 = vmatpush.bf16.msra.mxu0 %v2573
    %3880 = vmatpush.bf16.msra.mxu0 %v2565
    %3881 = vmatpush.bf16.msra.mxu0 %v2557
    %3882 = vmatpush.bf16.msra.mxu0 %v2549
    %3883 = vmatpush.bf16.msra.mxu0 %v2541
    %3884 = vmatmul.bf16.gmra.mxu0 %v732
    %v3885 = vpop.f32.mrf.mxu0
    %v3886 = vadd.f32 %v3873, %v3885
    %v3887 = vpop.f32.mrf.mxu0
    %3888 = vdwg.mxu0
    %3889 = vmatpush.bf16.msra.mxu0 %v2661
    %3890 = vmatpush.bf16.msra.mxu0 %v2653
    %3891 = vmatpush.bf16.msra.mxu0 %v2645
    %3892 = vmatpush.bf16.msra.mxu0 %v2637
    %3893 = vmatpush.bf16.msra.mxu0 %v2629
    %3894 = vmatpush.bf16.msra.mxu0 %v2621
    %3895 = vmatpush.bf16.msra.mxu0 %v2613
    %3896 = vmatpush.bf16.msra.mxu0 %v2605
    %3897 = vmatmul.bf16.gmra.mxu0 %v733
    %v3898 = vpop.f32.mrf.mxu0
    %v3899 = vadd.f32 %v3886, %v3898
    %v3900 = vpop.f32.mrf.mxu0
    %3901 = vdwg.mxu0
    %3902 = vmatpush.bf16.msra.mxu0 %v2725
    %3903 = vmatpush.bf16.msra.mxu0 %v2717
    %3904 = vmatpush.bf16.msra.mxu0 %v2709
    %3905 = vmatpush.bf16.msra.mxu0 %v2701
    %3906 = vmatpush.bf16.msra.mxu0 %v2693
    %3907 = vmatpush.bf16.msra.mxu0 %v2685
    %3908 = vmatpush.bf16.msra.mxu0 %v2677
    %3909 = vmatpush.bf16.msra.mxu0 %v2669
    %3910 = vmatmul.bf16.gmra.mxu0 %v734
    %v3911 = vpop.f32.mrf.mxu0
    %v3912 = vadd.f32 %v3899, %v3911
    %v3913 = vpop.f32.mrf.mxu0
    %3914 = vdwg.mxu0
    %3915 = vmatpush.bf16.msra.mxu0 %v2789
    %3916 = vmatpush.bf16.msra.mxu0 %v2781
    %3917 = vmatpush.bf16.msra.mxu0 %v2773
    %3918 = vmatpush.bf16.msra.mxu0 %v2765
    %3919 = vmatpush.bf16.msra.mxu0 %v2757
    %3920 = vmatpush.bf16.msra.mxu0 %v2749
    %3921 = vmatpush.bf16.msra.mxu0 %v2741
    %3922 = vmatpush.bf16.msra.mxu0 %v2733
    %3923 = vmatmul.bf16.gmra.mxu0 %v735
    %v3924 = vpop.f32.mrf.mxu0
    %v3925 = vadd.f32 %v3912, %v3924
    %v3926 = vpop.f32.mrf.mxu0
    %3927 = vdwg.mxu0
    %3928 = vmatpush.bf16.msra.mxu0 %v2342
    %3929 = vmatpush.bf16.msra.mxu0 %v2334
    %3930 = vmatpush.bf16.msra.mxu0 %v2326
    %3931 = vmatpush.bf16.msra.mxu0 %v2318
    %3932 = vmatpush.bf16.msra.mxu0 %v2310
    %3933 = vmatpush.bf16.msra.mxu0 %v2302
    %3934 = vmatpush.bf16.msra.mxu0 %v2294
    %3935 = vmatpush.bf16.msra.mxu0 %v2286
    %3936 = vmatmul.bf16.gmra.mxu0 %v728
    %v3937 = vpop.f32.mrf.mxu0
    %v3938 = vadd.f32 %v706, %v3937
    %v3939 = vpop.f32.mrf.mxu0
    %3940 = vdwg.mxu0
    %3941 = vmatpush.bf16.msra.mxu0 %v2406
    %3942 = vmatpush.bf16.msra.mxu0 %v2398
    %3943 = vmatpush.bf16.msra.mxu0 %v2390
    %3944 = vmatpush.bf16.msra.mxu0 %v2382
    %3945 = vmatpush.bf16.msra.mxu0 %v2374
    %3946 = vmatpush.bf16.msra.mxu0 %v2366
    %3947 = vmatpush.bf16.msra.mxu0 %v2358
    %3948 = vmatpush.bf16.msra.mxu0 %v2350
    %3949 = vmatmul.bf16.gmra.mxu0 %v729
    %v3950 = vpop.f32.mrf.mxu0
    %v3951 = vadd.f32 %v3938, %v3950
    %v3952 = vpop.f32.mrf.mxu0
    %3953 = vdwg.mxu0
    %3954 = vmatpush.bf16.msra.mxu0 %v2470
    %3955 = vmatpush.bf16.msra.mxu0 %v2462
    %3956 = vmatpush.bf16.msra.mxu0 %v2454
    %3957 = vmatpush.bf16.msra.mxu0 %v2446
    %3958 = vmatpush.bf16.msra.mxu0 %v2438
    %3959 = vmatpush.bf16.msra.mxu0 %v2430
    %3960 = vmatpush.bf16.msra.mxu0 %v2422
    %3961 = vmatpush.bf16.msra.mxu0 %v2414
    %3962 = vmatmul.bf16.gmra.mxu0 %v730
    %v3963 = vpop.f32.mrf.mxu0
    %v3964 = vadd.f32 %v3951, %v3963
    %v3965 = vpop.f32.mrf.mxu0
    %3966 = vdwg.mxu0
    %3967 = vmatpush.bf16.msra.mxu0 %v2534
    %3968 = vmatpush.bf16.msra.mxu0 %v2526
    %3969 = vmatpush.bf16.msra.mxu0 %v2518
    %3970 = vmatpush.bf16.msra.mxu0 %v2510
    %3971 = vmatpush.bf16.msra.mxu0 %v2502
    %3972 = vmatpush.bf16.msra.mxu0 %v2494
    %3973 = vmatpush.bf16.msra.mxu0 %v2486
    %3974 = vmatpush.bf16.msra.mxu0 %v2478
    %3975 = vmatmul.bf16.gmra.mxu0 %v731
    %v3976 = vpop.f32.mrf.mxu0
    %v3977 = vadd.f32 %v3964, %v3976
    %v3978 = vpop.f32.mrf.mxu0
    %3979 = vdwg.mxu0
    %3980 = vmatpush.bf16.msra.mxu0 %v2598
    %3981 = vmatpush.bf16.msra.mxu0 %v2590
    %3982 = vmatpush.bf16.msra.mxu0 %v2582
    %3983 = vmatpush.bf16.msra.mxu0 %v2574
    %3984 = vmatpush.bf16.msra.mxu0 %v2566
    %3985 = vmatpush.bf16.msra.mxu0 %v2558
    %3986 = vmatpush.bf16.msra.mxu0 %v2550
    %3987 = vmatpush.bf16.msra.mxu0 %v2542
    %3988 = vmatmul.bf16.gmra.mxu0 %v732
    %v3989 = vpop.f32.mrf.mxu0
    %v3990 = vadd.f32 %v3977, %v3989
    %v3991 = vpop.f32.mrf.mxu0
    %3992 = vdwg.mxu0
    %3993 = vmatpush.bf16.msra.mxu0 %v2662
    %3994 = vmatpush.bf16.msra.mxu0 %v2654
    %3995 = vmatpush.bf16.msra.mxu0 %v2646
    %3996 = vmatpush.bf16.msra.mxu0 %v2638
    %3997 = vmatpush.bf16.msra.mxu0 %v2630
    %3998 = vmatpush.bf16.msra.mxu0 %v2622
    %3999 = vmatpush.bf16.msra.mxu0 %v2614
    %4000 = vmatpush.bf16.msra.mxu0 %v2606
    %4001 = vmatmul.bf16.gmra.mxu0 %v733
    %v4002 = vpop.f32.mrf.mxu0
    %v4003 = vadd.f32 %v3990, %v4002
    %v4004 = vpop.f32.mrf.mxu0
    %4005 = vdwg.mxu0
    %4006 = vmatpush.bf16.msra.mxu0 %v2726
    %4007 = vmatpush.bf16.msra.mxu0 %v2718
    %4008 = vmatpush.bf16.msra.mxu0 %v2710
    %4009 = vmatpush.bf16.msra.mxu0 %v2702
    %4010 = vmatpush.bf16.msra.mxu0 %v2694
    %4011 = vmatpush.bf16.msra.mxu0 %v2686
    %4012 = vmatpush.bf16.msra.mxu0 %v2678
    %4013 = vmatpush.bf16.msra.mxu0 %v2670
    %4014 = vmatmul.bf16.gmra.mxu0 %v734
    %v4015 = vpop.f32.mrf.mxu0
    %v4016 = vadd.f32 %v4003, %v4015
    %v4017 = vpop.f32.mrf.mxu0
    %4018 = vdwg.mxu0
    %4019 = vmatpush.bf16.msra.mxu0 %v2790
    %4020 = vmatpush.bf16.msra.mxu0 %v2782
    %4021 = vmatpush.bf16.msra.mxu0 %v2774
    %4022 = vmatpush.bf16.msra.mxu0 %v2766
    %4023 = vmatpush.bf16.msra.mxu0 %v2758
    %4024 = vmatpush.bf16.msra.mxu0 %v2750
    %4025 = vmatpush.bf16.msra.mxu0 %v2742
    %4026 = vmatpush.bf16.msra.mxu0 %v2734
    %4027 = vmatmul.bf16.gmra.mxu0 %v735
    %v4028 = vpop.f32.mrf.mxu0
    %v4029 = vadd.f32 %v4016, %v4028
    %v4030 = vpop.f32.mrf.mxu0
    %4031 = vdwg.mxu0
    %4032 = vmatpush.bf16.msra.mxu0 %v2343
    %4033 = vmatpush.bf16.msra.mxu0 %v2335
    %4034 = vmatpush.bf16.msra.mxu0 %v2327
    %4035 = vmatpush.bf16.msra.mxu0 %v2319
    %4036 = vmatpush.bf16.msra.mxu0 %v2311
    %4037 = vmatpush.bf16.msra.mxu0 %v2303
    %4038 = vmatpush.bf16.msra.mxu0 %v2295
    %4039 = vmatpush.bf16.msra.mxu0 %v2287
    %4040 = vmatmul.bf16.gmra.mxu0 %v728
    %v4041 = vpop.f32.mrf.mxu0
    %v4042 = vadd.f32 %v707, %v4041
    %v4043 = vpop.f32.mrf.mxu0
    %4044 = vdwg.mxu0
    %4045 = vmatpush.bf16.msra.mxu0 %v2407
    %4046 = vmatpush.bf16.msra.mxu0 %v2399
    %4047 = vmatpush.bf16.msra.mxu0 %v2391
    %4048 = vmatpush.bf16.msra.mxu0 %v2383
    %4049 = vmatpush.bf16.msra.mxu0 %v2375
    %4050 = vmatpush.bf16.msra.mxu0 %v2367
    %4051 = vmatpush.bf16.msra.mxu0 %v2359
    %4052 = vmatpush.bf16.msra.mxu0 %v2351
    %4053 = vmatmul.bf16.gmra.mxu0 %v729
    %v4054 = vpop.f32.mrf.mxu0
    %v4055 = vadd.f32 %v4042, %v4054
    %v4056 = vpop.f32.mrf.mxu0
    %4057 = vdwg.mxu0
    %4058 = vmatpush.bf16.msra.mxu0 %v2471
    %4059 = vmatpush.bf16.msra.mxu0 %v2463
    %4060 = vmatpush.bf16.msra.mxu0 %v2455
    %4061 = vmatpush.bf16.msra.mxu0 %v2447
    %4062 = vmatpush.bf16.msra.mxu0 %v2439
    %4063 = vmatpush.bf16.msra.mxu0 %v2431
    %4064 = vmatpush.bf16.msra.mxu0 %v2423
    %4065 = vmatpush.bf16.msra.mxu0 %v2415
    %4066 = vmatmul.bf16.gmra.mxu0 %v730
    %v4067 = vpop.f32.mrf.mxu0
    %v4068 = vadd.f32 %v4055, %v4067
    %v4069 = vpop.f32.mrf.mxu0
    %4070 = vdwg.mxu0
    %4071 = vmatpush.bf16.msra.mxu0 %v2535
    %4072 = vmatpush.bf16.msra.mxu0 %v2527
    %4073 = vmatpush.bf16.msra.mxu0 %v2519
    %4074 = vmatpush.bf16.msra.mxu0 %v2511
    %4075 = vmatpush.bf16.msra.mxu0 %v2503
    %4076 = vmatpush.bf16.msra.mxu0 %v2495
    %4077 = vmatpush.bf16.msra.mxu0 %v2487
    %4078 = vmatpush.bf16.msra.mxu0 %v2479
    %4079 = vmatmul.bf16.gmra.mxu0 %v731
    %v4080 = vpop.f32.mrf.mxu0
    %v4081 = vadd.f32 %v4068, %v4080
    %v4082 = vpop.f32.mrf.mxu0
    %4083 = vdwg.mxu0
    %4084 = vmatpush.bf16.msra.mxu0 %v2599
    %4085 = vmatpush.bf16.msra.mxu0 %v2591
    %4086 = vmatpush.bf16.msra.mxu0 %v2583
    %4087 = vmatpush.bf16.msra.mxu0 %v2575
    %4088 = vmatpush.bf16.msra.mxu0 %v2567
    %4089 = vmatpush.bf16.msra.mxu0 %v2559
    %4090 = vmatpush.bf16.msra.mxu0 %v2551
    %4091 = vmatpush.bf16.msra.mxu0 %v2543
    %4092 = vmatmul.bf16.gmra.mxu0 %v732
    %v4093 = vpop.f32.mrf.mxu0
    %v4094 = vadd.f32 %v4081, %v4093
    %v4095 = vpop.f32.mrf.mxu0
    %4096 = vdwg.mxu0
    %4097 = vmatpush.bf16.msra.mxu0 %v2663
    %4098 = vmatpush.bf16.msra.mxu0 %v2655
    %4099 = vmatpush.bf16.msra.mxu0 %v2647
    %4100 = vmatpush.bf16.msra.mxu0 %v2639
    %4101 = vmatpush.bf16.msra.mxu0 %v2631
    %4102 = vmatpush.bf16.msra.mxu0 %v2623
    %4103 = vmatpush.bf16.msra.mxu0 %v2615
    %4104 = vmatpush.bf16.msra.mxu0 %v2607
    %4105 = vmatmul.bf16.gmra.mxu0 %v733
    %v4106 = vpop.f32.mrf.mxu0
    %v4107 = vadd.f32 %v4094, %v4106
    %v4108 = vpop.f32.mrf.mxu0
    %4109 = vdwg.mxu0
    %4110 = vmatpush.bf16.msra.mxu0 %v2727
    %4111 = vmatpush.bf16.msra.mxu0 %v2719
    %4112 = vmatpush.bf16.msra.mxu0 %v2711
    %4113 = vmatpush.bf16.msra.mxu0 %v2703
    %4114 = vmatpush.bf16.msra.mxu0 %v2695
    %4115 = vmatpush.bf16.msra.mxu0 %v2687
    %4116 = vmatpush.bf16.msra.mxu0 %v2679
    %4117 = vmatpush.bf16.msra.mxu0 %v2671
    %4118 = vmatmul.bf16.gmra.mxu0 %v734
    %v4119 = vpop.f32.mrf.mxu0
    %v4120 = vadd.f32 %v4107, %v4119
    %v4121 = vpop.f32.mrf.mxu0
    %4122 = vdwg.mxu0
    %4123 = vmatpush.bf16.msra.mxu0 %v2791
    %4124 = vmatpush.bf16.msra.mxu0 %v2783
    %4125 = vmatpush.bf16.msra.mxu0 %v2775
    %4126 = vmatpush.bf16.msra.mxu0 %v2767
    %4127 = vmatpush.bf16.msra.mxu0 %v2759
    %4128 = vmatpush.bf16.msra.mxu0 %v2751
    %4129 = vmatpush.bf16.msra.mxu0 %v2743
    %4130 = vmatpush.bf16.msra.mxu0 %v2735
    %4131 = vmatmul.bf16.gmra.mxu0 %v735
    %v4132 = vpop.f32.mrf.mxu0
    %v4133 = vadd.f32 %v4120, %v4132
    %v4134 = vpop.f32.mrf.mxu0
    %4135 = vdwg.mxu0
    %v4136 = vmax.f32 %v3405, 0.0
    %v4137 = vmax.f32 %v3509, 0.0
    %v4138 = vmax.f32 %v3613, 0.0
    %v4139 = vmax.f32 %v3717, 0.0
    %v4140 = vmax.f32 %v3821, 0.0
    %v4141 = vmax.f32 %v3925, 0.0
    %v4142 = vmax.f32 %v4029, 0.0
    %v4143 = vmax.f32 %v4133, 0.0
    %v4144 = vpack.c.bf16 %v4136, %v4136
    %v4145 = vpack.c.bf16 %v4137, %v4137
    %v4146 = vpack.c.bf16 %v4138, %v4138
    %v4147 = vpack.c.bf16 %v4139, %v4139
    %v4148 = vpack.c.bf16 %v4140, %v4140
    %v4149 = vpack.c.bf16 %v4141, %v4141
    %v4150 = vpack.c.bf16 %v4142, %v4142
    %v4151 = vpack.c.bf16 %v4143, %v4143
    %v4152 = vld [vmem:[#allocation10] sm:$0xf]
    %v4153 = vld [vmem:[#allocation10 + $0x4] sm:$0xf]
    %v4154 = vld [vmem:[#allocation10 + $0x8] sm:$0xf]
    %v4155 = vld [vmem:[#allocation10 + $0xc] sm:$0xf]
    %v4156 = vld [vmem:[#allocation10 + $0x10] sm:$0xf]
    %v4157 = vld [vmem:[#allocation10 + $0x14] sm:$0xf]
    %v4158 = vld [vmem:[#allocation10 + $0x18] sm:$0xf]
    %v4159 = vld [vmem:[#allocation10 + $0x1c] sm:$0xf]
    %v4160 = vld [vmem:[#allocation10 + $0x20] sm:$0xf]
    %v4161 = vld [vmem:[#allocation10 + $0x24] sm:$0xf]
    %v4162 = vld [vmem:[#allocation10 + $0x28] sm:$0xf]
    %v4163 = vld [vmem:[#allocation10 + $0x2c] sm:$0xf]
    %v4164 = vld [vmem:[#allocation10 + $0x30] sm:$0xf]
    %v4165 = vld [vmem:[#allocation10 + $0x34] sm:$0xf]
    %v4166 = vld [vmem:[#allocation10 + $0x38] sm:$0xf]
    %v4167 = vld [vmem:[#allocation10 + $0x3c] sm:$0xf]
    %v4168 = vld [vmem:[#allocation10 + $0x40] sm:$0xf]
    %v4169 = vld [vmem:[#allocation10 + $0x44] sm:$0xf]
    %v4170 = vld [vmem:[#allocation10 + $0x48] sm:$0xf]
    %v4171 = vld [vmem:[#allocation10 + $0x4c] sm:$0xf]
    %v4172 = vld [vmem:[#allocation10 + $0x50] sm:$0xf]
    %v4173 = vld [vmem:[#allocation10 + $0x54] sm:$0xf]
    %v4174 = vld [vmem:[#allocation10 + $0x58] sm:$0xf]
    %v4175 = vld [vmem:[#allocation10 + $0x5c] sm:$0xf]
    %v4176 = vld [vmem:[#allocation10 + $0x60] sm:$0xf]
    %v4177 = vld [vmem:[#allocation10 + $0x64] sm:$0xf]
    %v4178 = vld [vmem:[#allocation10 + $0x68] sm:$0xf]
    %v4179 = vld [vmem:[#allocation10 + $0x6c] sm:$0xf]
    %v4180 = vld [vmem:[#allocation10 + $0x70] sm:$0xf]
    %v4181 = vld [vmem:[#allocation10 + $0x74] sm:$0xf]
    %v4182 = vld [vmem:[#allocation10 + $0x78] sm:$0xf]
    %v4183 = vld [vmem:[#allocation10 + $0x7c] sm:$0xf]
    %v4184 = vld [vmem:[#allocation10 + $0x80] sm:$0xf]
    %v4185 = vld [vmem:[#allocation10 + $0x84] sm:$0xf]
    %v4186 = vld [vmem:[#allocation10 + $0x88] sm:$0xf]
    %v4187 = vld [vmem:[#allocation10 + $0x8c] sm:$0xf]
    %v4188 = vld [vmem:[#allocation10 + $0x90] sm:$0xf]
    %v4189 = vld [vmem:[#allocation10 + $0x94] sm:$0xf]
    %v4190 = vld [vmem:[#allocation10 + $0x98] sm:$0xf]
    %v4191 = vld [vmem:[#allocation10 + $0x9c] sm:$0xf]
    %v4192 = vld [vmem:[#allocation10 + $0xa0] sm:$0xf]
    %v4193 = vld [vmem:[#allocation10 + $0xa4] sm:$0xf]
    %v4194 = vld [vmem:[#allocation10 + $0xa8] sm:$0xf]
    %v4195 = vld [vmem:[#allocation10 + $0xac] sm:$0xf]
    %v4196 = vld [vmem:[#allocation10 + $0xb0] sm:$0xf]
    %v4197 = vld [vmem:[#allocation10 + $0xb4] sm:$0xf]
    %v4198 = vld [vmem:[#allocation10 + $0xb8] sm:$0xf]
    %v4199 = vld [vmem:[#allocation10 + $0xbc] sm:$0xf]
    %v4200 = vld [vmem:[#allocation10 + $0xc0] sm:$0xf]
    %v4201 = vld [vmem:[#allocation10 + $0xc4] sm:$0xf]
    %v4202 = vld [vmem:[#allocation10 + $0xc8] sm:$0xf]
    %v4203 = vld [vmem:[#allocation10 + $0xcc] sm:$0xf]
    %v4204 = vld [vmem:[#allocation10 + $0xd0] sm:$0xf]
    %v4205 = vld [vmem:[#allocation10 + $0xd4] sm:$0xf]
    %v4206 = vld [vmem:[#allocation10 + $0xd8] sm:$0xf]
    %v4207 = vld [vmem:[#allocation10 + $0xdc] sm:$0xf]
    %v4208 = vld [vmem:[#allocation10 + $0xe0] sm:$0xf]
    %v4209 = vld [vmem:[#allocation10 + $0xe4] sm:$0xf]
    %v4210 = vld [vmem:[#allocation10 + $0xe8] sm:$0xf]
    %v4211 = vld [vmem:[#allocation10 + $0xec] sm:$0xf]
    %v4212 = vld [vmem:[#allocation10 + $0xf0] sm:$0xf]
    %v4213 = vld [vmem:[#allocation10 + $0xf4] sm:$0xf]
    %v4214 = vld [vmem:[#allocation10 + $0xf8] sm:$0xf]
    %v4215 = vld [vmem:[#allocation10 + $0xfc] sm:$0xf]
    %v4216 = vld [vmem:[#allocation10 + $0x100] sm:$0xf]
    %v4217 = vld [vmem:[#allocation10 + $0x104] sm:$0xf]
    %v4218 = vld [vmem:[#allocation10 + $0x108] sm:$0xf]
    %v4219 = vld [vmem:[#allocation10 + $0x10c] sm:$0xf]
    %v4220 = vld [vmem:[#allocation10 + $0x110] sm:$0xf]
    %v4221 = vld [vmem:[#allocation10 + $0x114] sm:$0xf]
    %v4222 = vld [vmem:[#allocation10 + $0x118] sm:$0xf]
    %v4223 = vld [vmem:[#allocation10 + $0x11c] sm:$0xf]
    %v4224 = vld [vmem:[#allocation10 + $0x120] sm:$0xf]
    %v4225 = vld [vmem:[#allocation10 + $0x124] sm:$0xf]
    %v4226 = vld [vmem:[#allocation10 + $0x128] sm:$0xf]
    %v4227 = vld [vmem:[#allocation10 + $0x12c] sm:$0xf]
    %v4228 = vld [vmem:[#allocation10 + $0x130] sm:$0xf]
    %v4229 = vld [vmem:[#allocation10 + $0x134] sm:$0xf]
    %v4230 = vld [vmem:[#allocation10 + $0x138] sm:$0xf]
    %v4231 = vld [vmem:[#allocation10 + $0x13c] sm:$0xf]
    %v4232 = vld [vmem:[#allocation10 + $0x140] sm:$0xf]
    %v4233 = vld [vmem:[#allocation10 + $0x144] sm:$0xf]
    %v4234 = vld [vmem:[#allocation10 + $0x148] sm:$0xf]
    %v4235 = vld [vmem:[#allocation10 + $0x14c] sm:$0xf]
    %v4236 = vld [vmem:[#allocation10 + $0x150] sm:$0xf]
    %v4237 = vld [vmem:[#allocation10 + $0x154] sm:$0xf]
    %v4238 = vld [vmem:[#allocation10 + $0x158] sm:$0xf]
    %v4239 = vld [vmem:[#allocation10 + $0x15c] sm:$0xf]
    %v4240 = vld [vmem:[#allocation10 + $0x160] sm:$0xf]
    %v4241 = vld [vmem:[#allocation10 + $0x164] sm:$0xf]
    %v4242 = vld [vmem:[#allocation10 + $0x168] sm:$0xf]
    %v4243 = vld [vmem:[#allocation10 + $0x16c] sm:$0xf]
    %v4244 = vld [vmem:[#allocation10 + $0x170] sm:$0xf]
    %v4245 = vld [vmem:[#allocation10 + $0x174] sm:$0xf]
    %v4246 = vld [vmem:[#allocation10 + $0x178] sm:$0xf]
    %v4247 = vld [vmem:[#allocation10 + $0x17c] sm:$0xf]
    %v4248 = vld [vmem:[#allocation10 + $0x180] sm:$0xf]
    %v4249 = vld [vmem:[#allocation10 + $0x184] sm:$0xf]
    %v4250 = vld [vmem:[#allocation10 + $0x188] sm:$0xf]
    %v4251 = vld [vmem:[#allocation10 + $0x18c] sm:$0xf]
    %v4252 = vld [vmem:[#allocation10 + $0x190] sm:$0xf]
    %v4253 = vld [vmem:[#allocation10 + $0x194] sm:$0xf]
    %v4254 = vld [vmem:[#allocation10 + $0x198] sm:$0xf]
    %v4255 = vld [vmem:[#allocation10 + $0x19c] sm:$0xf]
    %v4256 = vld [vmem:[#allocation10 + $0x1a0] sm:$0xf]
    %v4257 = vld [vmem:[#allocation10 + $0x1a4] sm:$0xf]
    %v4258 = vld [vmem:[#allocation10 + $0x1a8] sm:$0xf]
    %v4259 = vld [vmem:[#allocation10 + $0x1ac] sm:$0xf]
    %v4260 = vld [vmem:[#allocation10 + $0x1b0] sm:$0xf]
    %v4261 = vld [vmem:[#allocation10 + $0x1b4] sm:$0xf]
    %v4262 = vld [vmem:[#allocation10 + $0x1b8] sm:$0xf]
    %v4263 = vld [vmem:[#allocation10 + $0x1bc] sm:$0xf]
    %v4264 = vld [vmem:[#allocation10 + $0x1c0] sm:$0xf]
    %v4265 = vld [vmem:[#allocation10 + $0x1c4] sm:$0xf]
    %v4266 = vld [vmem:[#allocation10 + $0x1c8] sm:$0xf]
    %v4267 = vld [vmem:[#allocation10 + $0x1cc] sm:$0xf]
    %v4268 = vld [vmem:[#allocation10 + $0x1d0] sm:$0xf]
    %v4269 = vld [vmem:[#allocation10 + $0x1d4] sm:$0xf]
    %v4270 = vld [vmem:[#allocation10 + $0x1d8] sm:$0xf]
    %v4271 = vld [vmem:[#allocation10 + $0x1dc] sm:$0xf]
    %v4272 = vld [vmem:[#allocation10 + $0x1e0] sm:$0xf]
    %v4273 = vld [vmem:[#allocation10 + $0x1e4] sm:$0xf]
    %v4274 = vld [vmem:[#allocation10 + $0x1e8] sm:$0xf]
    %v4275 = vld [vmem:[#allocation10 + $0x1ec] sm:$0xf]
    %v4276 = vld [vmem:[#allocation10 + $0x1f0] sm:$0xf]
    %v4277 = vld [vmem:[#allocation10 + $0x1f4] sm:$0xf]
    %v4278 = vld [vmem:[#allocation10 + $0x1f8] sm:$0xf]
    %v4279 = vld [vmem:[#allocation10 + $0x1fc] sm:$0xf]
    %v4280 = vld [vmem:[#allocation12] sm:$0x1]
    %v4282 = vperm.slane %v4280, 0
    %v4412 = vunpack.c.l.b16 %v4152
    %v4413 = vunpack.c.l.b16 %v4153
    %v4414 = vunpack.c.l.b16 %v4154
    %v4415 = vunpack.c.l.b16 %v4155
    %v4416 = vunpack.c.l.b16 %v4156
    %v4417 = vunpack.c.l.b16 %v4157
    %v4418 = vunpack.c.l.b16 %v4158
    %v4419 = vunpack.c.l.b16 %v4159
    %v4420 = vunpack.c.l.b16 %v4160
    %v4421 = vunpack.c.l.b16 %v4161
    %v4422 = vunpack.c.l.b16 %v4162
    %v4423 = vunpack.c.l.b16 %v4163
    %v4424 = vunpack.c.l.b16 %v4164
    %v4425 = vunpack.c.l.b16 %v4165
    %v4426 = vunpack.c.l.b16 %v4166
    %v4427 = vunpack.c.l.b16 %v4167
    %v4428 = vunpack.c.l.b16 %v4168
    %v4429 = vunpack.c.l.b16 %v4169
    %v4430 = vunpack.c.l.b16 %v4170
    %v4431 = vunpack.c.l.b16 %v4171
    %v4432 = vunpack.c.l.b16 %v4172
    %v4433 = vunpack.c.l.b16 %v4173
    %v4434 = vunpack.c.l.b16 %v4174
    %v4435 = vunpack.c.l.b16 %v4175
    %v4436 = vunpack.c.l.b16 %v4176
    %v4437 = vunpack.c.l.b16 %v4177
    %v4438 = vunpack.c.l.b16 %v4178
    %v4439 = vunpack.c.l.b16 %v4179
    %v4440 = vunpack.c.l.b16 %v4180
    %v4441 = vunpack.c.l.b16 %v4181
    %v4442 = vunpack.c.l.b16 %v4182
    %v4443 = vunpack.c.l.b16 %v4183
    %v4444 = vunpack.c.l.b16 %v4184
    %v4445 = vunpack.c.l.b16 %v4185
    %v4446 = vunpack.c.l.b16 %v4186
    %v4447 = vunpack.c.l.b16 %v4187
    %v4448 = vunpack.c.l.b16 %v4188
    %v4449 = vunpack.c.l.b16 %v4189
    %v4450 = vunpack.c.l.b16 %v4190
    %v4451 = vunpack.c.l.b16 %v4191
    %v4452 = vunpack.c.l.b16 %v4192
    %v4453 = vunpack.c.l.b16 %v4193
    %v4454 = vunpack.c.l.b16 %v4194
    %v4455 = vunpack.c.l.b16 %v4195
    %v4456 = vunpack.c.l.b16 %v4196
    %v4457 = vunpack.c.l.b16 %v4197
    %v4458 = vunpack.c.l.b16 %v4198
    %v4459 = vunpack.c.l.b16 %v4199
    %v4460 = vunpack.c.l.b16 %v4200
    %v4461 = vunpack.c.l.b16 %v4201
    %v4462 = vunpack.c.l.b16 %v4202
    %v4463 = vunpack.c.l.b16 %v4203
    %v4464 = vunpack.c.l.b16 %v4204
    %v4465 = vunpack.c.l.b16 %v4205
    %v4466 = vunpack.c.l.b16 %v4206
    %v4467 = vunpack.c.l.b16 %v4207
    %v4468 = vunpack.c.l.b16 %v4208
    %v4469 = vunpack.c.l.b16 %v4209
    %v4470 = vunpack.c.l.b16 %v4210
    %v4471 = vunpack.c.l.b16 %v4211
    %v4472 = vunpack.c.l.b16 %v4212
    %v4473 = vunpack.c.l.b16 %v4213
    %v4474 = vunpack.c.l.b16 %v4214
    %v4475 = vunpack.c.l.b16 %v4215
    %v4476 = vunpack.c.l.b16 %v4216
    %v4477 = vunpack.c.l.b16 %v4217
    %v4478 = vunpack.c.l.b16 %v4218
    %v4479 = vunpack.c.l.b16 %v4219
    %v4480 = vunpack.c.l.b16 %v4220
    %v4481 = vunpack.c.l.b16 %v4221
    %v4482 = vunpack.c.l.b16 %v4222
    %v4483 = vunpack.c.l.b16 %v4223
    %v4484 = vunpack.c.l.b16 %v4224
    %v4485 = vunpack.c.l.b16 %v4225
    %v4486 = vunpack.c.l.b16 %v4226
    %v4487 = vunpack.c.l.b16 %v4227
    %v4488 = vunpack.c.l.b16 %v4228
    %v4489 = vunpack.c.l.b16 %v4229
    %v4490 = vunpack.c.l.b16 %v4230
    %v4491 = vunpack.c.l.b16 %v4231
    %v4492 = vunpack.c.l.b16 %v4232
    %v4493 = vunpack.c.l.b16 %v4233
    %v4494 = vunpack.c.l.b16 %v4234
    %v4495 = vunpack.c.l.b16 %v4235
    %v4496 = vunpack.c.l.b16 %v4236
    %v4497 = vunpack.c.l.b16 %v4237
    %v4498 = vunpack.c.l.b16 %v4238
    %v4499 = vunpack.c.l.b16 %v4239
    %v4500 = vunpack.c.l.b16 %v4240
    %v4501 = vunpack.c.l.b16 %v4241
    %v4502 = vunpack.c.l.b16 %v4242
    %v4503 = vunpack.c.l.b16 %v4243
    %v4504 = vunpack.c.l.b16 %v4244
    %v4505 = vunpack.c.l.b16 %v4245
    %v4506 = vunpack.c.l.b16 %v4246
    %v4507 = vunpack.c.l.b16 %v4247
    %v4508 = vunpack.c.l.b16 %v4248
    %v4509 = vunpack.c.l.b16 %v4249
    %v4510 = vunpack.c.l.b16 %v4250
    %v4511 = vunpack.c.l.b16 %v4251
    %v4512 = vunpack.c.l.b16 %v4252
    %v4513 = vunpack.c.l.b16 %v4253
    %v4514 = vunpack.c.l.b16 %v4254
    %v4515 = vunpack.c.l.b16 %v4255
    %v4516 = vunpack.c.l.b16 %v4256
    %v4517 = vunpack.c.l.b16 %v4257
    %v4518 = vunpack.c.l.b16 %v4258
    %v4519 = vunpack.c.l.b16 %v4259
    %v4520 = vunpack.c.l.b16 %v4260
    %v4521 = vunpack.c.l.b16 %v4261
    %v4522 = vunpack.c.l.b16 %v4262
    %v4523 = vunpack.c.l.b16 %v4263
    %v4524 = vunpack.c.l.b16 %v4264
    %v4525 = vunpack.c.l.b16 %v4265
    %v4526 = vunpack.c.l.b16 %v4266
    %v4527 = vunpack.c.l.b16 %v4267
    %v4528 = vunpack.c.l.b16 %v4268
    %v4529 = vunpack.c.l.b16 %v4269
    %v4530 = vunpack.c.l.b16 %v4270
    %v4531 = vunpack.c.l.b16 %v4271
    %v4532 = vunpack.c.l.b16 %v4272
    %v4533 = vunpack.c.l.b16 %v4273
    %v4534 = vunpack.c.l.b16 %v4274
    %v4535 = vunpack.c.l.b16 %v4275
    %v4536 = vunpack.c.l.b16 %v4276
    %v4537 = vunpack.c.l.b16 %v4277
    %v4538 = vunpack.c.l.b16 %v4278
    %v4539 = vunpack.c.l.b16 %v4279
    %v4540 = vpack.c.b16 %v4413, %v4412
    %v4541 = vpack.c.b16 %v4415, %v4414
    %v4542 = vpack.c.b16 %v4417, %v4416
    %v4543 = vpack.c.b16 %v4419, %v4418
    %v4544 = vpack.c.b16 %v4421, %v4420
    %v4545 = vpack.c.b16 %v4423, %v4422
    %v4546 = vpack.c.b16 %v4425, %v4424
    %v4547 = vpack.c.b16 %v4427, %v4426
    %v4548 = vpack.c.b16 %v4429, %v4428
    %v4549 = vpack.c.b16 %v4431, %v4430
    %v4550 = vpack.c.b16 %v4433, %v4432
    %v4551 = vpack.c.b16 %v4435, %v4434
    %v4552 = vpack.c.b16 %v4437, %v4436
    %v4553 = vpack.c.b16 %v4439, %v4438
    %v4554 = vpack.c.b16 %v4441, %v4440
    %v4555 = vpack.c.b16 %v4443, %v4442
    %v4556 = vpack.c.b16 %v4445, %v4444
    %v4557 = vpack.c.b16 %v4447, %v4446
    %v4558 = vpack.c.b16 %v4449, %v4448
    %v4559 = vpack.c.b16 %v4451, %v4450
    %v4560 = vpack.c.b16 %v4453, %v4452
    %v4561 = vpack.c.b16 %v4455, %v4454
    %v4562 = vpack.c.b16 %v4457, %v4456
    %v4563 = vpack.c.b16 %v4459, %v4458
    %v4564 = vpack.c.b16 %v4461, %v4460
    %v4565 = vpack.c.b16 %v4463, %v4462
    %v4566 = vpack.c.b16 %v4465, %v4464
    %v4567 = vpack.c.b16 %v4467, %v4466
    %v4568 = vpack.c.b16 %v4469, %v4468
    %v4569 = vpack.c.b16 %v4471, %v4470
    %v4570 = vpack.c.b16 %v4473, %v4472
    %v4571 = vpack.c.b16 %v4475, %v4474
    %v4572 = vpack.c.b16 %v4477, %v4476
    %v4573 = vpack.c.b16 %v4479, %v4478
    %v4574 = vpack.c.b16 %v4481, %v4480
    %v4575 = vpack.c.b16 %v4483, %v4482
    %v4576 = vpack.c.b16 %v4485, %v4484
    %v4577 = vpack.c.b16 %v4487, %v4486
    %v4578 = vpack.c.b16 %v4489, %v4488
    %v4579 = vpack.c.b16 %v4491, %v4490
    %v4580 = vpack.c.b16 %v4493, %v4492
    %v4581 = vpack.c.b16 %v4495, %v4494
    %v4582 = vpack.c.b16 %v4497, %v4496
    %v4583 = vpack.c.b16 %v4499, %v4498
    %v4584 = vpack.c.b16 %v4501, %v4500
    %v4585 = vpack.c.b16 %v4503, %v4502
    %v4586 = vpack.c.b16 %v4505, %v4504
    %v4587 = vpack.c.b16 %v4507, %v4506
    %v4588 = vpack.c.b16 %v4509, %v4508
    %v4589 = vpack.c.b16 %v4511, %v4510
    %v4590 = vpack.c.b16 %v4513, %v4512
    %v4591 = vpack.c.b16 %v4515, %v4514
    %v4592 = vpack.c.b16 %v4517, %v4516
    %v4593 = vpack.c.b16 %v4519, %v4518
    %v4594 = vpack.c.b16 %v4521, %v4520
    %v4595 = vpack.c.b16 %v4523, %v4522
    %v4596 = vpack.c.b16 %v4525, %v4524
    %v4597 = vpack.c.b16 %v4527, %v4526
    %v4598 = vpack.c.b16 %v4529, %v4528
    %v4599 = vpack.c.b16 %v4531, %v4530
    %v4600 = vpack.c.b16 %v4533, %v4532
    %v4601 = vpack.c.b16 %v4535, %v4534
    %v4602 = vpack.c.b16 %v4537, %v4536
    %v4603 = vpack.c.b16 %v4539, %v4538
    %4668 = vmatpush.bf16.msra.mxu0 %v4547
    %4669 = vmatpush.bf16.msra.mxu0 %v4546
    %4670 = vmatpush.bf16.msra.mxu0 %v4545
    %4671 = vmatpush.bf16.msra.mxu0 %v4544
    %4672 = vmatpush.bf16.msra.mxu0 %v4543
    %4673 = vmatpush.bf16.msra.mxu0 %v4542
    %4674 = vmatpush.bf16.msra.mxu0 %v4541
    %4675 = vmatpush.bf16.msra.mxu0 %v4540
    %4676 = vmatmul.bf16.gmra.mxu0 %v4144
    %v4677 = vpop.f32.mrf.mxu0
    %v4678 = vadd.f32 %v4282, %v4677
    %v4679 = vpop.f32.mrf.mxu0
    %4680 = vdwg.mxu0
    %4681 = vmatpush.bf16.msra.mxu0 %v4555
    %4682 = vmatpush.bf16.msra.mxu0 %v4554
    %4683 = vmatpush.bf16.msra.mxu0 %v4553
    %4684 = vmatpush.bf16.msra.mxu0 %v4552
    %4685 = vmatpush.bf16.msra.mxu0 %v4551
    %4686 = vmatpush.bf16.msra.mxu0 %v4550
    %4687 = vmatpush.bf16.msra.mxu0 %v4549
    %4688 = vmatpush.bf16.msra.mxu0 %v4548
    %4689 = vmatmul.bf16.gmra.mxu0 %v4145
    %v4690 = vpop.f32.mrf.mxu0
    %v4691 = vadd.f32 %v4678, %v4690
    %v4692 = vpop.f32.mrf.mxu0
    %4693 = vdwg.mxu0
    %4694 = vmatpush.bf16.msra.mxu0 %v4563
    %4695 = vmatpush.bf16.msra.mxu0 %v4562
    %4696 = vmatpush.bf16.msra.mxu0 %v4561
    %4697 = vmatpush.bf16.msra.mxu0 %v4560
    %4698 = vmatpush.bf16.msra.mxu0 %v4559
    %4699 = vmatpush.bf16.msra.mxu0 %v4558
    %4700 = vmatpush.bf16.msra.mxu0 %v4557
    %4701 = vmatpush.bf16.msra.mxu0 %v4556
    %4702 = vmatmul.bf16.gmra.mxu0 %v4146
    %v4703 = vpop.f32.mrf.mxu0
    %v4704 = vadd.f32 %v4691, %v4703
    %v4705 = vpop.f32.mrf.mxu0
    %4706 = vdwg.mxu0
    %4707 = vmatpush.bf16.msra.mxu0 %v4571
    %4708 = vmatpush.bf16.msra.mxu0 %v4570
    %4709 = vmatpush.bf16.msra.mxu0 %v4569
    %4710 = vmatpush.bf16.msra.mxu0 %v4568
    %4711 = vmatpush.bf16.msra.mxu0 %v4567
    %4712 = vmatpush.bf16.msra.mxu0 %v4566
    %4713 = vmatpush.bf16.msra.mxu0 %v4565
    %4714 = vmatpush.bf16.msra.mxu0 %v4564
    %4715 = vmatmul.bf16.gmra.mxu0 %v4147
    %v4716 = vpop.f32.mrf.mxu0
    %v4717 = vadd.f32 %v4704, %v4716
    %v4718 = vpop.f32.mrf.mxu0
    %4719 = vdwg.mxu0
    %4720 = vmatpush.bf16.msra.mxu0 %v4579
    %4721 = vmatpush.bf16.msra.mxu0 %v4578
    %4722 = vmatpush.bf16.msra.mxu0 %v4577
    %4723 = vmatpush.bf16.msra.mxu0 %v4576
    %4724 = vmatpush.bf16.msra.mxu0 %v4575
    %4725 = vmatpush.bf16.msra.mxu0 %v4574
    %4726 = vmatpush.bf16.msra.mxu0 %v4573
    %4727 = vmatpush.bf16.msra.mxu0 %v4572
    %4728 = vmatmul.bf16.gmra.mxu0 %v4148
    %v4729 = vpop.f32.mrf.mxu0
    %v4730 = vadd.f32 %v4717, %v4729
    %v4731 = vpop.f32.mrf.mxu0
    %4732 = vdwg.mxu0
    %4733 = vmatpush.bf16.msra.mxu0 %v4587
    %4734 = vmatpush.bf16.msra.mxu0 %v4586
    %4735 = vmatpush.bf16.msra.mxu0 %v4585
    %4736 = vmatpush.bf16.msra.mxu0 %v4584
    %4737 = vmatpush.bf16.msra.mxu0 %v4583
    %4738 = vmatpush.bf16.msra.mxu0 %v4582
    %4739 = vmatpush.bf16.msra.mxu0 %v4581
    %4740 = vmatpush.bf16.msra.mxu0 %v4580
    %4741 = vmatmul.bf16.gmra.mxu0 %v4149
    %v4742 = vpop.f32.mrf.mxu0
    %v4743 = vadd.f32 %v4730, %v4742
    %v4744 = vpop.f32.mrf.mxu0
    %4745 = vdwg.mxu0
    %4746 = vmatpush.bf16.msra.mxu0 %v4595
    %4747 = vmatpush.bf16.msra.mxu0 %v4594
    %4748 = vmatpush.bf16.msra.mxu0 %v4593
    %4749 = vmatpush.bf16.msra.mxu0 %v4592
    %4750 = vmatpush.bf16.msra.mxu0 %v4591
    %4751 = vmatpush.bf16.msra.mxu0 %v4590
    %4752 = vmatpush.bf16.msra.mxu0 %v4589
    %4753 = vmatpush.bf16.msra.mxu0 %v4588
    %4754 = vmatmul.bf16.gmra.mxu0 %v4150
    %v4755 = vpop.f32.mrf.mxu0
    %v4756 = vadd.f32 %v4743, %v4755
    %v4757 = vpop.f32.mrf.mxu0
    %4758 = vdwg.mxu0
    %4759 = vmatpush.bf16.msra.mxu0 %v4603
    %4760 = vmatpush.bf16.msra.mxu0 %v4602
    %4761 = vmatpush.bf16.msra.mxu0 %v4601
    %4762 = vmatpush.bf16.msra.mxu0 %v4600
    %4763 = vmatpush.bf16.msra.mxu0 %v4599
    %4764 = vmatpush.bf16.msra.mxu0 %v4598
    %4765 = vmatpush.bf16.msra.mxu0 %v4597
    %4766 = vmatpush.bf16.msra.mxu0 %v4596
    %4767 = vmatmul.bf16.gmra.mxu0 %v4151
    %v4768 = vpop.f32.mrf.mxu0
    %v4769 = vadd.f32 %v4756, %v4768
    %v4770 = vpop.f32.mrf.mxu0
    %4771 = vdwg.mxu0
    %v4772 = vmax.f32 %v4769, 0.0
    %4773 = vst [vmem:[#allocation2] sm:$0xff] %v4772
    %v4774 = vld [vmem:[#allocation13] sm:$0xf]
    %v4775 = vld [vmem:[#allocation13 + $0x4] sm:$0xf]
    %v4776 = vld [vmem:[#allocation13 + $0x8] sm:$0xf]
    %v4777 = vld [vmem:[#allocation13 + $0xc] sm:$0xf]
    %v4778 = vld [vmem:[#allocation13 + $0x10] sm:$0xf]
    %v4779 = vld [vmem:[#allocation13 + $0x14] sm:$0xf]
    %v4780 = vld [vmem:[#allocation13 + $0x18] sm:$0xf]
    %v4781 = vld [vmem:[#allocation13 + $0x1c] sm:$0xf]
    %v4782 = vld [vmem:[#allocation15] sm:$0xff]
    %v4783 = vld [vmem:[#allocation15 + $0x8] sm:$0xf]
    %v4784 = vld [vmem:[#allocation15 + $0xc] sm:$0xff]
    %v4785 = vld [vmem:[#allocation15 + $0x14] sm:$0xf]
    %v4786 = vld [vmem:[#allocation15 + $0x18] sm:$0xff]
    %v4787 = vld [vmem:[#allocation15 + $0x20] sm:$0xf]
    %v4788 = vld [vmem:[#allocation15 + $0x24] sm:$0xff]
    %v4789 = vld [vmem:[#allocation15 + $0x2c] sm:$0xf]
    %v4790 = vld [vmem:[#allocation15 + $0x30] sm:$0xff]
    %v4791 = vld [vmem:[#allocation15 + $0x38] sm:$0xf]
    %v4792 = vld [vmem:[#allocation15 + $0x3c] sm:$0xff]
    %v4793 = vld [vmem:[#allocation15 + $0x44] sm:$0xf]
    %v4794 = vld [vmem:[#allocation15 + $0x48] sm:$0xff]
    %v4795 = vld [vmem:[#allocation15 + $0x50] sm:$0xf]
    %v4796 = vld [vmem:[#allocation15 + $0x54] sm:$0xff]
    %v4797 = vld [vmem:[#allocation15 + $0x5c] sm:$0xf]
    %v4798 = vld [vmem:[#allocation15 + $0x60] sm:$0xff]
    %v4799 = vld [vmem:[#allocation15 + $0x68] sm:$0xf]
    %v4800 = vld [vmem:[#allocation15 + $0x6c] sm:$0xff]
    %v4801 = vld [vmem:[#allocation15 + $0x74] sm:$0xf]
    %v4802 = vld [vmem:[#allocation15 + $0x78] sm:$0xff]
    %v4803 = vld [vmem:[#allocation15 + $0x80] sm:$0xf]
    %v4804 = vld [vmem:[#allocation15 + $0x84] sm:$0xff]
    %v4805 = vld [vmem:[#allocation15 + $0x8c] sm:$0xf]
    %v4806 = vld [vmem:[#allocation15 + $0x90] sm:$0xff]
    %v4807 = vld [vmem:[#allocation15 + $0x98] sm:$0xf]
    %v4808 = vld [vmem:[#allocation15 + $0x9c] sm:$0xff]
    %v4809 = vld [vmem:[#allocation15 + $0xa4] sm:$0xf]
    %v4810 = vld [vmem:[#allocation15 + $0xa8] sm:$0xff]
    %v4811 = vld [vmem:[#allocation15 + $0xb0] sm:$0xf]
    %v4812 = vld [vmem:[#allocation15 + $0xb4] sm:$0xff]
    %v4813 = vld [vmem:[#allocation15 + $0xbc] sm:$0xf]
    %v4814 = vld [vmem:[#allocation16] sm:$0x7]
    %v4816 = vperm.slane %v4814, 0
    %v4817 = vperm.slane %v4814, 1
    %v4818 = vperm.slane %v4814, 2
    %v4830 = vunpack.c.l.b16 %v4774
    %v4831 = vunpack.c.l.b16 %v4775
    %v4832 = vunpack.c.l.b16 %v4776
    %v4833 = vunpack.c.l.b16 %v4777
    %v4834 = vunpack.c.l.b16 %v4778
    %v4835 = vunpack.c.l.b16 %v4779
    %v4836 = vunpack.c.l.b16 %v4780
    %v4837 = vunpack.c.l.b16 %v4781
    %v4838 = vpack.c.b16 %v4831, %v4830
    %v4839 = vpack.c.b16 %v4833, %v4832
    %v4840 = vpack.c.b16 %v4835, %v4834
    %v4841 = vpack.c.b16 %v4837, %v4836
    %v4878 = vunpack.c.l.b16 %v4782
    %v4879 = vunpack.c.h.b16 %v4782
    %v4880 = vunpack.c.l.b16 %v4783
    %v4881 = vunpack.c.l.b16 %v4784
    %v4882 = vunpack.c.h.b16 %v4784
    %v4883 = vunpack.c.l.b16 %v4785
    %v4884 = vunpack.c.l.b16 %v4786
    %v4885 = vunpack.c.h.b16 %v4786
    %v4886 = vunpack.c.l.b16 %v4787
    %v4887 = vunpack.c.l.b16 %v4788
    %v4888 = vunpack.c.h.b16 %v4788
    %v4889 = vunpack.c.l.b16 %v4789
    %v4890 = vunpack.c.l.b16 %v4790
    %v4891 = vunpack.c.h.b16 %v4790
    %v4892 = vunpack.c.l.b16 %v4791
    %v4893 = vunpack.c.l.b16 %v4792
    %v4894 = vunpack.c.h.b16 %v4792
    %v4895 = vunpack.c.l.b16 %v4793
    %v4896 = vunpack.c.l.b16 %v4794
    %v4897 = vunpack.c.h.b16 %v4794
    %v4898 = vunpack.c.l.b16 %v4795
    %v4899 = vunpack.c.l.b16 %v4796
    %v4900 = vunpack.c.h.b16 %v4796
    %v4901 = vunpack.c.l.b16 %v4797
    %v4902 = vunpack.c.l.b16 %v4798
    %v4903 = vunpack.c.h.b16 %v4798
    %v4904 = vunpack.c.l.b16 %v4799
    %v4905 = vunpack.c.l.b16 %v4800
    %v4906 = vunpack.c.h.b16 %v4800
    %v4907 = vunpack.c.l.b16 %v4801
    %v4908 = vunpack.c.l.b16 %v4802
    %v4909 = vunpack.c.h.b16 %v4802
    %v4910 = vunpack.c.l.b16 %v4803
    %v4911 = vunpack.c.l.b16 %v4804
    %v4912 = vunpack.c.h.b16 %v4804
    %v4913 = vunpack.c.l.b16 %v4805
    %v4914 = vunpack.c.l.b16 %v4806
    %v4915 = vunpack.c.h.b16 %v4806
    %v4916 = vunpack.c.l.b16 %v4807
    %v4917 = vunpack.c.l.b16 %v4808
    %v4918 = vunpack.c.h.b16 %v4808
    %v4919 = vunpack.c.l.b16 %v4809
    %v4920 = vunpack.c.l.b16 %v4810
    %v4921 = vunpack.c.h.b16 %v4810
    %v4922 = vunpack.c.l.b16 %v4811
    %v4923 = vunpack.c.l.b16 %v4812
    %v4924 = vunpack.c.h.b16 %v4812
    %v4925 = vunpack.c.l.b16 %v4813
    %v4926 = vpack.c.b16 %v4881, %v4878
    %v4927 = vpack.c.b16 %v4882, %v4879
    %v4928 = vpack.c.b16 %v4883, %v4880
    %v4929 = vpack.c.b16 %v4887, %v4884
    %v4930 = vpack.c.b16 %v4888, %v4885
    %v4931 = vpack.c.b16 %v4889, %v4886
    %v4932 = vpack.c.b16 %v4893, %v4890
    %v4933 = vpack.c.b16 %v4894, %v4891
    %v4934 = vpack.c.b16 %v4895, %v4892
    %v4935 = vpack.c.b16 %v4899, %v4896
    %v4936 = vpack.c.b16 %v4900, %v4897
    %v4937 = vpack.c.b16 %v4901, %v4898
    %v4938 = vpack.c.b16 %v4905, %v4902
    %v4939 = vpack.c.b16 %v4906, %v4903
    %v4940 = vpack.c.b16 %v4907, %v4904
    %v4941 = vpack.c.b16 %v4911, %v4908
    %v4942 = vpack.c.b16 %v4912, %v4909
    %v4943 = vpack.c.b16 %v4913, %v4910
    %v4944 = vpack.c.b16 %v4917, %v4914
    %v4945 = vpack.c.b16 %v4918, %v4915
    %v4946 = vpack.c.b16 %v4919, %v4916
    %v4947 = vpack.c.b16 %v4923, %v4920
    %v4948 = vpack.c.b16 %v4924, %v4921
    %v4949 = vpack.c.b16 %v4925, %v4922
    %4974 = vmatpush.bf16.msra.mxu0 %v4947
    %4975 = vmatpush.bf16.msra.mxu0 %v4944
    %4976 = vmatpush.bf16.msra.mxu0 %v4941
    %4977 = vmatpush.bf16.msra.mxu0 %v4938
    %4978 = vmatpush.bf16.msra.mxu0 %v4935
    %4979 = vmatpush.bf16.msra.mxu0 %v4932
    %4980 = vmatpush.bf16.msra.mxu0 %v4929
    %4981 = vmatpush.bf16.msra.mxu0 %v4926
    %4982 = vmatmul.bf16.gmra.mxu0 %v4838
    %v4983 = vpop.f32.mrf.mxu0
    %v4984 = vadd.f32 %v4816, %v4983
    %v4985 = vpop.f32.mrf.mxu0
    %v4986 = vadd.f32 %v4816, %v4985
    %4987 = vmatmul.bf16.gmra.mxu0 %v4839
    %v4988 = vpop.f32.mrf.mxu0
    %v4989 = vadd.f32 %v4816, %v4988
    %v4990 = vpop.f32.mrf.mxu0
    %v4991 = vadd.f32 %v4816, %v4990
    %4992 = vmatmul.bf16.gmra.mxu0 %v4840
    %v4993 = vpop.f32.mrf.mxu0
    %v4994 = vadd.f32 %v4816, %v4993
    %v4995 = vpop.f32.mrf.mxu0
    %v4996 = vadd.f32 %v4816, %v4995
    %4997 = vmatmul.bf16.gmra.mxu0 %v4841
    %v4998 = vpop.f32.mrf.mxu0
    %v4999 = vadd.f32 %v4816, %v4998
    %v5000 = vpop.f32.mrf.mxu0
    %v5001 = vadd.f32 %v4816, %v5000
    %5002 = vdwg.mxu0
    %5003 = vmatpush.bf16.msra.mxu0 %v4948
    %5004 = vmatpush.bf16.msra.mxu0 %v4945
    %5005 = vmatpush.bf16.msra.mxu0 %v4942
    %5006 = vmatpush.bf16.msra.mxu0 %v4939
    %5007 = vmatpush.bf16.msra.mxu0 %v4936
    %5008 = vmatpush.bf16.msra.mxu0 %v4933
    %5009 = vmatpush.bf16.msra.mxu0 %v4930
    %5010 = vmatpush.bf16.msra.mxu0 %v4927
    %5011 = vmatmul.bf16.gmra.mxu0 %v4838
    %v5012 = vpop.f32.mrf.mxu0
    %v5013 = vadd.f32 %v4817, %v5012
    %v5014 = vpop.f32.mrf.mxu0
    %v5015 = vadd.f32 %v4817, %v5014
    %5016 = vmatmul.bf16.gmra.mxu0 %v4839
    %v5017 = vpop.f32.mrf.mxu0
    %v5018 = vadd.f32 %v4817, %v5017
    %v5019 = vpop.f32.mrf.mxu0
    %v5020 = vadd.f32 %v4817, %v5019
    %5021 = vmatmul.bf16.gmra.mxu0 %v4840
    %v5022 = vpop.f32.mrf.mxu0
    %v5023 = vadd.f32 %v4817, %v5022
    %v5024 = vpop.f32.mrf.mxu0
    %v5025 = vadd.f32 %v4817, %v5024
    %5026 = vmatmul.bf16.gmra.mxu0 %v4841
    %v5027 = vpop.f32.mrf.mxu0
    %v5028 = vadd.f32 %v4817, %v5027
    %v5029 = vpop.f32.mrf.mxu0
    %v5030 = vadd.f32 %v4817, %v5029
    %5031 = vdwg.mxu0
    %5032 = vmatpush.bf16.msra.mxu0 %v4949
    %5033 = vmatpush.bf16.msra.mxu0 %v4946
    %5034 = vmatpush.bf16.msra.mxu0 %v4943
    %5035 = vmatpush.bf16.msra.mxu0 %v4940
    %5036 = vmatpush.bf16.msra.mxu0 %v4937
    %5037 = vmatpush.bf16.msra.mxu0 %v4934
    %5038 = vmatpush.bf16.msra.mxu0 %v4931
    %5039 = vmatpush.bf16.msra.mxu0 %v4928
    %5040 = vmatmul.bf16.gmra.mxu0 %v4838
    %v5041 = vpop.f32.mrf.mxu0
    %v5042 = vadd.f32 %v4818, %v5041
    %v5043 = vpop.f32.mrf.mxu0
    %v5044 = vadd.f32 %v4818, %v5043
    %5045 = vmatmul.bf16.gmra.mxu0 %v4839
    %v5046 = vpop.f32.mrf.mxu0
    %v5047 = vadd.f32 %v4818, %v5046
    %v5048 = vpop.f32.mrf.mxu0
    %v5049 = vadd.f32 %v4818, %v5048
    %5050 = vmatmul.bf16.gmra.mxu0 %v4840
    %v5051 = vpop.f32.mrf.mxu0
    %v5052 = vadd.f32 %v4818, %v5051
    %v5053 = vpop.f32.mrf.mxu0
    %v5054 = vadd.f32 %v4818, %v5053
    %5055 = vmatmul.bf16.gmra.mxu0 %v4841
    %v5056 = vpop.f32.mrf.mxu0
    %v5057 = vadd.f32 %v4818, %v5056
    %v5058 = vpop.f32.mrf.mxu0
    %v5059 = vadd.f32 %v4818, %v5058
    %5060 = vdwg.mxu0
    %5061 = vst [vmem:[#allocation3] sm:$0xff] %v4984
    %5062 = vst [vmem:[#allocation3 + $0x8] sm:$0xff] %v5013
    %5063 = vst [vmem:[#allocation3 + $0x10] sm:$0xff] %v5042
    %5064 = vst [vmem:[#allocation3 + $0x18] sm:$0xff] %v4986
    %5065 = vst [vmem:[#allocation3 + $0x20] sm:$0xff] %v5015
    %5066 = vst [vmem:[#allocation3 + $0x28] sm:$0xff] %v5044
    %5067 = vst [vmem:[#allocation3 + $0x30] sm:$0xff] %v4989
    %5068 = vst [vmem:[#allocation3 + $0x38] sm:$0xff] %v5018
    %5069 = vst [vmem:[#allocation3 + $0x40] sm:$0xff] %v5047
    %5070 = vst [vmem:[#allocation3 + $0x48] sm:$0xff] %v4991
    %5071 = vst [vmem:[#allocation3 + $0x50] sm:$0xff] %v5020
    %5072 = vst [vmem:[#allocation3 + $0x58] sm:$0xff] %v5049
    %5073 = vst [vmem:[#allocation3 + $0x60] sm:$0xff] %v4994
    %5074 = vst [vmem:[#allocation3 + $0x68] sm:$0xff] %v5023
    %5075 = vst [vmem:[#allocation3 + $0x70] sm:$0xff] %v5052
    %5076 = vst [vmem:[#allocation3 + $0x78] sm:$0xff] %v4996
    %5077 = vst [vmem:[#allocation3 + $0x80] sm:$0xff] %v5025
    %5078 = vst [vmem:[#allocation3 + $0x88] sm:$0xff] %v5054
    %5079 = vst [vmem:[#allocation3 + $0x90] sm:$0xff] %v4999
    %5080 = vst [vmem:[#allocation3 + $0x98] sm:$0xff] %v5028
    %5081 = vst [vmem:[#allocation3 + $0xa0] sm:$0xff] %v5057
    %5082 = vst [vmem:[#allocation3 + $0xa8] sm:$0xff] %v5001
    %5083 = vst [vmem:[#allocation3 + $0xb0] sm:$0xff] %v5030
    %5084 = vst [vmem:[#allocation3 + $0xb8] sm:$0xff] %v5059
    %v5085 = vld [vmem:[#allocation18] sm:$0xff]
    %v5086 = vld [vmem:[#allocation18 + $0x8] sm:$0xf]
    %v5087 = vld [vmem:[#allocation18 + $0xc] sm:$0xff]
    %v5088 = vld [vmem:[#allocation18 + $0x14] sm:$0xf]
    %v5089 = vld [vmem:[#allocation18 + $0x18] sm:$0xff]
    %v5090 = vld [vmem:[#allocation18 + $0x20] sm:$0xf]
    %v5091 = vld [vmem:[#allocation18 + $0x24] sm:$0xff]
    %v5092 = vld [vmem:[#allocation18 + $0x2c] sm:$0xf]
    %v5093 = vld [vmem:[#allocation18 + $0x30] sm:$0xff]
    %v5094 = vld [vmem:[#allocation18 + $0x38] sm:$0xf]
    %v5095 = vld [vmem:[#allocation18 + $0x3c] sm:$0xff]
    %v5096 = vld [vmem:[#allocation18 + $0x44] sm:$0xf]
    %v5097 = vld [vmem:[#allocation18 + $0x48] sm:$0xff]
    %v5098 = vld [vmem:[#allocation18 + $0x50] sm:$0xf]
    %v5099 = vld [vmem:[#allocation18 + $0x54] sm:$0xff]
    %v5100 = vld [vmem:[#allocation18 + $0x5c] sm:$0xf]
    %v5101 = vld [vmem:[#allocation18 + $0x60] sm:$0xff]
    %v5102 = vld [vmem:[#allocation18 + $0x68] sm:$0xf]
    %v5103 = vld [vmem:[#allocation18 + $0x6c] sm:$0xff]
    %v5104 = vld [vmem:[#allocation18 + $0x74] sm:$0xf]
    %v5105 = vld [vmem:[#allocation18 + $0x78] sm:$0xff]
    %v5106 = vld [vmem:[#allocation18 + $0x80] sm:$0xf]
    %v5107 = vld [vmem:[#allocation18 + $0x84] sm:$0xff]
    %v5108 = vld [vmem:[#allocation18 + $0x8c] sm:$0xf]
    %v5109 = vld [vmem:[#allocation18 + $0x90] sm:$0xff]
    %v5110 = vld [vmem:[#allocation18 + $0x98] sm:$0xf]
    %v5111 = vld [vmem:[#allocation18 + $0x9c] sm:$0xff]
    %v5112 = vld [vmem:[#allocation18 + $0xa4] sm:$0xf]
    %v5113 = vld [vmem:[#allocation18 + $0xa8] sm:$0xff]
    %v5114 = vld [vmem:[#allocation18 + $0xb0] sm:$0xf]
    %v5115 = vld [vmem:[#allocation18 + $0xb4] sm:$0xff]
    %v5116 = vld [vmem:[#allocation18 + $0xbc] sm:$0xf]
    %v5117 = vld [vmem:[#allocation19] sm:$0x7]
    %v5119 = vperm.slane %v5117, 0
    %v5120 = vperm.slane %v5117, 1
    %v5121 = vperm.slane %v5117, 2
    %v5125 = vld [vmem:[#allocation2] sm:$0xff]
    %v5126 = vld [vmem:[#allocation3] sm:$0xff]
    %v5127 = vld [vmem:[#allocation3 + $0x8] sm:$0xff]
    %v5128 = vld [vmem:[#allocation3 + $0x10] sm:$0xff]
    %v5129 = vpack.c.bf16 %v5125, %v5125
    %v5162 = vunpack.c.l.b16 %v5085
    %v5163 = vunpack.c.h.b16 %v5085
    %v5164 = vunpack.c.l.b16 %v5086
    %v5165 = vunpack.c.l.b16 %v5087
    %v5166 = vunpack.c.h.b16 %v5087
    %v5167 = vunpack.c.l.b16 %v5088
    %v5168 = vunpack.c.l.b16 %v5089
    %v5169 = vunpack.c.h.b16 %v5089
    %v5170 = vunpack.c.l.b16 %v5090
    %v5171 = vunpack.c.l.b16 %v5091
    %v5172 = vunpack.c.h.b16 %v5091
    %v5173 = vunpack.c.l.b16 %v5092
    %v5174 = vunpack.c.l.b16 %v5093
    %v5175 = vunpack.c.h.b16 %v5093
    %v5176 = vunpack.c.l.b16 %v5094
    %v5177 = vunpack.c.l.b16 %v5095
    %v5178 = vunpack.c.h.b16 %v5095
    %v5179 = vunpack.c.l.b16 %v5096
    %v5180 = vunpack.c.l.b16 %v5097
    %v5181 = vunpack.c.h.b16 %v5097
    %v5182 = vunpack.c.l.b16 %v5098
    %v5183 = vunpack.c.l.b16 %v5099
    %v5184 = vunpack.c.h.b16 %v5099
    %v5185 = vunpack.c.l.b16 %v5100
    %v5186 = vunpack.c.l.b16 %v5101
    %v5187 = vunpack.c.h.b16 %v5101
    %v5188 = vunpack.c.l.b16 %v5102
    %v5189 = vunpack.c.l.b16 %v5103
    %v5190 = vunpack.c.h.b16 %v5103
    %v5191 = vunpack.c.l.b16 %v5104
    %v5192 = vunpack.c.l.b16 %v5105
    %v5193 = vunpack.c.h.b16 %v5105
    %v5194 = vunpack.c.l.b16 %v5106
    %v5195 = vunpack.c.l.b16 %v5107
    %v5196 = vunpack.c.h.b16 %v5107
    %v5197 = vunpack.c.l.b16 %v5108
    %v5198 = vunpack.c.l.b16 %v5109
    %v5199 = vunpack.c.h.b16 %v5109
    %v5200 = vunpack.c.l.b16 %v5110
    %v5201 = vunpack.c.l.b16 %v5111
    %v5202 = vunpack.c.h.b16 %v5111
    %v5203 = vunpack.c.l.b16 %v5112
    %v5204 = vunpack.c.l.b16 %v5113
    %v5205 = vunpack.c.h.b16 %v5113
    %v5206 = vunpack.c.l.b16 %v5114
    %v5207 = vunpack.c.l.b16 %v5115
    %v5208 = vunpack.c.h.b16 %v5115
    %v5209 = vunpack.c.l.b16 %v5116
    %v5210 = vpack.c.b16 %v5165, %v5162
    %v5211 = vpack.c.b16 %v5166, %v5163
    %v5212 = vpack.c.b16 %v5167, %v5164
    %v5213 = vpack.c.b16 %v5171, %v5168
    %v5214 = vpack.c.b16 %v5172, %v5169
    %v5215 = vpack.c.b16 %v5173, %v5170
    %v5216 = vpack.c.b16 %v5177, %v5174
    %v5217 = vpack.c.b16 %v5178, %v5175
    %v5218 = vpack.c.b16 %v5179, %v5176
    %v5219 = vpack.c.b16 %v5183, %v5180
    %v5220 = vpack.c.b16 %v5184, %v5181
    %v5221 = vpack.c.b16 %v5185, %v5182
    %v5222 = vpack.c.b16 %v5189, %v5186
    %v5223 = vpack.c.b16 %v5190, %v5187
    %v5224 = vpack.c.b16 %v5191, %v5188
    %v5225 = vpack.c.b16 %v5195, %v5192
    %v5226 = vpack.c.b16 %v5196, %v5193
    %v5227 = vpack.c.b16 %v5197, %v5194
    %v5228 = vpack.c.b16 %v5201, %v5198
    %v5229 = vpack.c.b16 %v5202, %v5199
    %v5230 = vpack.c.b16 %v5203, %v5200
    %v5231 = vpack.c.b16 %v5207, %v5204
    %v5232 = vpack.c.b16 %v5208, %v5205
    %v5233 = vpack.c.b16 %v5209, %v5206
    %5258 = vmatpush.bf16.msra.mxu0 %v5231
    %5259 = vmatpush.bf16.msra.mxu0 %v5228
    %5260 = vmatpush.bf16.msra.mxu0 %v5225
    %5261 = vmatpush.bf16.msra.mxu0 %v5222
    %5262 = vmatpush.bf16.msra.mxu0 %v5219
    %5263 = vmatpush.bf16.msra.mxu0 %v5216
    %5264 = vmatpush.bf16.msra.mxu0 %v5213
    %5265 = vmatpush.bf16.msra.mxu0 %v5210
    %5266 = vmatmul.bf16.gmra.mxu0 %v5129
    %v5267 = vpop.f32.mrf.mxu0
    %v5268 = vadd.f32 %v5119, %v5267
    %v5269 = vpop.f32.mrf.mxu0
    %5270 = vdwg.mxu0
    %5271 = vmatpush.bf16.msra.mxu0 %v5232
    %5272 = vmatpush.bf16.msra.mxu0 %v5229
    %5273 = vmatpush.bf16.msra.mxu0 %v5226
    %5274 = vmatpush.bf16.msra.mxu0 %v5223
    %5275 = vmatpush.bf16.msra.mxu0 %v5220
    %5276 = vmatpush.bf16.msra.mxu0 %v5217
    %5277 = vmatpush.bf16.msra.mxu0 %v5214
    %5278 = vmatpush.bf16.msra.mxu0 %v5211
    %5279 = vmatmul.bf16.gmra.mxu0 %v5129
    %v5280 = vpop.f32.mrf.mxu0
    %v5281 = vadd.f32 %v5120, %v5280
    %v5282 = vpop.f32.mrf.mxu0
    %5283 = vdwg.mxu0
    %5284 = vmatpush.bf16.msra.mxu0 %v5233
    %5285 = vmatpush.bf16.msra.mxu0 %v5230
    %5286 = vmatpush.bf16.msra.mxu0 %v5227
    %5287 = vmatpush.bf16.msra.mxu0 %v5224
    %5288 = vmatpush.bf16.msra.mxu0 %v5221
    %5289 = vmatpush.bf16.msra.mxu0 %v5218
    %5290 = vmatpush.bf16.msra.mxu0 %v5215
    %5291 = vmatpush.bf16.msra.mxu0 %v5212
    %5292 = vmatmul.bf16.gmra.mxu0 %v5129
    %v5293 = vpop.f32.mrf.mxu0
    %v5294 = vadd.f32 %v5121, %v5293
    %v5295 = vpop.f32.mrf.mxu0
    %5296 = vdwg.mxu0
    %v5297 = vadd.f32 %v5126, %v5268
    %v5298 = vxor.u32 %v5297, 2147483648
    %v5299 = vmul.f32 %v5298, 1.442695
    %v5300 = vpow.pop %v5299
    %v5301 = vadd.f32 %v5300, 1.0
    %v5302 = vrcp.pop %v5301
    %v5303 = vmul.f32 %v5301, %v5302
    %v5304 = vsub.f32 1.0, %v5303
    %v5305 = vmul.f32 %v5302, %v5304
    %v5306 = vadd.f32 %v5302, %v5305
    %vm5307 = vweird.f32 %v5301
    %vm5308 = vweird.f32 %v5302
    %vm5309 = vmor %vm5307, %vm5308
    %v5310 = vsel %vm5309, %v5302, %v5306
    %v5311 = vand.u32 2147483647, %v5301
    %vm5312 = vcmp.eq.f32.partialorder %v5311, 8.507059e+37
    %v5313 = vand.u32 %v5301, 2147483648
    %v5314 = vor.u32 1.1754944e-38, %v5313
    %v5315 = vsel %vm5312, %v5314, %v5310
    %v5316 = vmul.f32 1.0, %v5315
    %v5317 = vadd.f32 %v5127, %v5281
    %v5318 = vxor.u32 %v5317, 2147483648
    %v5319 = vmul.f32 %v5318, 1.442695
    %v5320 = vpow.pop %v5319
    %v5321 = vadd.f32 %v5320, 1.0
    %v5322 = vrcp.pop %v5321
    %v5323 = vmul.f32 %v5321, %v5322
    %v5324 = vsub.f32 1.0, %v5323
    %v5325 = vmul.f32 %v5322, %v5324
    %v5326 = vadd.f32 %v5322, %v5325
    %vm5327 = vweird.f32 %v5321
    %vm5328 = vweird.f32 %v5322
    %vm5329 = vmor %vm5327, %vm5328
    %v5330 = vsel %vm5329, %v5322, %v5326
    %v5331 = vand.u32 2147483647, %v5321
    %vm5332 = vcmp.eq.f32.partialorder %v5331, 8.507059e+37
    %v5333 = vand.u32 %v5321, 2147483648
    %v5334 = vor.u32 1.1754944e-38, %v5333
    %v5335 = vsel %vm5332, %v5334, %v5330
    %v5336 = vmul.f32 1.0, %v5335
    %v5337 = vmul.f32 %v5316, %v5294
    %v5338 = vadd.f32 %v5128, %v5337
    %v5339 = vtanh.pop %v5338
    %v5340 = vsub.f32 1.0, %v5336
    %v5341 = vmul.f32 %v5340, %v5339
    %v5342 = vmul.f32 %v5336, %v5125
    %v5343 = vadd.f32 %v5341, %v5342
    %5344 = vst [vmem:[#allocation2] sm:$0xff] %v5343
    %5345 = vst [vmem:[#allocation21] sm:$0xff] %v5343
    %v5346 = vld [vmem:[#allocation2] sm:$0xff]
    %v5347 = vld [vmem:[#allocation3 + $0x18] sm:$0xff]
    %v5348 = vld [vmem:[#allocation3 + $0x20] sm:$0xff]
    %v5349 = vld [vmem:[#allocation3 + $0x28] sm:$0xff]
    %v5350 = vpack.c.bf16 %v5346, %v5346
    %5351 = vmatpush.bf16.msra.mxu0 %v5231
    %5352 = vmatpush.bf16.msra.mxu0 %v5228
    %5353 = vmatpush.bf16.msra.mxu0 %v5225
    %5354 = vmatpush.bf16.msra.mxu0 %v5222
    %5355 = vmatpush.bf16.msra.mxu0 %v5219
    %5356 = vmatpush.bf16.msra.mxu0 %v5216
    %5357 = vmatpush.bf16.msra.mxu0 %v5213
    %5358 = vmatpush.bf16.msra.mxu0 %v5210
    %5359 = vmatmul.bf16.gmra.mxu0 %v5350
    %v5360 = vpop.f32.mrf.mxu0
    %v5361 = vadd.f32 %v5119, %v5360
    %v5362 = vpop.f32.mrf.mxu0
    %5363 = vdwg.mxu0
    %5364 = vmatpush.bf16.msra.mxu0 %v5232
    %5365 = vmatpush.bf16.msra.mxu0 %v5229
    %5366 = vmatpush.bf16.msra.mxu0 %v5226
    %5367 = vmatpush.bf16.msra.mxu0 %v5223
    %5368 = vmatpush.bf16.msra.mxu0 %v5220
    %5369 = vmatpush.bf16.msra.mxu0 %v5217
    %5370 = vmatpush.bf16.msra.mxu0 %v5214
    %5371 = vmatpush.bf16.msra.mxu0 %v5211
    %5372 = vmatmul.bf16.gmra.mxu0 %v5350
    %v5373 = vpop.f32.mrf.mxu0
    %v5374 = vadd.f32 %v5120, %v5373
    %v5375 = vpop.f32.mrf.mxu0
    %5376 = vdwg.mxu0
    %5377 = vmatpush.bf16.msra.mxu0 %v5233
    %5378 = vmatpush.bf16.msra.mxu0 %v5230
    %5379 = vmatpush.bf16.msra.mxu0 %v5227
    %5380 = vmatpush.bf16.msra.mxu0 %v5224
    %5381 = vmatpush.bf16.msra.mxu0 %v5221
    %5382 = vmatpush.bf16.msra.mxu0 %v5218
    %5383 = vmatpush.bf16.msra.mxu0 %v5215
    %5384 = vmatpush.bf16.msra.mxu0 %v5212
    %5385 = vmatmul.bf16.gmra.mxu0 %v5350
    %v5386 = vpop.f32.mrf.mxu0
    %v5387 = vadd.f32 %v5121, %v5386
    %v5388 = vpop.f32.mrf.mxu0
    %5389 = vdwg.mxu0
    %v5390 = vadd.f32 %v5347, %v5361
    %v5391 = vxor.u32 %v5390, 2147483648
    %v5392 = vmul.f32 %v5391, 1.442695
    %v5393 = vpow.pop %v5392
    %v5394 = vadd.f32 %v5393, 1.0
    %v5395 = vrcp.pop %v5394
    %v5396 = vmul.f32 %v5394, %v5395
    %v5397 = vsub.f32 1.0, %v5396
    %v5398 = vmul.f32 %v5395, %v5397
    %v5399 = vadd.f32 %v5395, %v5398
    %vm5400 = vweird.f32 %v5394
    %vm5401 = vweird.f32 %v5395
    %vm5402 = vmor %vm5400, %vm5401
    %v5403 = vsel %vm5402, %v5395, %v5399
    %v5404 = vand.u32 2147483647, %v5394
    %vm5405 = vcmp.eq.f32.partialorder %v5404, 8.507059e+37
    %v5406 = vand.u32 %v5394, 2147483648
    %v5407 = vor.u32 1.1754944e-38, %v5406
    %v5408 = vsel %vm5405, %v5407, %v5403
    %v5409 = vmul.f32 1.0, %v5408
    %v5410 = vadd.f32 %v5348, %v5374
    %v5411 = vxor.u32 %v5410, 2147483648
    %v5412 = vmul.f32 %v5411, 1.442695
    %v5413 = vpow.pop %v5412
    %v5414 = vadd.f32 %v5413, 1.0
    %v5415 = vrcp.pop %v5414
    %v5416 = vmul.f32 %v5414, %v5415
    %v5417 = vsub.f32 1.0, %v5416
    %v5418 = vmul.f32 %v5415, %v5417
    %v5419 = vadd.f32 %v5415, %v5418
    %vm5420 = vweird.f32 %v5414
    %vm5421 = vweird.f32 %v5415
    %vm5422 = vmor %vm5420, %vm5421
    %v5423 = vsel %vm5422, %v5415, %v5419
    %v5424 = vand.u32 2147483647, %v5414
    %vm5425 = vcmp.eq.f32.partialorder %v5424, 8.507059e+37
    %v5426 = vand.u32 %v5414, 2147483648
    %v5427 = vor.u32 1.1754944e-38, %v5426
    %v5428 = vsel %vm5425, %v5427, %v5423
    %v5429 = vmul.f32 1.0, %v5428
    %v5430 = vmul.f32 %v5409, %v5387
    %v5431 = vadd.f32 %v5349, %v5430
    %v5432 = vtanh.pop %v5431
    %v5433 = vsub.f32 1.0, %v5429
    %v5434 = vmul.f32 %v5433, %v5432
    %v5435 = vmul.f32 %v5429, %v5346
    %v5436 = vadd.f32 %v5434, %v5435
    %5437 = vst [vmem:[#allocation2] sm:$0xff] %v5436
    %5438 = vst [vmem:[#allocation21 + $0x8] sm:$0xff] %v5436
    %v5439 = vld [vmem:[#allocation2] sm:$0xff]
    %v5440 = vld [vmem:[#allocation3 + $0x30] sm:$0xff]
    %v5441 = vld [vmem:[#allocation3 + $0x38] sm:$0xff]
    %v5442 = vld [vmem:[#allocation3 + $0x40] sm:$0xff]
    %v5443 = vpack.c.bf16 %v5439, %v5439
    %5444 = vmatpush.bf16.msra.mxu0 %v5231
    %5445 = vmatpush.bf16.msra.mxu0 %v5228
    %5446 = vmatpush.bf16.msra.mxu0 %v5225
    %5447 = vmatpush.bf16.msra.mxu0 %v5222
    %5448 = vmatpush.bf16.msra.mxu0 %v5219
    %5449 = vmatpush.bf16.msra.mxu0 %v5216
    %5450 = vmatpush.bf16.msra.mxu0 %v5213
    %5451 = vmatpush.bf16.msra.mxu0 %v5210
    %5452 = vmatmul.bf16.gmra.mxu0 %v5443
    %v5453 = vpop.f32.mrf.mxu0
    %v5454 = vadd.f32 %v5119, %v5453
    %v5455 = vpop.f32.mrf.mxu0
    %5456 = vdwg.mxu0
    %5457 = vmatpush.bf16.msra.mxu0 %v5232
    %5458 = vmatpush.bf16.msra.mxu0 %v5229
    %5459 = vmatpush.bf16.msra.mxu0 %v5226
    %5460 = vmatpush.bf16.msra.mxu0 %v5223
    %5461 = vmatpush.bf16.msra.mxu0 %v5220
    %5462 = vmatpush.bf16.msra.mxu0 %v5217
    %5463 = vmatpush.bf16.msra.mxu0 %v5214
    %5464 = vmatpush.bf16.msra.mxu0 %v5211
    %5465 = vmatmul.bf16.gmra.mxu0 %v5443
    %v5466 = vpop.f32.mrf.mxu0
    %v5467 = vadd.f32 %v5120, %v5466
    %v5468 = vpop.f32.mrf.mxu0
    %5469 = vdwg.mxu0
    %5470 = vmatpush.bf16.msra.mxu0 %v5233
    %5471 = vmatpush.bf16.msra.mxu0 %v5230
    %5472 = vmatpush.bf16.msra.mxu0 %v5227
    %5473 = vmatpush.bf16.msra.mxu0 %v5224
    %5474 = vmatpush.bf16.msra.mxu0 %v5221
    %5475 = vmatpush.bf16.msra.mxu0 %v5218
    %5476 = vmatpush.bf16.msra.mxu0 %v5215
    %5477 = vmatpush.bf16.msra.mxu0 %v5212
    %5478 = vmatmul.bf16.gmra.mxu0 %v5443
    %v5479 = vpop.f32.mrf.mxu0
    %v5480 = vadd.f32 %v5121, %v5479
    %v5481 = vpop.f32.mrf.mxu0
    %5482 = vdwg.mxu0
    %v5483 = vadd.f32 %v5440, %v5454
    %v5484 = vxor.u32 %v5483, 2147483648
    %v5485 = vmul.f32 %v5484, 1.442695
    %v5486 = vpow.pop %v5485
    %v5487 = vadd.f32 %v5486, 1.0
    %v5488 = vrcp.pop %v5487
    %v5489 = vmul.f32 %v5487, %v5488
    %v5490 = vsub.f32 1.0, %v5489
    %v5491 = vmul.f32 %v5488, %v5490
    %v5492 = vadd.f32 %v5488, %v5491
    %vm5493 = vweird.f32 %v5487
    %vm5494 = vweird.f32 %v5488
    %vm5495 = vmor %vm5493, %vm5494
    %v5496 = vsel %vm5495, %v5488, %v5492
    %v5497 = vand.u32 2147483647, %v5487
    %vm5498 = vcmp.eq.f32.partialorder %v5497, 8.507059e+37
    %v5499 = vand.u32 %v5487, 2147483648
    %v5500 = vor.u32 1.1754944e-38, %v5499
    %v5501 = vsel %vm5498, %v5500, %v5496
    %v5502 = vmul.f32 1.0, %v5501
    %v5503 = vadd.f32 %v5441, %v5467
    %v5504 = vxor.u32 %v5503, 2147483648
    %v5505 = vmul.f32 %v5504, 1.442695
    %v5506 = vpow.pop %v5505
    %v5507 = vadd.f32 %v5506, 1.0
    %v5508 = vrcp.pop %v5507
    %v5509 = vmul.f32 %v5507, %v5508
    %v5510 = vsub.f32 1.0, %v5509
    %v5511 = vmul.f32 %v5508, %v5510
    %v5512 = vadd.f32 %v5508, %v5511
    %vm5513 = vweird.f32 %v5507
    %vm5514 = vweird.f32 %v5508
    %vm5515 = vmor %vm5513, %vm5514
    %v5516 = vsel %vm5515, %v5508, %v5512
    %v5517 = vand.u32 2147483647, %v5507
    %vm5518 = vcmp.eq.f32.partialorder %v5517, 8.507059e+37
    %v5519 = vand.u32 %v5507, 2147483648
    %v5520 = vor.u32 1.1754944e-38, %v5519
    %v5521 = vsel %vm5518, %v5520, %v5516
    %v5522 = vmul.f32 1.0, %v5521
    %v5523 = vmul.f32 %v5502, %v5480
    %v5524 = vadd.f32 %v5442, %v5523
    %v5525 = vtanh.pop %v5524
    %v5526 = vsub.f32 1.0, %v5522
    %v5527 = vmul.f32 %v5526, %v5525
    %v5528 = vmul.f32 %v5522, %v5439
    %v5529 = vadd.f32 %v5527, %v5528
    %5530 = vst [vmem:[#allocation2] sm:$0xff] %v5529
    %5531 = vst [vmem:[#allocation21 + $0x10] sm:$0xff] %v5529
    %v5532 = vld [vmem:[#allocation2] sm:$0xff]
    %v5533 = vld [vmem:[#allocation3 + $0x48] sm:$0xff]
    %v5534 = vld [vmem:[#allocation3 + $0x50] sm:$0xff]
    %v5535 = vld [vmem:[#allocation3 + $0x58] sm:$0xff]
    %v5536 = vpack.c.bf16 %v5532, %v5532
    %5537 = vmatpush.bf16.msra.mxu0 %v5231
    %5538 = vmatpush.bf16.msra.mxu0 %v5228
    %5539 = vmatpush.bf16.msra.mxu0 %v5225
    %5540 = vmatpush.bf16.msra.mxu0 %v5222
    %5541 = vmatpush.bf16.msra.mxu0 %v5219
    %5542 = vmatpush.bf16.msra.mxu0 %v5216
    %5543 = vmatpush.bf16.msra.mxu0 %v5213
    %5544 = vmatpush.bf16.msra.mxu0 %v5210
    %5545 = vmatmul.bf16.gmra.mxu0 %v5536
    %v5546 = vpop.f32.mrf.mxu0
    %v5547 = vadd.f32 %v5119, %v5546
    %v5548 = vpop.f32.mrf.mxu0
    %5549 = vdwg.mxu0
    %5550 = vmatpush.bf16.msra.mxu0 %v5232
    %5551 = vmatpush.bf16.msra.mxu0 %v5229
    %5552 = vmatpush.bf16.msra.mxu0 %v5226
    %5553 = vmatpush.bf16.msra.mxu0 %v5223
    %5554 = vmatpush.bf16.msra.mxu0 %v5220
    %5555 = vmatpush.bf16.msra.mxu0 %v5217
    %5556 = vmatpush.bf16.msra.mxu0 %v5214
    %5557 = vmatpush.bf16.msra.mxu0 %v5211
    %5558 = vmatmul.bf16.gmra.mxu0 %v5536
    %v5559 = vpop.f32.mrf.mxu0
    %v5560 = vadd.f32 %v5120, %v5559
    %v5561 = vpop.f32.mrf.mxu0
    %5562 = vdwg.mxu0
    %5563 = vmatpush.bf16.msra.mxu0 %v5233
    %5564 = vmatpush.bf16.msra.mxu0 %v5230
    %5565 = vmatpush.bf16.msra.mxu0 %v5227
    %5566 = vmatpush.bf16.msra.mxu0 %v5224
    %5567 = vmatpush.bf16.msra.mxu0 %v5221
    %5568 = vmatpush.bf16.msra.mxu0 %v5218
    %5569 = vmatpush.bf16.msra.mxu0 %v5215
    %5570 = vmatpush.bf16.msra.mxu0 %v5212
    %5571 = vmatmul.bf16.gmra.mxu0 %v5536
    %v5572 = vpop.f32.mrf.mxu0
    %v5573 = vadd.f32 %v5121, %v5572
    %v5574 = vpop.f32.mrf.mxu0
    %5575 = vdwg.mxu0
    %v5576 = vadd.f32 %v5533, %v5547
    %v5577 = vxor.u32 %v5576, 2147483648
    %v5578 = vmul.f32 %v5577, 1.442695
    %v5579 = vpow.pop %v5578
    %v5580 = vadd.f32 %v5579, 1.0
    %v5581 = vrcp.pop %v5580
    %v5582 = vmul.f32 %v5580, %v5581
    %v5583 = vsub.f32 1.0, %v5582
    %v5584 = vmul.f32 %v5581, %v5583
    %v5585 = vadd.f32 %v5581, %v5584
    %vm5586 = vweird.f32 %v5580
    %vm5587 = vweird.f32 %v5581
    %vm5588 = vmor %vm5586, %vm5587
    %v5589 = vsel %vm5588, %v5581, %v5585
    %v5590 = vand.u32 2147483647, %v5580
    %vm5591 = vcmp.eq.f32.partialorder %v5590, 8.507059e+37
    %v5592 = vand.u32 %v5580, 2147483648
    %v5593 = vor.u32 1.1754944e-38, %v5592
    %v5594 = vsel %vm5591, %v5593, %v5589
    %v5595 = vmul.f32 1.0, %v5594
    %v5596 = vadd.f32 %v5534, %v5560
    %v5597 = vxor.u32 %v5596, 2147483648
    %v5598 = vmul.f32 %v5597, 1.442695
    %v5599 = vpow.pop %v5598
    %v5600 = vadd.f32 %v5599, 1.0
    %v5601 = vrcp.pop %v5600
    %v5602 = vmul.f32 %v5600, %v5601
    %v5603 = vsub.f32 1.0, %v5602
    %v5604 = vmul.f32 %v5601, %v5603
    %v5605 = vadd.f32 %v5601, %v5604
    %vm5606 = vweird.f32 %v5600
    %vm5607 = vweird.f32 %v5601
    %vm5608 = vmor %vm5606, %vm5607
    %v5609 = vsel %vm5608, %v5601, %v5605
    %v5610 = vand.u32 2147483647, %v5600
    %vm5611 = vcmp.eq.f32.partialorder %v5610, 8.507059e+37
    %v5612 = vand.u32 %v5600, 2147483648
    %v5613 = vor.u32 1.1754944e-38, %v5612
    %v5614 = vsel %vm5611, %v5613, %v5609
    %v5615 = vmul.f32 1.0, %v5614
    %v5616 = vmul.f32 %v5595, %v5573
    %v5617 = vadd.f32 %v5535, %v5616
    %v5618 = vtanh.pop %v5617
    %v5619 = vsub.f32 1.0, %v5615
    %v5620 = vmul.f32 %v5619, %v5618
    %v5621 = vmul.f32 %v5615, %v5532
    %v5622 = vadd.f32 %v5620, %v5621
    %5623 = vst [vmem:[#allocation2] sm:$0xff] %v5622
    %5624 = vst [vmem:[#allocation21 + $0x18] sm:$0xff] %v5622
    %v5625 = vld [vmem:[#allocation2] sm:$0xff]
    %v5626 = vld [vmem:[#allocation3 + $0x60] sm:$0xff]
    %v5627 = vld [vmem:[#allocation3 + $0x68] sm:$0xff]
    %v5628 = vld [vmem:[#allocation3 + $0x70] sm:$0xff]
    %v5629 = vpack.c.bf16 %v5625, %v5625
    %5630 = vmatpush.bf16.msra.mxu0 %v5231
    %5631 = vmatpush.bf16.msra.mxu0 %v5228
    %5632 = vmatpush.bf16.msra.mxu0 %v5225
    %5633 = vmatpush.bf16.msra.mxu0 %v5222
    %5634 = vmatpush.bf16.msra.mxu0 %v5219
    %5635 = vmatpush.bf16.msra.mxu0 %v5216
    %5636 = vmatpush.bf16.msra.mxu0 %v5213
    %5637 = vmatpush.bf16.msra.mxu0 %v5210
    %5638 = vmatmul.bf16.gmra.mxu0 %v5629
    %v5639 = vpop.f32.mrf.mxu0
    %v5640 = vadd.f32 %v5119, %v5639
    %v5641 = vpop.f32.mrf.mxu0
    %5642 = vdwg.mxu0
    %5643 = vmatpush.bf16.msra.mxu0 %v5232
    %5644 = vmatpush.bf16.msra.mxu0 %v5229
    %5645 = vmatpush.bf16.msra.mxu0 %v5226
    %5646 = vmatpush.bf16.msra.mxu0 %v5223
    %5647 = vmatpush.bf16.msra.mxu0 %v5220
    %5648 = vmatpush.bf16.msra.mxu0 %v5217
    %5649 = vmatpush.bf16.msra.mxu0 %v5214
    %5650 = vmatpush.bf16.msra.mxu0 %v5211
    %5651 = vmatmul.bf16.gmra.mxu0 %v5629
    %v5652 = vpop.f32.mrf.mxu0
    %v5653 = vadd.f32 %v5120, %v5652
    %v5654 = vpop.f32.mrf.mxu0
    %5655 = vdwg.mxu0
    %5656 = vmatpush.bf16.msra.mxu0 %v5233
    %5657 = vmatpush.bf16.msra.mxu0 %v5230
    %5658 = vmatpush.bf16.msra.mxu0 %v5227
    %5659 = vmatpush.bf16.msra.mxu0 %v5224
    %5660 = vmatpush.bf16.msra.mxu0 %v5221
    %5661 = vmatpush.bf16.msra.mxu0 %v5218
    %5662 = vmatpush.bf16.msra.mxu0 %v5215
    %5663 = vmatpush.bf16.msra.mxu0 %v5212
    %5664 = vmatmul.bf16.gmra.mxu0 %v5629
    %v5665 = vpop.f32.mrf.mxu0
    %v5666 = vadd.f32 %v5121, %v5665
    %v5667 = vpop.f32.mrf.mxu0
    %5668 = vdwg.mxu0
    %v5669 = vadd.f32 %v5626, %v5640
    %v5670 = vxor.u32 %v5669, 2147483648
    %v5671 = vmul.f32 %v5670, 1.442695
    %v5672 = vpow.pop %v5671
    %v5673 = vadd.f32 %v5672, 1.0
    %v5674 = vrcp.pop %v5673
    %v5675 = vmul.f32 %v5673, %v5674
    %v5676 = vsub.f32 1.0, %v5675
    %v5677 = vmul.f32 %v5674, %v5676
    %v5678 = vadd.f32 %v5674, %v5677
    %vm5679 = vweird.f32 %v5673
    %vm5680 = vweird.f32 %v5674
    %vm5681 = vmor %vm5679, %vm5680
    %v5682 = vsel %vm5681, %v5674, %v5678
    %v5683 = vand.u32 2147483647, %v5673
    %vm5684 = vcmp.eq.f32.partialorder %v5683, 8.507059e+37
    %v5685 = vand.u32 %v5673, 2147483648
    %v5686 = vor.u32 1.1754944e-38, %v5685
    %v5687 = vsel %vm5684, %v5686, %v5682
    %v5688 = vmul.f32 1.0, %v5687
    %v5689 = vadd.f32 %v5627, %v5653
    %v5690 = vxor.u32 %v5689, 2147483648
    %v5691 = vmul.f32 %v5690, 1.442695
    %v5692 = vpow.pop %v5691
    %v5693 = vadd.f32 %v5692, 1.0
    %v5694 = vrcp.pop %v5693
    %v5695 = vmul.f32 %v5693, %v5694
    %v5696 = vsub.f32 1.0, %v5695
    %v5697 = vmul.f32 %v5694, %v5696
    %v5698 = vadd.f32 %v5694, %v5697
    %vm5699 = vweird.f32 %v5693
    %vm5700 = vweird.f32 %v5694
    %vm5701 = vmor %vm5699, %vm5700
    %v5702 = vsel %vm5701, %v5694, %v5698
    %v5703 = vand.u32 2147483647, %v5693
    %vm5704 = vcmp.eq.f32.partialorder %v5703, 8.507059e+37
    %v5705 = vand.u32 %v5693, 2147483648
    %v5706 = vor.u32 1.1754944e-38, %v5705
    %v5707 = vsel %vm5704, %v5706, %v5702
    %v5708 = vmul.f32 1.0, %v5707
    %v5709 = vmul.f32 %v5688, %v5666
    %v5710 = vadd.f32 %v5628, %v5709
    %v5711 = vtanh.pop %v5710
    %v5712 = vsub.f32 1.0, %v5708
    %v5713 = vmul.f32 %v5712, %v5711
    %v5714 = vmul.f32 %v5708, %v5625
    %v5715 = vadd.f32 %v5713, %v5714
    %5716 = vst [vmem:[#allocation2] sm:$0xff] %v5715
    %5717 = vst [vmem:[#allocation21 + $0x20] sm:$0xff] %v5715
    %v5718 = vld [vmem:[#allocation2] sm:$0xff]
    %v5719 = vld [vmem:[#allocation3 + $0x78] sm:$0xff]
    %v5720 = vld [vmem:[#allocation3 + $0x80] sm:$0xff]
    %v5721 = vld [vmem:[#allocation3 + $0x88] sm:$0xff]
    %v5722 = vpack.c.bf16 %v5718, %v5718
    %5723 = vmatpush.bf16.msra.mxu0 %v5231
    %5724 = vmatpush.bf16.msra.mxu0 %v5228
    %5725 = vmatpush.bf16.msra.mxu0 %v5225
    %5726 = vmatpush.bf16.msra.mxu0 %v5222
    %5727 = vmatpush.bf16.msra.mxu0 %v5219
    %5728 = vmatpush.bf16.msra.mxu0 %v5216
    %5729 = vmatpush.bf16.msra.mxu0 %v5213
    %5730 = vmatpush.bf16.msra.mxu0 %v5210
    %5731 = vmatmul.bf16.gmra.mxu0 %v5722
    %v5732 = vpop.f32.mrf.mxu0
    %v5733 = vadd.f32 %v5119, %v5732
    %v5734 = vpop.f32.mrf.mxu0
    %5735 = vdwg.mxu0
    %5736 = vmatpush.bf16.msra.mxu0 %v5232
    %5737 = vmatpush.bf16.msra.mxu0 %v5229
    %5738 = vmatpush.bf16.msra.mxu0 %v5226
    %5739 = vmatpush.bf16.msra.mxu0 %v5223
    %5740 = vmatpush.bf16.msra.mxu0 %v5220
    %5741 = vmatpush.bf16.msra.mxu0 %v5217
    %5742 = vmatpush.bf16.msra.mxu0 %v5214
    %5743 = vmatpush.bf16.msra.mxu0 %v5211
    %5744 = vmatmul.bf16.gmra.mxu0 %v5722
    %v5745 = vpop.f32.mrf.mxu0
    %v5746 = vadd.f32 %v5120, %v5745
    %v5747 = vpop.f32.mrf.mxu0
    %5748 = vdwg.mxu0
    %5749 = vmatpush.bf16.msra.mxu0 %v5233
    %5750 = vmatpush.bf16.msra.mxu0 %v5230
    %5751 = vmatpush.bf16.msra.mxu0 %v5227
    %5752 = vmatpush.bf16.msra.mxu0 %v5224
    %5753 = vmatpush.bf16.msra.mxu0 %v5221
    %5754 = vmatpush.bf16.msra.mxu0 %v5218
    %5755 = vmatpush.bf16.msra.mxu0 %v5215
    %5756 = vmatpush.bf16.msra.mxu0 %v5212
    %5757 = vmatmul.bf16.gmra.mxu0 %v5722
    %v5758 = vpop.f32.mrf.mxu0
    %v5759 = vadd.f32 %v5121, %v5758
    %v5760 = vpop.f32.mrf.mxu0
    %5761 = vdwg.mxu0
    %v5762 = vadd.f32 %v5719, %v5733
    %v5763 = vxor.u32 %v5762, 2147483648
    %v5764 = vmul.f32 %v5763, 1.442695
    %v5765 = vpow.pop %v5764
    %v5766 = vadd.f32 %v5765, 1.0
    %v5767 = vrcp.pop %v5766
    %v5768 = vmul.f32 %v5766, %v5767
    %v5769 = vsub.f32 1.0, %v5768
    %v5770 = vmul.f32 %v5767, %v5769
    %v5771 = vadd.f32 %v5767, %v5770
    %vm5772 = vweird.f32 %v5766
    %vm5773 = vweird.f32 %v5767
    %vm5774 = vmor %vm5772, %vm5773
    %v5775 = vsel %vm5774, %v5767, %v5771
    %v5776 = vand.u32 2147483647, %v5766
    %vm5777 = vcmp.eq.f32.partialorder %v5776, 8.507059e+37
    %v5778 = vand.u32 %v5766, 2147483648
    %v5779 = vor.u32 1.1754944e-38, %v5778
    %v5780 = vsel %vm5777, %v5779, %v5775
    %v5781 = vmul.f32 1.0, %v5780
    %v5782 = vadd.f32 %v5720, %v5746
    %v5783 = vxor.u32 %v5782, 2147483648
    %v5784 = vmul.f32 %v5783, 1.442695
    %v5785 = vpow.pop %v5784
    %v5786 = vadd.f32 %v5785, 1.0
    %v5787 = vrcp.pop %v5786
    %v5788 = vmul.f32 %v5786, %v5787
    %v5789 = vsub.f32 1.0, %v5788
    %v5790 = vmul.f32 %v5787, %v5789
    %v5791 = vadd.f32 %v5787, %v5790
    %vm5792 = vweird.f32 %v5786
    %vm5793 = vweird.f32 %v5787
    %vm5794 = vmor %vm5792, %vm5793
    %v5795 = vsel %vm5794, %v5787, %v5791
    %v5796 = vand.u32 2147483647, %v5786
    %vm5797 = vcmp.eq.f32.partialorder %v5796, 8.507059e+37
    %v5798 = vand.u32 %v5786, 2147483648
    %v5799 = vor.u32 1.1754944e-38, %v5798
    %v5800 = vsel %vm5797, %v5799, %v5795
    %v5801 = vmul.f32 1.0, %v5800
    %v5802 = vmul.f32 %v5781, %v5759
    %v5803 = vadd.f32 %v5721, %v5802
    %v5804 = vtanh.pop %v5803
    %v5805 = vsub.f32 1.0, %v5801
    %v5806 = vmul.f32 %v5805, %v5804
    %v5807 = vmul.f32 %v5801, %v5718
    %v5808 = vadd.f32 %v5806, %v5807
    %5809 = vst [vmem:[#allocation2] sm:$0xff] %v5808
    %5810 = vst [vmem:[#allocation21 + $0x28] sm:$0xff] %v5808
    %v5811 = vld [vmem:[#allocation2] sm:$0xff]
    %v5812 = vld [vmem:[#allocation3 + $0x90] sm:$0xff]
    %v5813 = vld [vmem:[#allocation3 + $0x98] sm:$0xff]
    %v5814 = vld [vmem:[#allocation3 + $0xa0] sm:$0xff]
    %v5815 = vpack.c.bf16 %v5811, %v5811
    %5816 = vmatpush.bf16.msra.mxu0 %v5231
    %5817 = vmatpush.bf16.msra.mxu0 %v5228
    %5818 = vmatpush.bf16.msra.mxu0 %v5225
    %5819 = vmatpush.bf16.msra.mxu0 %v5222
    %5820 = vmatpush.bf16.msra.mxu0 %v5219
    %5821 = vmatpush.bf16.msra.mxu0 %v5216
    %5822 = vmatpush.bf16.msra.mxu0 %v5213
    %5823 = vmatpush.bf16.msra.mxu0 %v5210
    %5824 = vmatmul.bf16.gmra.mxu0 %v5815
    %v5825 = vpop.f32.mrf.mxu0
    %v5826 = vadd.f32 %v5119, %v5825
    %v5827 = vpop.f32.mrf.mxu0
    %5828 = vdwg.mxu0
    %5829 = vmatpush.bf16.msra.mxu0 %v5232
    %5830 = vmatpush.bf16.msra.mxu0 %v5229
    %5831 = vmatpush.bf16.msra.mxu0 %v5226
    %5832 = vmatpush.bf16.msra.mxu0 %v5223
    %5833 = vmatpush.bf16.msra.mxu0 %v5220
    %5834 = vmatpush.bf16.msra.mxu0 %v5217
    %5835 = vmatpush.bf16.msra.mxu0 %v5214
    %5836 = vmatpush.bf16.msra.mxu0 %v5211
    %5837 = vmatmul.bf16.gmra.mxu0 %v5815
    %v5838 = vpop.f32.mrf.mxu0
    %v5839 = vadd.f32 %v5120, %v5838
    %v5840 = vpop.f32.mrf.mxu0
    %5841 = vdwg.mxu0
    %5842 = vmatpush.bf16.msra.mxu0 %v5233
    %5843 = vmatpush.bf16.msra.mxu0 %v5230
    %5844 = vmatpush.bf16.msra.mxu0 %v5227
    %5845 = vmatpush.bf16.msra.mxu0 %v5224
    %5846 = vmatpush.bf16.msra.mxu0 %v5221
    %5847 = vmatpush.bf16.msra.mxu0 %v5218
    %5848 = vmatpush.bf16.msra.mxu0 %v5215
    %5849 = vmatpush.bf16.msra.mxu0 %v5212
    %5850 = vmatmul.bf16.gmra.mxu0 %v5815
    %v5851 = vpop.f32.mrf.mxu0
    %v5852 = vadd.f32 %v5121, %v5851
    %v5853 = vpop.f32.mrf.mxu0
    %5854 = vdwg.mxu0
    %v5855 = vadd.f32 %v5812, %v5826
    %v5856 = vxor.u32 %v5855, 2147483648
    %v5857 = vmul.f32 %v5856, 1.442695
    %v5858 = vpow.pop %v5857
    %v5859 = vadd.f32 %v5858, 1.0
    %v5860 = vrcp.pop %v5859
    %v5861 = vmul.f32 %v5859, %v5860
    %v5862 = vsub.f32 1.0, %v5861
    %v5863 = vmul.f32 %v5860, %v5862
    %v5864 = vadd.f32 %v5860, %v5863
    %vm5865 = vweird.f32 %v5859
    %vm5866 = vweird.f32 %v5860
    %vm5867 = vmor %vm5865, %vm5866
    %v5868 = vsel %vm5867, %v5860, %v5864
    %v5869 = vand.u32 2147483647, %v5859
    %vm5870 = vcmp.eq.f32.partialorder %v5869, 8.507059e+37
    %v5871 = vand.u32 %v5859, 2147483648
    %v5872 = vor.u32 1.1754944e-38, %v5871
    %v5873 = vsel %vm5870, %v5872, %v5868
    %v5874 = vmul.f32 1.0, %v5873
    %v5875 = vadd.f32 %v5813, %v5839
    %v5876 = vxor.u32 %v5875, 2147483648
    %v5877 = vmul.f32 %v5876, 1.442695
    %v5878 = vpow.pop %v5877
    %v5879 = vadd.f32 %v5878, 1.0
    %v5880 = vrcp.pop %v5879
    %v5881 = vmul.f32 %v5879, %v5880
    %v5882 = vsub.f32 1.0, %v5881
    %v5883 = vmul.f32 %v5880, %v5882
    %v5884 = vadd.f32 %v5880, %v5883
    %vm5885 = vweird.f32 %v5879
    %vm5886 = vweird.f32 %v5880
    %vm5887 = vmor %vm5885, %vm5886
    %v5888 = vsel %vm5887, %v5880, %v5884
    %v5889 = vand.u32 2147483647, %v5879
    %vm5890 = vcmp.eq.f32.partialorder %v5889, 8.507059e+37
    %v5891 = vand.u32 %v5879, 2147483648
    %v5892 = vor.u32 1.1754944e-38, %v5891
    %v5893 = vsel %vm5890, %v5892, %v5888
    %v5894 = vmul.f32 1.0, %v5893
    %v5895 = vmul.f32 %v5874, %v5852
    %v5896 = vadd.f32 %v5814, %v5895
    %v5897 = vtanh.pop %v5896
    %v5898 = vsub.f32 1.0, %v5894
    %v5899 = vmul.f32 %v5898, %v5897
    %v5900 = vmul.f32 %v5894, %v5811
    %v5901 = vadd.f32 %v5899, %v5900
    %5902 = vst [vmem:[#allocation2] sm:$0xff] %v5901
    %5903 = vst [vmem:[#allocation21 + $0x30] sm:$0xff] %v5901
    %v5904 = vld [vmem:[#allocation2] sm:$0xff]
    %v5905 = vld [vmem:[#allocation3 + $0xa8] sm:$0xff]
    %v5906 = vld [vmem:[#allocation3 + $0xb0] sm:$0xff]
    %v5907 = vld [vmem:[#allocation3 + $0xb8] sm:$0xff]
    %v5908 = vpack.c.bf16 %v5904, %v5904
    %5909 = vmatpush.bf16.msra.mxu0 %v5231
    %5910 = vmatpush.bf16.msra.mxu0 %v5228
    %5911 = vmatpush.bf16.msra.mxu0 %v5225
    %5912 = vmatpush.bf16.msra.mxu0 %v5222
    %5913 = vmatpush.bf16.msra.mxu0 %v5219
    %5914 = vmatpush.bf16.msra.mxu0 %v5216
    %5915 = vmatpush.bf16.msra.mxu0 %v5213
    %5916 = vmatpush.bf16.msra.mxu0 %v5210
    %5917 = vmatmul.bf16.gmra.mxu0 %v5908
    %v5918 = vpop.f32.mrf.mxu0
    %v5919 = vadd.f32 %v5119, %v5918
    %v5920 = vpop.f32.mrf.mxu0
    %5921 = vdwg.mxu0
    %5922 = vmatpush.bf16.msra.mxu0 %v5232
    %5923 = vmatpush.bf16.msra.mxu0 %v5229
    %5924 = vmatpush.bf16.msra.mxu0 %v5226
    %5925 = vmatpush.bf16.msra.mxu0 %v5223
    %5926 = vmatpush.bf16.msra.mxu0 %v5220
    %5927 = vmatpush.bf16.msra.mxu0 %v5217
    %5928 = vmatpush.bf16.msra.mxu0 %v5214
    %5929 = vmatpush.bf16.msra.mxu0 %v5211
    %5930 = vmatmul.bf16.gmra.mxu0 %v5908
    %v5931 = vpop.f32.mrf.mxu0
    %v5932 = vadd.f32 %v5120, %v5931
    %v5933 = vpop.f32.mrf.mxu0
    %5934 = vdwg.mxu0
    %5935 = vmatpush.bf16.msra.mxu0 %v5233
    %5936 = vmatpush.bf16.msra.mxu0 %v5230
    %5937 = vmatpush.bf16.msra.mxu0 %v5227
    %5938 = vmatpush.bf16.msra.mxu0 %v5224
    %5939 = vmatpush.bf16.msra.mxu0 %v5221
    %5940 = vmatpush.bf16.msra.mxu0 %v5218
    %5941 = vmatpush.bf16.msra.mxu0 %v5215
    %5942 = vmatpush.bf16.msra.mxu0 %v5212
    %5943 = vmatmul.bf16.gmra.mxu0 %v5908
    %v5944 = vpop.f32.mrf.mxu0
    %v5945 = vadd.f32 %v5121, %v5944
    %v5946 = vpop.f32.mrf.mxu0
    %5947 = vdwg.mxu0
    %v5948 = vadd.f32 %v5905, %v5919
    %v5949 = vxor.u32 %v5948, 2147483648
    %v5950 = vmul.f32 %v5949, 1.442695
    %v5951 = vpow.pop %v5950
    %v5952 = vadd.f32 %v5951, 1.0
    %v5953 = vrcp.pop %v5952
    %v5954 = vmul.f32 %v5952, %v5953
    %v5955 = vsub.f32 1.0, %v5954
    %v5956 = vmul.f32 %v5953, %v5955
    %v5957 = vadd.f32 %v5953, %v5956
    %vm5958 = vweird.f32 %v5952
    %vm5959 = vweird.f32 %v5953
    %vm5960 = vmor %vm5958, %vm5959
    %v5961 = vsel %vm5960, %v5953, %v5957
    %v5962 = vand.u32 2147483647, %v5952
    %vm5963 = vcmp.eq.f32.partialorder %v5962, 8.507059e+37
    %v5964 = vand.u32 %v5952, 2147483648
    %v5965 = vor.u32 1.1754944e-38, %v5964
    %v5966 = vsel %vm5963, %v5965, %v5961
    %v5967 = vmul.f32 1.0, %v5966
    %v5968 = vadd.f32 %v5906, %v5932
    %v5969 = vxor.u32 %v5968, 2147483648
    %v5970 = vmul.f32 %v5969, 1.442695
    %v5971 = vpow.pop %v5970
    %v5972 = vadd.f32 %v5971, 1.0
    %v5973 = vrcp.pop %v5972
    %v5974 = vmul.f32 %v5972, %v5973
    %v5975 = vsub.f32 1.0, %v5974
    %v5976 = vmul.f32 %v5973, %v5975
    %v5977 = vadd.f32 %v5973, %v5976
    %vm5978 = vweird.f32 %v5972
    %vm5979 = vweird.f32 %v5973
    %vm5980 = vmor %vm5978, %vm5979
    %v5981 = vsel %vm5980, %v5973, %v5977
    %v5982 = vand.u32 2147483647, %v5972
    %vm5983 = vcmp.eq.f32.partialorder %v5982, 8.507059e+37
    %v5984 = vand.u32 %v5972, 2147483648
    %v5985 = vor.u32 1.1754944e-38, %v5984
    %v5986 = vsel %vm5983, %v5985, %v5981
    %v5987 = vmul.f32 1.0, %v5986
    %v5988 = vmul.f32 %v5967, %v5945
    %v5989 = vadd.f32 %v5907, %v5988
    %v5990 = vtanh.pop %v5989
    %v5991 = vsub.f32 1.0, %v5987
    %v5992 = vmul.f32 %v5991, %v5990
    %v5993 = vmul.f32 %v5987, %v5904
    %v5994 = vadd.f32 %v5992, %v5993
    %5995 = vst [vmem:[#allocation2] sm:$0xff] %v5994
    %5996 = vst [vmem:[#allocation21 + $0x38] sm:$0xff] %v5994
    // Predicated region
    $region82: #{tpu_custom_call.1} parent=1 // pred_check
      _
    $region83: #{tpu_custom_call.1} parent=1 // pred_check_branch
      %5998 = sbr.rel (0) target = $region85
    $region84: #{tpu_custom_call.1} parent=1 // pred_region
      %6000 = vsyncadd [#allocation6], 0
      %s6001 = sshll.u32 [#allocation21], 4
      %s6002 = int_to_ptr.vmem [resolvable:$true] %s6001
      %s6003 = sshll.u32 %s10, 4
      %s6004 = int_to_ptr.hbm [resolvable:$true] %s6003
      %6009 = dma.vmem_to_hbm [thread:$0]  %s6002, 1024, %s6004, [#allocation6], 128, 128, 8
    $region85: #{tpu_custom_call.1} parent=1 // pred_fallthru
      _
    // Predicated region
    $region86: #{tpu_custom_call.1} parent=1 // pred_check
      _
    $region87: #{tpu_custom_call.1} parent=1 // pred_check_branch
      %6011 = sbr.rel (0) target = $region89
    $region88: #{tpu_custom_call.1} parent=1 // pred_region
      %6013 = dma.done [#allocation6], 1024
    $region89: #{tpu_custom_call.1} parent=1 // pred_fallthru
      _
    %6014 = vsyncpa [#allocation5], 1
    %6015 = vsyncpa [#allocation8], 1
    %6016 = vsyncpa [#allocation11], 1
    %6017 = vsyncpa [#allocation14], 1
    %6018 = vsyncpa [#allocation17], 1
    %6019 = vsyncpa [#allocation20], 1
    %6020 = vsyncpa [#allocation6], 1

</llo_original>
